<compile_context>
chip_gen: v6e
topology: v6e:2x2x1
jax: 0.10.0
libtpu: 0.0.40
codegen_flags: <defaults>
</compile_context>

<pallas_src>
import functools
import math

import numpy as np
import jax
import jax.numpy as jnp
from jax.experimental import pallas as pl
from jax.experimental.pallas import tpu as pltpu


LN_EPS = 1e-5          # torch.nn.LayerNorm default
_NEG_INF = -1e30
_MAX_FUSED_K = 2048    # LN+matmul fusion needs the whole K row resident in VMEM


def _round_up(x, m):
    return ((x + m - 1) // m) * m


def _vmem_limit_bytes(est):
    """Generation-aware scoped-VMEM request: 2*est + headroom, capped."""
    cap = 128 * 1024 * 1024
    try:
        info = pltpu.get_tpu_info()
        cap = int(getattr(info, "vmem_capacity_bytes", cap) or cap)
    except Exception:
        pass
    ceiling = min(48 << 20, (cap * 5) // 8)   # ~40 MiB on v7x (64 MiB/TC), 48 MiB on v5e/v6e
    return int(min(ceiling, max(16 << 20, 2 * est + (6 << 20))))


def _linear_tiles(M, K, N):
    """Tile selection: big M tiles, lane-dense (x128) N, full-K residency when possible."""
    tm = min(512, _round_up(M, 8))
    Np = _round_up(N, 128)                    # never a ragged / sub-128 lane dim
    if Np <= 512:
        tn = Np
    elif Np % 512 == 0:
        tn = 512
    elif Np % 256 == 0:
        tn = 256
    else:
        tn = 128
    if K <= _MAX_FUSED_K:
        tk, Kp = K, K                         # full-extent K block (legal even if K % 128 != 0)
    else:
        Kp = _round_up(K, 512)
        tk = 2048 if Kp % 2048 == 0 else (1024 if Kp % 1024 == 0 else 512)
    Mp = _round_up(M, tm)
    return tm, tn, tk, Mp, Np, Kp


# ---------------------------------------------------------------------------
# Tiled linear:  y = x @ W + b   (+ optional fused fast-GELU)
# ---------------------------------------------------------------------------
def _linear_kernel(x_ref, w_ref, b_ref, o_ref, acc_ref, *, activation):
    k = pl.program_id(2)

    @pl.when(k == 0)
    def _():
        acc_ref[...] = jnp.zeros_like(acc_ref)

    # bf16 MXU operands, f32 accumulation.
    acc_ref[...] += jnp.dot(x_ref[...].astype(jnp.bfloat16),
                            w_ref[...].astype(jnp.bfloat16),
                            preferred_element_type=jnp.float32)

    @pl.when(k == pl.num_programs(2) - 1)
    def _():
        out = acc_ref[...] + b_ref[...]                       # bias stays f32
        if activation == "gelu_fast":
            # GELU_: x * sigmoid(1.702 x), divide moved onto the EUP slot.
            out = out * pl.reciprocal(1.0 + jnp.exp(-1.702 * out), approx=True)
        o_ref[...] = out.astype(o_ref.dtype)


def pallas_linear(x2d, w, b, *, activation=None):
    """x2d: (M, K), w: (K, N) (transposed vs torch), b: (N,) -> (M, N)."""
    M, K = x2d.shape
    K2, N = w.shape
    assert K == K2 and b.shape == (N,)
    tm, tn, tk, Mp, Np, Kp = _linear_tiles(M, K, N)

    if (Mp, Kp) != (M, K):
        x2d = jnp.pad(x2d, ((0, Mp - M), (0, Kp - K)))
    if (Kp, Np) != (K, N):
        w = jnp.pad(w, ((0, Kp - K), (0, Np - N)))
    b2d = jnp.pad(b, (0, Np - N)).reshape(1, Np).astype(jnp.float32)

    itemsize = jnp.dtype(x2d.dtype).itemsize
    est = 2 * (tm * tk + tk * tn + tn + tm * tn) * itemsize + tm * tn * 4

    out = pl.pallas_call(
        functools.partial(_linear_kernel, activation=activation),
        out_shape=jax.ShapeDtypeStruct((Mp, Np), x2d.dtype),
        grid_spec=pltpu.PrefetchScalarGridSpec(
            num_scalar_prefetch=0,
            grid=(Mp // tm, Np // tn, Kp // tk),
            in_specs=[
                pl.BlockSpec((tm, tk), lambda i, j, k: (i, k)),
                pl.BlockSpec((tk, tn), lambda i, j, k: (k, j)),
                pl.BlockSpec((1, tn), lambda i, j, k: (0, j)),
            ],
            out_specs=pl.BlockSpec((tm, tn), lambda i, j, k: (i, j)),
            scratch_shapes=[pltpu.VMEM((tm, tn), jnp.float32)],
        ),
        compiler_params=pltpu.CompilerParams(
            dimension_semantics=("parallel", "parallel", "arbitrary"),
            vmem_limit_bytes=_vmem_limit_bytes(est)),
    )(x2d, w, b2d)
    return out[:M, :N]


# ---------------------------------------------------------------------------
# Fused LayerNorm + linear (+ optional fast-GELU); requires full K resident.
# ---------------------------------------------------------------------------
def _ln_linear_kernel(x_ref, g_ref, bt_ref, w_ref, b_ref, o_ref, *, activation):
    x = x_ref[...].astype(jnp.float32)
    mean = jnp.mean(x, axis=-1, keepdims=True)
    xc = x - mean
    var = jnp.mean(xc * xc, axis=-1, keepdims=True)
    y = xc * jax.lax.rsqrt(var + LN_EPS)
    y = y * g_ref[...] + bt_ref[...]                          # gamma/beta in f32
    out = jnp.dot(y.astype(jnp.bfloat16), w_ref[...].astype(jnp.bfloat16),
                  preferred_element_type=jnp.float32) + b_ref[...]
    if activation == "gelu_fast":
        out = out * pl.reciprocal(1.0 + jnp.exp(-1.702 * out), approx=True)
    o_ref[...] = out.astype(o_ref.dtype)


def pallas_ln_linear(x2d, gamma, beta, w, b, *, activation=None):
    """(LayerNorm(x) @ W + b), LN fused into the matmul (no LN HBM round trip)."""
    M, K = x2d.shape
    K2, N = w.shape
    assert K == K2 and b.shape == (N,)
    assert gamma.shape == (K,) and beta.shape == (K,)
    if K > _MAX_FUSED_K:
        # Fallback: standalone LN then tiled linear when K cannot stay resident.
        return pallas_linear(pallas_layernorm(x2d, gamma, beta), w, b,
                             activation=activation)

    tm, tn, _, Mp, Np, _ = _linear_tiles(M, K, N)
    if Mp != M:
        x2d = jnp.pad(x2d, ((0, Mp - M), (0, 0)))
    if Np != N:
        w = jnp.pad(w, ((0, 0), (0, Np - N)))
    b2d = jnp.pad(b, (0, Np - N)).reshape(1, Np).astype(jnp.float32)
    g2d = gamma.reshape(1, K).astype(jnp.float32)
    bt2d = beta.reshape(1, K).astype(jnp.float32)

    itemsize = max(jnp.dtype(x2d.dtype).itemsize, 4)
    est = 2 * (tm * K + K * tn + 2 * K + tn + tm * tn) * itemsize

    out = pl.pallas_call(
        functools.partial(_ln_linear_kernel, activation=activation),
        out_shape=jax.ShapeDtypeStruct((Mp, Np), x2d.dtype),
        grid_spec=pltpu.PrefetchScalarGridSpec(
            num_scalar_prefetch=0,
            grid=(Mp // tm, Np // tn),
            in_specs=[
                pl.BlockSpec((tm, K), lambda i, j: (i, 0)),
                pl.BlockSpec((1, K), lambda i, j: (0, 0)),
                pl.BlockSpec((1, K), lambda i, j: (0, 0)),
                pl.BlockSpec((K, tn), lambda i, j: (0, j)),
                pl.BlockSpec((1, tn), lambda i, j: (0, j)),
            ],
            out_specs=pl.BlockSpec((tm, tn), lambda i, j: (i, j)),
        ),
        compiler_params=pltpu.CompilerParams(
            dimension_semantics=("parallel", "parallel"),
            vmem_limit_bytes=_vmem_limit_bytes(est)),
    )(x2d, g2d, bt2d, w, b2d)
    return out[:M, :N]


# ---------------------------------------------------------------------------
# Standalone row-tiled LayerNorm (fallback for very large widths)
# ---------------------------------------------------------------------------
def _layernorm_kernel(x_ref, g_ref, b_ref, o_ref):
    x = x_ref[...].astype(jnp.float32)
    mean = jnp.mean(x, axis=-1, keepdims=True)
    xc = x - mean
    var = jnp.mean(xc * xc, axis=-1, keepdims=True)
    y = xc * jax.lax.rsqrt(var + LN_EPS)
    o_ref[...] = (y * g_ref[...] + b_ref[...]).astype(o_ref.dtype)


def pallas_layernorm(x2d, gamma, beta):
    M, D = x2d.shape
    # Target ~4 MiB per (tm, D) block (input and output are double-buffered).
    tm = max(8, min(1024, ((4 * 1024 * 1024) // (4 * D)) // 8 * 8))
    tm = min(tm, _round_up(M, 8))
    Mp = _round_up(M, tm)
    if Mp != M:
        x2d = jnp.pad(x2d, ((0, Mp - M), (0, 0)))
    g2d = gamma.reshape(1, D).astype(jnp.float32)
    b2d = beta.reshape(1, D).astype(jnp.float32)
    est = 4 * (4 * tm * D + 4 * D)

    out = pl.pallas_call(
        _layernorm_kernel,
        out_shape=jax.ShapeDtypeStruct((Mp, D), x2d.dtype),
        grid_spec=pltpu.PrefetchScalarGridSpec(
            num_scalar_prefetch=0,
            grid=(Mp // tm,),
            in_specs=[
                pl.BlockSpec((tm, D), lambda i: (i, 0)),
                pl.BlockSpec((1, D), lambda i: (0, 0)),
                pl.BlockSpec((1, D), lambda i: (0, 0)),
            ],
            out_specs=pl.BlockSpec((tm, D), lambda i: (i, 0)),
        ),
        compiler_params=pltpu.CompilerParams(
            dimension_semantics=("parallel",),
            vmem_limit_bytes=_vmem_limit_bytes(est)),
    )(x2d, g2d, b2d)
    return out[:M]


# ---------------------------------------------------------------------------
# Flash-style attention: online softmax, KV-tiled, several heads per grid step.
# ---------------------------------------------------------------------------
def _flash_attn_kernel(q_ref, k_ref, v_ref, o_ref, m_sc, l_sc, acc_sc, *,
                       scale, kv_len, tkv):
    kv = pl.program_id(2)

    @pl.when(kv == 0)
    def _():
        m_sc[...] = jnp.full_like(m_sc, _NEG_INF)
        l_sc[...] = jnp.zeros_like(l_sc)
        acc_sc[...] = jnp.zeros_like(acc_sc)

    # Fold the 1/sqrt(Dh) scale into q, then feed bf16 operands to the MXU.
    q = (q_ref[...].astype(jnp.float32) * scale).astype(jnp.bfloat16)
    k = k_ref[...].astype(jnp.bfloat16)
    s = jnp.einsum("bqd,bkd->bqk", q, k, preferred_element_type=jnp.float32)

    # Mask zero-padded key/value positions (kv_len is the true sequence length).
    kv_pos = kv * tkv + jax.lax.broadcasted_iota(jnp.int32, s.shape, 2)
    s = jnp.where(kv_pos < kv_len, s, _NEG_INF)

    m_prev = m_sc[...]
    m_new = jnp.maximum(m_prev, jnp.max(s, axis=-1, keepdims=True))
    alpha = jnp.exp(m_prev - m_new)
    p = jnp.exp(s - m_new)
    l_sc[...] = alpha * l_sc[...] + jnp.sum(p, axis=-1, keepdims=True)
    acc_sc[...] = alpha * acc_sc[...] + jnp.einsum(
        "bqk,bkd->bqd", p.astype(jnp.bfloat16), v_ref[...].astype(jnp.bfloat16),
        preferred_element_type=jnp.float32)
    m_sc[...] = m_new

    @pl.when(kv == pl.num_programs(2) - 1)
    def _():
        o_ref[...] = (acc_sc[...] *
                      pl.reciprocal(l_sc[...], approx=True)).astype(o_ref.dtype)


def pallas_attention(q, k, v, *, scale):
    """q, k, v: (B*H, L, Dh) -> (B*H, L, Dh). Non-causal flash attention."""
    BH, L, Dh = q.shape
    T = min(256, _round_up(L, 8))            # shared q / kv tile length
    Lp = _round_up(L, T)
    hb = 1
    for cand in (8, 4, 2, 1):                # heads per grid step
        if BH % cand == 0:
            hb = cand
            break
    if Lp != L:
        pad = ((0, 0), (0, Lp - L), (0, 0))
        q, k, v = (jnp.pad(t, pad) for t in (q, k, v))

    est = 4 * (2 * 3 * hb * T * Dh            # double-buffered q/k/v blocks
               + 2 * hb * T * Dh              # output block
               + hb * T * (Dh + 2)            # m/l/acc scratch
               + hb * T * T)                  # score tile intermediates

    out = pl.pallas_call(
        functools.partial(_flash_attn_kernel, scale=scale, kv_len=L, tkv=T),
        out_shape=jax.ShapeDtypeStruct((BH, Lp, Dh), q.dtype),
        grid_spec=pltpu.PrefetchScalarGridSpec(
            num_scalar_prefetch=0,
            grid=(BH // hb, Lp // T, Lp // T),
            in_specs=[
                pl.BlockSpec((hb, T, Dh), lambda h, qi, ki: (h, qi, 0)),
                pl.BlockSpec((hb, T, Dh), lambda h, qi, ki: (h, ki, 0)),
                pl.BlockSpec((hb, T, Dh), lambda h, qi, ki: (h, ki, 0)),
            ],
            out_specs=pl.BlockSpec((hb, T, Dh), lambda h, qi, ki: (h, qi, 0)),
            scratch_shapes=[
                pltpu.VMEM((hb, T, 1), jnp.float32),
                pltpu.VMEM((hb, T, 1), jnp.float32),
                pltpu.VMEM((hb, T, Dh), jnp.float32),
            ],
        ),
        compiler_params=pltpu.CompilerParams(
            dimension_semantics=("parallel", "parallel", "arbitrary"),
            vmem_limit_bytes=_vmem_limit_bytes(est)),
    )(q, k, v)
    return out[:, :L, :]


# ---------------------------------------------------------------------------
# Transformer forward (window_size=None path)
# ---------------------------------------------------------------------------
def multihead_attention(x_tok, p, n_head, B, L):
    """x_tok: (B*L, E) token-major activations; pre-LN fused into the QKV matmul."""
    E = x_tok.shape[-1]
    Dh = E // n_head
    qkv = pallas_ln_linear(x_tok, p["ln1_g"], p["ln1_b"],
                           p["in_proj_w"], p["in_proj_b"])        # (B*L, 3E)
    # TODO(synk): fusing the head split into the QKV linear's out_specs would
    # remove this transpose but trades lane density when Dh < 128, so the
    # split/merge stays as one XLA transpose each way per layer.
    qkv = qkv.reshape(B, L, 3, n_head, Dh).transpose(2, 0, 3, 1, 4)
    qkv = qkv.reshape(3, B * n_head, L, Dh)
    o = pallas_attention(qkv[0], qkv[1], qkv[2], scale=1.0 / math.sqrt(Dh))
    o = o.reshape(B, n_head, L, Dh).transpose(0, 2, 1, 3).reshape(B * L, E)
    return pallas_linear(o, p["out_proj_w"], p["out_proj_b"])


def res_att_block(x_tok, p, n_head, B, L):
    x_tok = x_tok + multihead_attention(x_tok, p, n_head, B, L)
    h = pallas_ln_linear(x_tok, p["ln2_g"], p["ln2_b"],
                         p["c_fc_w"], p["c_fc_b"], activation="gelu_fast")
    h = pallas_linear(h, p["c_proj_w"], p["c_proj_b"])
    return x_tok + h


def transformer_forward(x, params, n_head):
    # x: (L, B, E) sequence-first (torch.nn.MultiheadAttention default layout).
    # TODO(synk): windowed / shifted-window attention (window_size is not None)
    # is not implemented; this covers the global-attention (window_size=None) path.
    L, B, E = x.shape
    x_tok = x.transpose(1, 0, 2).reshape(B * L, E)   # one layout change for the whole stack
    for p in params:
        x_tok = res_att_block(x_tok, p, n_head, B, L)
    return x_tok.reshape(B, L, E).transpose(1, 0, 2)


# ---------------------------------------------------------------------------
# Parameter init + pure-JAX reference
# ---------------------------------------------------------------------------
def init_params(key, width, layers):
    params = []
    E = width
    for _ in range(layers):
        key, *ks = jax.random.split(key, 13)
        params.append(dict(
            ln1_g=1.0 + 0.1 * jax.random.normal(ks[0], (E,), jnp.float32),
            ln1_b=0.1 * jax.random.normal(ks[1], (E,), jnp.float32),
            in_proj_w=0.05 * jax.random.normal(ks[2], (E, 3 * E), jnp.float32),
            in_proj_b=0.05 * jax.random.normal(ks[3], (3 * E,), jnp.float32),
            out_proj_w=0.05 * jax.random.normal(ks[4], (E, E), jnp.float32),
            out_proj_b=0.05 * jax.random.normal(ks[5], (E,), jnp.float32),
            ln2_g=1.0 + 0.1 * jax.random.normal(ks[6], (E,), jnp.float32),
            ln2_b=0.1 * jax.random.normal(ks[7], (E,), jnp.float32),
            c_fc_w=0.05 * jax.random.normal(ks[8], (E, 4 * E), jnp.float32),
            c_fc_b=0.05 * jax.random.normal(ks[9], (4 * E,), jnp.float32),
            c_proj_w=0.05 * jax.random.normal(ks[10], (4 * E, E), jnp.float32),
            c_proj_b=0.05 * jax.random.normal(ks[11], (E,), jnp.float32),
        ))
    return params


def reference_forward(x, params, n_head):
    HI = jax.lax.Precision.HIGHEST

    def ln(t, g, b):
        m = jnp.mean(t, axis=-1, keepdims=True)
        v = jnp.mean((t - m) ** 2, axis=-1, keepdims=True)
        return (t - m) * jax.lax.rsqrt(v + LN_EPS) * g + b

    for p in params:
        L, B, E = x.shape
        Dh = E // n_head
        y = ln(x, p["ln1_g"], p["ln1_b"])
        qkv = jnp.einsum("lbe,ef->lbf", y, p["in_proj_w"], precision=HI) + p["in_proj_b"]
        q, k, v = jnp.split(qkv, 3, axis=-1)

        def sh(t):
            return t.reshape(L, B, n_head, Dh).transpose(1, 2, 0, 3)  # (B,H,L,Dh)

        q, k, v = sh(q), sh(k), sh(v)
        s = jnp.einsum("bhqd,bhkd->bhqk", q, k, precision=HI) / math.sqrt(Dh)
        a = jax.nn.softmax(s, axis=-1)
        o = jnp.einsum("bhqk,bhkd->bhqd", a, v, precision=HI)
        o = o.transpose(2, 0, 1, 3).reshape(L, B, E)
        o = jnp.einsum("lbe,ef->lbf", o, p["out_proj_w"], precision=HI) + p["out_proj_b"]
        x = x + o

        y = ln(x, p["ln2_g"], p["ln2_b"])
        h = jnp.einsum("lbe,ef->lbf", y, p["c_fc_w"], precision=HI) + p["c_fc_b"]
        h = h * jax.nn.sigmoid(1.702 * h)
        h = jnp.einsum("lbf,fe->lbe", h, p["c_proj_w"], precision=HI) + p["c_proj_b"]
        x = x + h
    return x


if __name__ == "__main__":
    # Transformer(width=64, layers=2, heads=4), x: (L, B, E) sequence-first.
    width, layers, heads = 64, 2, 4
    seq_len, batch = 16, 2

    key = jax.random.PRNGKey(0)
    kx, kp = jax.random.split(key)
    x = jax.random.normal(kx, (seq_len, batch, width), dtype=jnp.float32)
    params = init_params(kp, width, layers)

    fwd = jax.jit(lambda xx: transformer_forward(xx, params, heads))
    out = fwd(x)
    jax.block_until_ready(out)

    ref = reference_forward(x, params, heads)
    assert out.shape == (seq_len, batch, width), out.shape
    # Tolerance accounts for bf16 MXU operands (f32 accumulation) vs f32 reference.
    np.testing.assert_allclose(np.asarray(out), np.asarray(ref),
                               rtol=2e-2, atol=2e-2)
    print("KERNEL_OK")
</pallas_src>

<mosaic_0001>
module attributes {stable_mosaic.version = 11 : i64} {
  func.func @_ln_linear_kernel(%arg0: i32, %arg1: i32, %arg2: memref<32x64xf32, #tpu.memory_space<vmem>>, %arg3: memref<1x64xf32, #tpu.memory_space<vmem>>, %arg4: memref<1x64xf32, #tpu.memory_space<vmem>>, %arg5: memref<64x256xf32, #tpu.memory_space<vmem>>, %arg6: memref<1x256xf32, #tpu.memory_space<vmem>>, %arg7: memref<32x256xf32, #tpu.memory_space<vmem>>) attributes {dimension_semantics = [#tpu.dimension_semantics<parallel>, #tpu.dimension_semantics<parallel>], iteration_bounds = array<i64: 1, 1>, scalar_prefetch = 0 : i64, scratch_operands = 0 : i64, tpu.core_type = #tpu.core_type<tc>, window_params = [{transform_indices = @transform_0, window_bounds = array<i64: 32, 64>}, {pipeline_mode = #tpu.pipeline_mode<synchronous>, transform_indices = @transform_1, window_bounds = array<i64: 1, 64>}, {pipeline_mode = #tpu.pipeline_mode<synchronous>, transform_indices = @transform_2, window_bounds = array<i64: 1, 64>}, {transform_indices = @transform_3, window_bounds = array<i64: 64, 256>}, {transform_indices = @transform_4, window_bounds = array<i64: 1, 256>}, {transform_indices = @transform_5, window_bounds = array<i64: 32, 256>}]} {
    %c0 = arith.constant 0 : index
    %c0_0 = arith.constant 0 : index
    %0 = vector.load %arg2[%c0, %c0_0] : memref<32x64xf32, #tpu.memory_space<vmem>>, vector<32x64xf32>
    %cst = arith.constant dense<0.000000e+00> : vector<32xf32>
    %1 = vector.multi_reduction <add>, %0, %cst [1] : vector<32x64xf32> to vector<32xf32>
    %2 = vector.shape_cast %1 : vector<32xf32> to vector<32x1xf32>
    %cst_1 = arith.constant 6.400000e+01 : f32
    %3 = vector.broadcast %cst_1 : f32 to vector<32x1xf32>
    %4 = arith.divf %2, %3 : vector<32x1xf32>
    %5 = vector.broadcast %4 : vector<32x1xf32> to vector<32x64xf32>
    %6 = arith.subf %0, %5 : vector<32x64xf32>
    %7 = arith.mulf %6, %6 : vector<32x64xf32>
    %cst_2 = arith.constant dense<0.000000e+00> : vector<32xf32>
    %8 = vector.multi_reduction <add>, %7, %cst_2 [1] : vector<32x64xf32> to vector<32xf32>
    %9 = vector.shape_cast %8 : vector<32xf32> to vector<32x1xf32>
    %cst_3 = arith.constant 6.400000e+01 : f32
    %10 = vector.broadcast %cst_3 : f32 to vector<32x1xf32>
    %11 = arith.divf %9, %10 : vector<32x1xf32>
    %cst_4 = arith.constant 9.99999974E-6 : f32
    %12 = vector.broadcast %cst_4 : f32 to vector<32x1xf32>
    %13 = arith.addf %11, %12 : vector<32x1xf32>
    %14 = math.rsqrt %13 : vector<32x1xf32>
    %15 = vector.broadcast %14 : vector<32x1xf32> to vector<32x64xf32>
    %16 = arith.mulf %6, %15 : vector<32x64xf32>
    %c0_5 = arith.constant 0 : index
    %c0_6 = arith.constant 0 : index
    %17 = vector.load %arg3[%c0_5, %c0_6] : memref<1x64xf32, #tpu.memory_space<vmem>>, vector<1x64xf32>
    %18 = vector.broadcast %17 : vector<1x64xf32> to vector<32x64xf32>
    %19 = arith.mulf %16, %18 : vector<32x64xf32>
    %c0_7 = arith.constant 0 : index
    %c0_8 = arith.constant 0 : index
    %20 = vector.load %arg4[%c0_7, %c0_8] : memref<1x64xf32, #tpu.memory_space<vmem>>, vector<1x64xf32>
    %21 = vector.broadcast %20 : vector<1x64xf32> to vector<32x64xf32>
    %22 = arith.addf %19, %21 : vector<32x64xf32>
    %23 = arith.truncf %22 : vector<32x64xf32> to vector<32x64xbf16>
    %c0_9 = arith.constant 0 : index
    %c0_10 = arith.constant 0 : index
    %24 = vector.load %arg5[%c0_9, %c0_10] : memref<64x256xf32, #tpu.memory_space<vmem>>, vector<64x256xf32>
    %25 = arith.truncf %24 : vector<64x256xf32> to vector<64x256xbf16>
    %cst_11 = arith.constant dense<0.000000e+00> : vector<32x256xf32>
    %26 = tpu.matmul %23, %25, %cst_11 {dimension_numbers = #tpu.dot_dimension_numbers<[1], [0], [0], [1], [0, 0, 1, 1], [], []>} : vector<32x64xbf16>, vector<64x256xbf16>, vector<32x256xf32> -> vector<32x256xf32>
    %c0_12 = arith.constant 0 : index
    %c0_13 = arith.constant 0 : index
    %27 = vector.load %arg6[%c0_12, %c0_13] : memref<1x256xf32, #tpu.memory_space<vmem>>, vector<1x256xf32>
    %28 = vector.broadcast %27 : vector<1x256xf32> to vector<32x256xf32>
    %29 = arith.addf %26, %28 : vector<32x256xf32>
    %c0_14 = arith.constant 0 : index
    %c0_15 = arith.constant 0 : index
    %30 = vector.load %arg7[%c0_14, %c0_15] : memref<32x256xf32, #tpu.memory_space<vmem>>, vector<32x256xf32>
    tpu.vector_store %arg7[%c0_14, %c0_15], %29 {strides = array<i32>} : memref<32x256xf32, #tpu.memory_space<vmem>>, vector<32x256xf32>,
    return
  }
  func.func @transform_0(%arg0: i32, %arg1: i32) -> (i32, i32) {
    %c0_i32 = arith.constant 0 : i32
    %c0_i32_0 = arith.constant 0 : i32
    return %arg0, %c0_i32 : i32, i32
  }
  func.func @transform_1(%arg0: i32, %arg1: i32) -> (i32, i32) {
    %c0_i32 = arith.constant 0 : i32
    %c0_i32_0 = arith.constant 0 : i32
    %c0_i32_1 = arith.constant 0 : i32
    return %c0_i32, %c0_i32_0 : i32, i32
  }
  func.func @transform_2(%arg0: i32, %arg1: i32) -> (i32, i32) {
    %c0_i32 = arith.constant 0 : i32
    %c0_i32_0 = arith.constant 0 : i32
    %c0_i32_1 = arith.constant 0 : i32
    return %c0_i32, %c0_i32_0 : i32, i32
  }
  func.func @transform_3(%arg0: i32, %arg1: i32) -> (i32, i32) {
    %c0_i32 = arith.constant 0 : i32
    %c0_i32_0 = arith.constant 0 : i32
    return %c0_i32, %arg1 : i32, i32
  }
  func.func @transform_4(%arg0: i32, %arg1: i32) -> (i32, i32) {
    %c0_i32 = arith.constant 0 : i32
    %c0_i32_0 = arith.constant 0 : i32
    return %c0_i32, %arg1 : i32, i32
  }
  func.func @transform_5(%arg0: i32, %arg1: i32) -> (i32, i32) {
    %c0_i32 = arith.constant 0 : i32
    return %arg0, %arg1 : i32, i32
  }
}

module attributes {stable_mosaic.version = 11 : i64} {
  func.func @_flash_attn_kernel(%arg0: i32, %arg1: i32, %arg2: i32, %arg3: memref<8x16x16xf32, #tpu.memory_space<vmem>>, %arg4: memref<8x16x16xf32, #tpu.memory_space<vmem>>, %arg5: memref<8x16x16xf32, #tpu.memory_space<vmem>>, %arg6: memref<8x16x16xf32, #tpu.memory_space<vmem>>, %arg7: memref<8x16x1xf32, #tpu.memory_space<vmem>>, %arg8: memref<8x16x1xf32, #tpu.memory_space<vmem>>, %arg9: memref<8x16x16xf32, #tpu.memory_space<vmem>>) attributes {dimension_semantics = [#tpu.dimension_semantics<parallel>, #tpu.dimension_semantics<parallel>, #tpu.dimension_semantics<arbitrary>], iteration_bounds = array<i64: 1, 1, 1>, scalar_prefetch = 0 : i64, scratch_operands = 3 : i64, tpu.core_type = #tpu.core_type<tc>, window_params = [{transform_indices = @transform_0, window_bounds = array<i64: 8, 16, 16>}, {transform_indices = @transform_1, window_bounds = array<i64: 8, 16, 16>}, {transform_indices = @transform_2, window_bounds = array<i64: 8, 16, 16>}, {transform_indices = @transform_3, window_bounds = array<i64: 8, 16, 16>}]} {
    %c0_i32 = arith.constant 0 : i32
    %0 = arith.cmpi eq, %arg2, %c0_i32 : i32
    %1 = arith.extui %0 : i1 to i32
    %c0_i32_0 = arith.constant 0 : i32
    %2 = arith.cmpi ne, %1, %c0_i32_0 : i32
    scf.if %2 {
      %cst_35 = arith.constant -1.000000e+30 : f32
      %46 = vector.broadcast %cst_35 : f32 to vector<8x16x1xf32>
      %c0_36 = arith.constant 0 : index
      %c0_37 = arith.constant 0 : index
      %c0_38 = arith.constant 0 : index
      %47 = vector.load %arg7[%c0_36, %c0_37, %c0_38] : memref<8x16x1xf32, #tpu.memory_space<vmem>>, vector<8x16x1xf32>
      tpu.vector_store %arg7[%c0_36, %c0_37, %c0_38], %46 {strides = array<i32>} : memref<8x16x1xf32, #tpu.memory_space<vmem>>, vector<8x16x1xf32>,
      %cst_39 = arith.constant 0.000000e+00 : f32
      %48 = vector.broadcast %cst_39 : f32 to vector<8x16x1xf32>
      %c0_40 = arith.constant 0 : index
      %c0_41 = arith.constant 0 : index
      %c0_42 = arith.constant 0 : index
      %49 = vector.load %arg8[%c0_40, %c0_41, %c0_42] : memref<8x16x1xf32, #tpu.memory_space<vmem>>, vector<8x16x1xf32>
      tpu.vector_store %arg8[%c0_40, %c0_41, %c0_42], %48 {strides = array<i32>} : memref<8x16x1xf32, #tpu.memory_space<vmem>>, vector<8x16x1xf32>,
      %cst_43 = arith.constant 0.000000e+00 : f32
      %50 = vector.broadcast %cst_43 : f32 to vector<8x16x16xf32>
      %c0_44 = arith.constant 0 : index
      %c0_45 = arith.constant 0 : index
      %c0_46 = arith.constant 0 : index
      %51 = vector.load %arg9[%c0_44, %c0_45, %c0_46] : memref<8x16x16xf32, #tpu.memory_space<vmem>>, vector<8x16x16xf32>
      tpu.vector_store %arg9[%c0_44, %c0_45, %c0_46], %50 {strides = array<i32>} : memref<8x16x16xf32, #tpu.memory_space<vmem>>, vector<8x16x16xf32>,
    } else {
    }
    %c0 = arith.constant 0 : index
    %c0_1 = arith.constant 0 : index
    %c0_2 = arith.constant 0 : index
    %3 = vector.load %arg3[%c0, %c0_1, %c0_2] : memref<8x16x16xf32, #tpu.memory_space<vmem>>, vector<8x16x16xf32>
    %cst = arith.constant 2.500000e-01 : f32
    %4 = vector.broadcast %cst : f32 to vector<8x16x16xf32>
    %5 = arith.mulf %3, %4 : vector<8x16x16xf32>
    %6 = arith.truncf %5 : vector<8x16x16xf32> to vector<8x16x16xbf16>
    %c0_3 = arith.constant 0 : index
    %c0_4 = arith.constant 0 : index
    %c0_5 = arith.constant 0 : index
    %7 = vector.load %arg4[%c0_3, %c0_4, %c0_5] : memref<8x16x16xf32, #tpu.memory_space<vmem>>, vector<8x16x16xf32>
    %8 = arith.truncf %7 : vector<8x16x16xf32> to vector<8x16x16xbf16>
    "tpu.trace_start"() <{level = 10 : i32, message = "bqd,bkd->bqk"}> : () -> ()
    %cst_6 = arith.constant dense<0.000000e+00> : vector<8x16x16xf32>
    %9 = tpu.matmul %6, %8, %cst_6 {dimension_numbers = #tpu.dot_dimension_numbers<[2], [2], [1], [1], [0, 0, 0, 1, 1, 1], [0], [0]>} : vector<8x16x16xbf16>, vector<8x16x16xbf16>, vector<8x16x16xf32> -> vector<8x16x16xf32>
    "tpu.trace_stop"() : () -> ()
    %c16_i32 = arith.constant 16 : i32
    %10 = arith.muli %arg2, %c16_i32 : i32
    %11 = tpu.iota {dimensions = array<i32: 2>} : vector<8x16x16xi32>
    %12 = vector.broadcast %10 : i32 to vector<8x16x16xi32>
    %13 = arith.addi %12, %11 : vector<8x16x16xi32>
    %c16_i32_7 = arith.constant 16 : i32
    %14 = vector.broadcast %c16_i32_7 : i32 to vector<8x16x16xi32>
    %15 = arith.cmpi slt, %13, %14 : vector<8x16x16xi32>
    %cst_8 = arith.constant -1.000000e+30 : f32
    %16 = vector.broadcast %cst_8 : f32 to vector<8x16x16xf32>
    %17 = arith.select %15, %9, %16 : vector<8x16x16xi1>, vector<8x16x16xf32>
    %c0_9 = arith.constant 0 : index
    %c0_10 = arith.constant 0 : index
    %c0_11 = arith.constant 0 : index
    %18 = vector.load %arg7[%c0_9, %c0_10, %c0_11] : memref<8x16x1xf32, #tpu.memory_space<vmem>>, vector<8x16x1xf32>
    %cst_12 = arith.constant dense<0xFF800000> : vector<8x16xf32>
    %19 = vector.multi_reduction <maximumf>, %17, %cst_12 [2] : vector<8x16x16xf32> to vector<8x16xf32>
    %20 = vector.shape_cast %19 : vector<8x16xf32> to vector<8x16x1xf32>
    %21 = arith.maximumf %18, %20 : vector<8x16x1xf32>
    %22 = arith.subf %18, %21 : vector<8x16x1xf32>
    %23 = math.exp %22 : vector<8x16x1xf32>
    %24 = vector.broadcast %21 : vector<8x16x1xf32> to vector<8x16x16xf32>
    %25 = arith.subf %17, %24 : vector<8x16x16xf32>
    %26 = math.exp %25 : vector<8x16x16xf32>
    %c0_13 = arith.constant 0 : index
    %c0_14 = arith.constant 0 : index
    %c0_15 = arith.constant 0 : index
    %27 = vector.load %arg8[%c0_13, %c0_14, %c0_15] : memref<8x16x1xf32, #tpu.memory_space<vmem>>, vector<8x16x1xf32>
    %28 = arith.mulf %23, %27 : vector<8x16x1xf32>
    %cst_16 = arith.constant dense<0.000000e+00> : vector<8x16xf32>
    %29 = vector.multi_reduction <add>, %26, %cst_16 [2] : vector<8x16x16xf32> to vector<8x16xf32>
    %30 = vector.shape_cast %29 : vector<8x16xf32> to vector<8x16x1xf32>
    %31 = arith.addf %28, %30 : vector<8x16x1xf32>
    %c0_17 = arith.constant 0 : index
    %c0_18 = arith.constant 0 : index
    %c0_19 = arith.constant 0 : index
    %32 = vector.load %arg8[%c0_17, %c0_18, %c0_19] : memref<8x16x1xf32, #tpu.memory_space<vmem>>, vector<8x16x1xf32>
    tpu.vector_store %arg8[%c0_17, %c0_18, %c0_19], %31 {strides = array<i32>} : memref<8x16x1xf32, #tpu.memory_space<vmem>>, vector<8x16x1xf32>,
    %c0_20 = arith.constant 0 : index
    %c0_21 = arith.constant 0 : index
    %c0_22 = arith.constant 0 : index
    %33 = vector.load %arg9[%c0_20, %c0_21, %c0_22] : memref<8x16x16xf32, #tpu.memory_space<vmem>>, vector<8x16x16xf32>
    %34 = vector.broadcast %23 : vector<8x16x1xf32> to vector<8x16x16xf32>
    %35 = arith.mulf %34, %33 : vector<8x16x16xf32>
    %36 = arith.truncf %26 : vector<8x16x16xf32> to vector<8x16x16xbf16>
    %c0_23 = arith.constant 0 : index
    %c0_24 = arith.constant 0 : index
    %c0_25 = arith.constant 0 : index
    %37 = vector.load %arg5[%c0_23, %c0_24, %c0_25] : memref<8x16x16xf32, #tpu.memory_space<vmem>>, vector<8x16x16xf32>
    %38 = arith.truncf %37 : vector<8x16x16xf32> to vector<8x16x16xbf16>
    "tpu.trace_start"() <{level = 10 : i32, message = "bqk,bkd->bqd"}> : () -> ()
    %cst_26 = arith.constant dense<0.000000e+00> : vector<8x16x16xf32>
    %39 = tpu.matmul %36, %38, %cst_26 {dimension_numbers = #tpu.dot_dimension_numbers<[2], [1], [1], [2], [0, 0, 0, 1, 1, 2], [0], [0]>} : vector<8x16x16xbf16>, vector<8x16x16xbf16>, vector<8x16x16xf32> -> vector<8x16x16xf32>
    "tpu.trace_stop"() : () -> ()
    %40 = arith.addf %35, %39 : vector<8x16x16xf32>
    %c0_27 = arith.constant 0 : index
    %c0_28 = arith.constant 0 : index
    %c0_29 = arith.constant 0 : index
    %41 = vector.load %arg9[%c0_27, %c0_28, %c0_29] : memref<8x16x16xf32, #tpu.memory_space<vmem>>, vector<8x16x16xf32>
    tpu.vector_store %arg9[%c0_27, %c0_28, %c0_29], %40 {strides = array<i32>} : memref<8x16x16xf32, #tpu.memory_space<vmem>>, vector<8x16x16xf32>,
    %c0_30 = arith.constant 0 : index
    %c0_31 = arith.constant 0 : index
    %c0_32 = arith.constant 0 : index
    %42 = vector.load %arg7[%c0_30, %c0_31, %c0_32] : memref<8x16x1xf32, #tpu.memory_space<vmem>>, vector<8x16x1xf32>
    tpu.vector_store %arg7[%c0_30, %c0_31, %c0_32], %21 {strides = array<i32>} : memref<8x16x1xf32, #tpu.memory_space<vmem>>, vector<8x16x1xf32>,
    %c0_i32_33 = arith.constant 0 : i32
    %43 = arith.cmpi eq, %arg2, %c0_i32_33 : i32
    %44 = arith.extui %43 : i1 to i32
    %c0_i32_34 = arith.constant 0 : i32
    %45 = arith.cmpi ne, %44, %c0_i32_34 : i32
    scf.if %45 {
      %c0_35 = arith.constant 0 : index
      %c0_36 = arith.constant 0 : index
      %c0_37 = arith.constant 0 : index
      %46 = vector.load %arg9[%c0_35, %c0_36, %c0_37] : memref<8x16x16xf32, #tpu.memory_space<vmem>>, vector<8x16x16xf32>
      %c0_38 = arith.constant 0 : index
      %c0_39 = arith.constant 0 : index
      %c0_40 = arith.constant 0 : index
      %47 = vector.load %arg8[%c0_38, %c0_39, %c0_40] : memref<8x16x1xf32, #tpu.memory_space<vmem>>, vector<8x16x1xf32>
      %48 = tpu.reciprocal %47 {approx = true} : vector<8x16x1xf32> -> vector<8x16x1xf32>
      %49 = vector.broadcast %48 : vector<8x16x1xf32> to vector<8x16x16xf32>
      %50 = arith.mulf %46, %49 : vector<8x16x16xf32>
      %c0_41 = arith.constant 0 : index
      %c0_42 = arith.constant 0 : index
      %c0_43 = arith.constant 0 : index
      %51 = vector.load %arg6[%c0_41, %c0_42, %c0_43] : memref<8x16x16xf32, #tpu.memory_space<vmem>>, vector<8x16x16xf32>
      tpu.vector_store %arg6[%c0_41, %c0_42, %c0_43], %50 {strides = array<i32>} : memref<8x16x16xf32, #tpu.memory_space<vmem>>, vector<8x16x16xf32>,
    } else {
    }
    return
  }
  func.func @transform_0(%arg0: i32, %arg1: i32, %arg2: i32) -> (i32, i32, i32) {
    %c0_i32 = arith.constant 0 : i32
    %c0_i32_0 = arith.constant 0 : i32
    return %arg0, %arg1, %c0_i32 : i32, i32, i32
  }
  func.func @transform_1(%arg0: i32, %arg1: i32, %arg2: i32) -> (i32, i32, i32) {
    %c0_i32 = arith.constant 0 : i32
    %c0_i32_0 = arith.constant 0 : i32
    return %arg0, %arg2, %c0_i32 : i32, i32, i32
  }
  func.func @transform_2(%arg0: i32, %arg1: i32, %arg2: i32) -> (i32, i32, i32) {
    %c0_i32 = arith.constant 0 : i32
    %c0_i32_0 = arith.constant 0 : i32
    return %arg0, %arg2, %c0_i32 : i32, i32, i32
  }
  func.func @transform_3(%arg0: i32, %arg1: i32, %arg2: i32) -> (i32, i32, i32) {
    %c0_i32 = arith.constant 0 : i32
    %c0_i32_0 = arith.constant 0 : i32
    return %arg0, %arg1, %c0_i32 : i32, i32, i32
  }
}

module attributes {stable_mosaic.version = 11 : i64} {
  func.func @_linear_kernel(%arg0: i32, %arg1: i32, %arg2: i32, %arg3: memref<32x64xf32, #tpu.memory_space<vmem>>, %arg4: memref<64x128xf32, #tpu.memory_space<vmem>>, %arg5: memref<1x128xf32, #tpu.memory_space<vmem>>, %arg6: memref<32x128xf32, #tpu.memory_space<vmem>>, %arg7: memref<32x128xf32, #tpu.memory_space<vmem>>) attributes {dimension_semantics = [#tpu.dimension_semantics<parallel>, #tpu.dimension_semantics<parallel>, #tpu.dimension_semantics<arbitrary>], iteration_bounds = array<i64: 1, 1, 1>, scalar_prefetch = 0 : i64, scratch_operands = 1 : i64, tpu.core_type = #tpu.core_type<tc>, window_params = [{transform_indices = @transform_0, window_bounds = array<i64: 32, 64>}, {transform_indices = @transform_1, window_bounds = array<i64: 64, 128>}, {transform_indices = @transform_2, window_bounds = array<i64: 1, 128>}, {transform_indices = @transform_3, window_bounds = array<i64: 32, 128>}]} {
    %c0_i32 = arith.constant 0 : i32
    %0 = arith.cmpi eq, %arg2, %c0_i32 : i32
    %1 = arith.extui %0 : i1 to i32
    %c0_i32_0 = arith.constant 0 : i32
    %2 = arith.cmpi ne, %1, %c0_i32_0 : i32
    scf.if %2 {
      %cst_10 = arith.constant 0.000000e+00 : f32
      %14 = vector.broadcast %cst_10 : f32 to vector<32x128xf32>
      %c0_11 = arith.constant 0 : index
      %c0_12 = arith.constant 0 : index
      %15 = vector.load %arg7[%c0_11, %c0_12] : memref<32x128xf32, #tpu.memory_space<vmem>>, vector<32x128xf32>
      tpu.vector_store %arg7[%c0_11, %c0_12], %14 {strides = array<i32>} : memref<32x128xf32, #tpu.memory_space<vmem>>, vector<32x128xf32>,
    } else {
    }
    %c0 = arith.constant 0 : index
    %c0_1 = arith.constant 0 : index
    %3 = vector.load %arg7[%c0, %c0_1] : memref<32x128xf32, #tpu.memory_space<vmem>>, vector<32x128xf32>
    %c0_2 = arith.constant 0 : index
    %c0_3 = arith.constant 0 : index
    %4 = vector.load %arg3[%c0_2, %c0_3] : memref<32x64xf32, #tpu.memory_space<vmem>>, vector<32x64xf32>
    %5 = arith.truncf %4 : vector<32x64xf32> to vector<32x64xbf16>
    %c0_4 = arith.constant 0 : index
    %c0_5 = arith.constant 0 : index
    %6 = vector.load %arg4[%c0_4, %c0_5] : memref<64x128xf32, #tpu.memory_space<vmem>>, vector<64x128xf32>
    %7 = arith.truncf %6 : vector<64x128xf32> to vector<64x128xbf16>
    %cst = arith.constant dense<0.000000e+00> : vector<32x128xf32>
    %8 = tpu.matmul %5, %7, %cst {dimension_numbers = #tpu.dot_dimension_numbers<[1], [0], [0], [1], [0, 0, 1, 1], [], []>} : vector<32x64xbf16>, vector<64x128xbf16>, vector<32x128xf32> -> vector<32x128xf32>
    %9 = arith.addf %3, %8 : vector<32x128xf32>
    %c0_6 = arith.constant 0 : index
    %c0_7 = arith.constant 0 : index
    %10 = vector.load %arg7[%c0_6, %c0_7] : memref<32x128xf32, #tpu.memory_space<vmem>>, vector<32x128xf32>
    tpu.vector_store %arg7[%c0_6, %c0_7], %9 {strides = array<i32>} : memref<32x128xf32, #tpu.memory_space<vmem>>, vector<32x128xf32>,
    %c0_i32_8 = arith.constant 0 : i32
    %11 = arith.cmpi eq, %arg2, %c0_i32_8 : i32
    %12 = arith.extui %11 : i1 to i32
    %c0_i32_9 = arith.constant 0 : i32
    %13 = arith.cmpi ne, %12, %c0_i32_9 : i32
    scf.if %13 {
      %c0_10 = arith.constant 0 : index
      %c0_11 = arith.constant 0 : index
      %14 = vector.load %arg7[%c0_10, %c0_11] : memref<32x128xf32, #tpu.memory_space<vmem>>, vector<32x128xf32>
      %c0_12 = arith.constant 0 : index
      %c0_13 = arith.constant 0 : index
      %15 = vector.load %arg5[%c0_12, %c0_13] : memref<1x128xf32, #tpu.memory_space<vmem>>, vector<1x128xf32>
      %16 = vector.broadcast %15 : vector<1x128xf32> to vector<32x128xf32>
      %17 = arith.addf %14, %16 : vector<32x128xf32>
      %c0_14 = arith.constant 0 : index
      %c0_15 = arith.constant 0 : index
      %18 = vector.load %arg6[%c0_14, %c0_15] : memref<32x128xf32, #tpu.memory_space<vmem>>, vector<32x128xf32>
      tpu.vector_store %arg6[%c0_14, %c0_15], %17 {strides = array<i32>} : memref<32x128xf32, #tpu.memory_space<vmem>>, vector<32x128xf32>,
    } else {
    }
    return
  }
  func.func @transform_0(%arg0: i32, %arg1: i32, %arg2: i32) -> (i32, i32) {
    %c0_i32 = arith.constant 0 : i32
    return %arg0, %arg2 : i32, i32
  }
  func.func @transform_1(%arg0: i32, %arg1: i32, %arg2: i32) -> (i32, i32) {
    %c0_i32 = arith.constant 0 : i32
    return %arg2, %arg1 : i32, i32
  }
  func.func @transform_2(%arg0: i32, %arg1: i32, %arg2: i32) -> (i32, i32) {
    %c0_i32 = arith.constant 0 : i32
    %c0_i32_0 = arith.constant 0 : i32
    return %c0_i32, %arg1 : i32, i32
  }
  func.func @transform_3(%arg0: i32, %arg1: i32, %arg2: i32) -> (i32, i32) {
    %c0_i32 = arith.constant 0 : i32
    return %arg0, %arg1 : i32, i32
  }
}

module attributes {stable_mosaic.version = 11 : i64} {
  func.func @_ln_linear_kernel(%arg0: i32, %arg1: i32, %arg2: memref<32x64xf32, #tpu.memory_space<vmem>>, %arg3: memref<1x64xf32, #tpu.memory_space<vmem>>, %arg4: memref<1x64xf32, #tpu.memory_space<vmem>>, %arg5: memref<64x256xf32, #tpu.memory_space<vmem>>, %arg6: memref<1x256xf32, #tpu.memory_space<vmem>>, %arg7: memref<32x256xf32, #tpu.memory_space<vmem>>) attributes {dimension_semantics = [#tpu.dimension_semantics<parallel>, #tpu.dimension_semantics<parallel>], iteration_bounds = array<i64: 1, 1>, scalar_prefetch = 0 : i64, scratch_operands = 0 : i64, tpu.core_type = #tpu.core_type<tc>, window_params = [{transform_indices = @transform_0, window_bounds = array<i64: 32, 64>}, {pipeline_mode = #tpu.pipeline_mode<synchronous>, transform_indices = @transform_1, window_bounds = array<i64: 1, 64>}, {pipeline_mode = #tpu.pipeline_mode<synchronous>, transform_indices = @transform_2, window_bounds = array<i64: 1, 64>}, {transform_indices = @transform_3, window_bounds = array<i64: 64, 256>}, {transform_indices = @transform_4, window_bounds = array<i64: 1, 256>}, {transform_indices = @transform_5, window_bounds = array<i64: 32, 256>}]} {
    %c0 = arith.constant 0 : index
    %c0_0 = arith.constant 0 : index
    %0 = vector.load %arg2[%c0, %c0_0] : memref<32x64xf32, #tpu.memory_space<vmem>>, vector<32x64xf32>
    %cst = arith.constant dense<0.000000e+00> : vector<32xf32>
    %1 = vector.multi_reduction <add>, %0, %cst [1] : vector<32x64xf32> to vector<32xf32>
    %2 = vector.shape_cast %1 : vector<32xf32> to vector<32x1xf32>
    %cst_1 = arith.constant 6.400000e+01 : f32
    %3 = vector.broadcast %cst_1 : f32 to vector<32x1xf32>
    %4 = arith.divf %2, %3 : vector<32x1xf32>
    %5 = vector.broadcast %4 : vector<32x1xf32> to vector<32x64xf32>
    %6 = arith.subf %0, %5 : vector<32x64xf32>
    %7 = arith.mulf %6, %6 : vector<32x64xf32>
    %cst_2 = arith.constant dense<0.000000e+00> : vector<32xf32>
    %8 = vector.multi_reduction <add>, %7, %cst_2 [1] : vector<32x64xf32> to vector<32xf32>
    %9 = vector.shape_cast %8 : vector<32xf32> to vector<32x1xf32>
    %cst_3 = arith.constant 6.400000e+01 : f32
    %10 = vector.broadcast %cst_3 : f32 to vector<32x1xf32>
    %11 = arith.divf %9, %10 : vector<32x1xf32>
    %cst_4 = arith.constant 9.99999974E-6 : f32
    %12 = vector.broadcast %cst_4 : f32 to vector<32x1xf32>
    %13 = arith.addf %11, %12 : vector<32x1xf32>
    %14 = math.rsqrt %13 : vector<32x1xf32>
    %15 = vector.broadcast %14 : vector<32x1xf32> to vector<32x64xf32>
    %16 = arith.mulf %6, %15 : vector<32x64xf32>
    %c0_5 = arith.constant 0 : index
    %c0_6 = arith.constant 0 : index
    %17 = vector.load %arg3[%c0_5, %c0_6] : memref<1x64xf32, #tpu.memory_space<vmem>>, vector<1x64xf32>
    %18 = vector.broadcast %17 : vector<1x64xf32> to vector<32x64xf32>
    %19 = arith.mulf %16, %18 : vector<32x64xf32>
    %c0_7 = arith.constant 0 : index
    %c0_8 = arith.constant 0 : index
    %20 = vector.load %arg4[%c0_7, %c0_8] : memref<1x64xf32, #tpu.memory_space<vmem>>, vector<1x64xf32>
    %21 = vector.broadcast %20 : vector<1x64xf32> to vector<32x64xf32>
    %22 = arith.addf %19, %21 : vector<32x64xf32>
    %23 = arith.truncf %22 : vector<32x64xf32> to vector<32x64xbf16>
    %c0_9 = arith.constant 0 : index
    %c0_10 = arith.constant 0 : index
    %24 = vector.load %arg5[%c0_9, %c0_10] : memref<64x256xf32, #tpu.memory_space<vmem>>, vector<64x256xf32>
    %25 = arith.truncf %24 : vector<64x256xf32> to vector<64x256xbf16>
    %cst_11 = arith.constant dense<0.000000e+00> : vector<32x256xf32>
    %26 = tpu.matmul %23, %25, %cst_11 {dimension_numbers = #tpu.dot_dimension_numbers<[1], [0], [0], [1], [0, 0, 1, 1], [], []>} : vector<32x64xbf16>, vector<64x256xbf16>, vector<32x256xf32> -> vector<32x256xf32>
    %c0_12 = arith.constant 0 : index
    %c0_13 = arith.constant 0 : index
    %27 = vector.load %arg6[%c0_12, %c0_13] : memref<1x256xf32, #tpu.memory_space<vmem>>, vector<1x256xf32>
    %28 = vector.broadcast %27 : vector<1x256xf32> to vector<32x256xf32>
    %29 = arith.addf %26, %28 : vector<32x256xf32>
    %cst_14 = arith.constant -1.702000e+00 : f32
    %30 = vector.broadcast %cst_14 : f32 to vector<32x256xf32>
    %31 = arith.mulf %30, %29 : vector<32x256xf32>
    %32 = math.exp %31 : vector<32x256xf32>
    %cst_15 = arith.constant 1.000000e+00 : f32
    %33 = vector.broadcast %cst_15 : f32 to vector<32x256xf32>
    %34 = arith.addf %33, %32 : vector<32x256xf32>
    %35 = tpu.reciprocal %34 {approx = true} : vector<32x256xf32> -> vector<32x256xf32>
    %36 = arith.mulf %29, %35 : vector<32x256xf32>
    %c0_16 = arith.constant 0 : index
    %c0_17 = arith.constant 0 : index
    %37 = vector.load %arg7[%c0_16, %c0_17] : memref<32x256xf32, #tpu.memory_space<vmem>>, vector<32x256xf32>
    tpu.vector_store %arg7[%c0_16, %c0_17], %36 {strides = array<i32>} : memref<32x256xf32, #tpu.memory_space<vmem>>, vector<32x256xf32>,
    return
  }
  func.func @transform_0(%arg0: i32, %arg1: i32) -> (i32, i32) {
    %c0_i32 = arith.constant 0 : i32
    %c0_i32_0 = arith.constant 0 : i32
    return %arg0, %c0_i32 : i32, i32
  }
  func.func @transform_1(%arg0: i32, %arg1: i32) -> (i32, i32) {
    %c0_i32 = arith.constant 0 : i32
    %c0_i32_0 = arith.constant 0 : i32
    %c0_i32_1 = arith.constant 0 : i32
    return %c0_i32, %c0_i32_0 : i32, i32
  }
  func.func @transform_2(%arg0: i32, %arg1: i32) -> (i32, i32) {
    %c0_i32 = arith.constant 0 : i32
    %c0_i32_0 = arith.constant 0 : i32
    %c0_i32_1 = arith.constant 0 : i32
    return %c0_i32, %c0_i32_0 : i32, i32
  }
  func.func @transform_3(%arg0: i32, %arg1: i32) -> (i32, i32) {
    %c0_i32 = arith.constant 0 : i32
    %c0_i32_0 = arith.constant 0 : i32
    return %c0_i32, %arg1 : i32, i32
  }
  func.func @transform_4(%arg0: i32, %arg1: i32) -> (i32, i32) {
    %c0_i32 = arith.constant 0 : i32
    %c0_i32_0 = arith.constant 0 : i32
    return %c0_i32, %arg1 : i32, i32
  }
  func.func @transform_5(%arg0: i32, %arg1: i32) -> (i32, i32) {
    %c0_i32 = arith.constant 0 : i32
    return %arg0, %arg1 : i32, i32
  }
}

module attributes {stable_mosaic.version = 11 : i64} {
  func.func @_linear_kernel(%arg0: i32, %arg1: i32, %arg2: i32, %arg3: memref<32x256xf32, #tpu.memory_space<vmem>>, %arg4: memref<256x128xf32, #tpu.memory_space<vmem>>, %arg5: memref<1x128xf32, #tpu.memory_space<vmem>>, %arg6: memref<32x128xf32, #tpu.memory_space<vmem>>, %arg7: memref<32x128xf32, #tpu.memory_space<vmem>>) attributes {dimension_semantics = [#tpu.dimension_semantics<parallel>, #tpu.dimension_semantics<parallel>, #tpu.dimension_semantics<arbitrary>], iteration_bounds = array<i64: 1, 1, 1>, scalar_prefetch = 0 : i64, scratch_operands = 1 : i64, tpu.core_type = #tpu.core_type<tc>, window_params = [{transform_indices = @transform_0, window_bounds = array<i64: 32, 256>}, {transform_indices = @transform_1, window_bounds = array<i64: 256, 128>}, {transform_indices = @transform_2, window_bounds = array<i64: 1, 128>}, {transform_indices = @transform_3, window_bounds = array<i64: 32, 128>}]} {
    %c0_i32 = arith.constant 0 : i32
    %0 = arith.cmpi eq, %arg2, %c0_i32 : i32
    %1 = arith.extui %0 : i1 to i32
    %c0_i32_0 = arith.constant 0 : i32
    %2 = arith.cmpi ne, %1, %c0_i32_0 : i32
    scf.if %2 {
      %cst_10 = arith.constant 0.000000e+00 : f32
      %14 = vector.broadcast %cst_10 : f32 to vector<32x128xf32>
      %c0_11 = arith.constant 0 : index
      %c0_12 = arith.constant 0 : index
      %15 = vector.load %arg7[%c0_11, %c0_12] : memref<32x128xf32, #tpu.memory_space<vmem>>, vector<32x128xf32>
      tpu.vector_store %arg7[%c0_11, %c0_12], %14 {strides = array<i32>} : memref<32x128xf32, #tpu.memory_space<vmem>>, vector<32x128xf32>,
    } else {
    }
    %c0 = arith.constant 0 : index
    %c0_1 = arith.constant 0 : index
    %3 = vector.load %arg7[%c0, %c0_1] : memref<32x128xf32, #tpu.memory_space<vmem>>, vector<32x128xf32>
    %c0_2 = arith.constant 0 : index
    %c0_3 = arith.constant 0 : index
    %4 = vector.load %arg3[%c0_2, %c0_3] : memref<32x256xf32, #tpu.memory_space<vmem>>, vector<32x256xf32>
    %5 = arith.truncf %4 : vector<32x256xf32> to vector<32x256xbf16>
    %c0_4 = arith.constant 0 : index
    %c0_5 = arith.constant 0 : index
    %6 = vector.load %arg4[%c0_4, %c0_5] : memref<256x128xf32, #tpu.memory_space<vmem>>, vector<256x128xf32>
    %7 = arith.truncf %6 : vector<256x128xf32> to vector<256x128xbf16>
    %cst = arith.constant dense<0.000000e+00> : vector<32x128xf32>
    %8 = tpu.matmul %5, %7, %cst {dimension_numbers = #tpu.dot_dimension_numbers<[1], [0], [0], [1], [0, 0, 1, 1], [], []>} : vector<32x256xbf16>, vector<256x128xbf16>, vector<32x128xf32> -> vector<32x128xf32>
    %9 = arith.addf %3, %8 : vector<32x128xf32>
    %c0_6 = arith.constant 0 : index
    %c0_7 = arith.constant 0 : index
    %10 = vector.load %arg7[%c0_6, %c0_7] : memref<32x128xf32, #tpu.memory_space<vmem>>, vector<32x128xf32>
    tpu.vector_store %arg7[%c0_6, %c0_7], %9 {strides = array<i32>} : memref<32x128xf32, #tpu.memory_space<vmem>>, vector<32x128xf32>,
    %c0_i32_8 = arith.constant 0 : i32
    %11 = arith.cmpi eq, %arg2, %c0_i32_8 : i32
    %12 = arith.extui %11 : i1 to i32
    %c0_i32_9 = arith.constant 0 : i32
    %13 = arith.cmpi ne, %12, %c0_i32_9 : i32
    scf.if %13 {
      %c0_10 = arith.constant 0 : index
      %c0_11 = arith.constant 0 : index
      %14 = vector.load %arg7[%c0_10, %c0_11] : memref<32x128xf32, #tpu.memory_space<vmem>>, vector<32x128xf32>
      %c0_12 = arith.constant 0 : index
      %c0_13 = arith.constant 0 : index
      %15 = vector.load %arg5[%c0_12, %c0_13] : memref<1x128xf32, #tpu.memory_space<vmem>>, vector<1x128xf32>
      %16 = vector.broadcast %15 : vector<1x128xf32> to vector<32x128xf32>
      %17 = arith.addf %14, %16 : vector<32x128xf32>
      %c0_14 = arith.constant 0 : index
      %c0_15 = arith.constant 0 : index
      %18 = vector.load %arg6[%c0_14, %c0_15] : memref<32x128xf32, #tpu.memory_space<vmem>>, vector<32x128xf32>
      tpu.vector_store %arg6[%c0_14, %c0_15], %17 {strides = array<i32>} : memref<32x128xf32, #tpu.memory_space<vmem>>, vector<32x128xf32>,
    } else {
    }
    return
  }
  func.func @transform_0(%arg0: i32, %arg1: i32, %arg2: i32) -> (i32, i32) {
    %c0_i32 = arith.constant 0 : i32
    return %arg0, %arg2 : i32, i32
  }
  func.func @transform_1(%arg0: i32, %arg1: i32, %arg2: i32) -> (i32, i32) {
    %c0_i32 = arith.constant 0 : i32
    return %arg2, %arg1 : i32, i32
  }
  func.func @transform_2(%arg0: i32, %arg1: i32, %arg2: i32) -> (i32, i32) {
    %c0_i32 = arith.constant 0 : i32
    %c0_i32_0 = arith.constant 0 : i32
    return %c0_i32, %arg1 : i32, i32
  }
  func.func @transform_3(%arg0: i32, %arg1: i32, %arg2: i32) -> (i32, i32) {
    %c0_i32 = arith.constant 0 : i32
    return %arg0, %arg1 : i32, i32
  }
}

module attributes {stable_mosaic.version = 11 : i64} {
  func.func @_ln_linear_kernel(%arg0: i32, %arg1: i32, %arg2: memref<32x64xf32, #tpu.memory_space<vmem>>, %arg3: memref<1x64xf32, #tpu.memory_space<vmem>>, %arg4: memref<1x64xf32, #tpu.memory_space<vmem>>, %arg5: memref<64x256xf32, #tpu.memory_space<vmem>>, %arg6: memref<1x256xf32, #tpu.memory_space<vmem>>, %arg7: memref<32x256xf32, #tpu.memory_space<vmem>>) attributes {dimension_semantics = [#tpu.dimension_semantics<parallel>, #tpu.dimension_semantics<parallel>], iteration_bounds = array<i64: 1, 1>, scalar_prefetch = 0 : i64, scratch_operands = 0 : i64, tpu.core_type = #tpu.core_type<tc>, window_params = [{transform_indices = @transform_0, window_bounds = array<i64: 32, 64>}, {pipeline_mode = #tpu.pipeline_mode<synchronous>, transform_indices = @transform_1, window_bounds = array<i64: 1, 64>}, {pipeline_mode = #tpu.pipeline_mode<synchronous>, transform_indices = @transform_2, window_bounds = array<i64: 1, 64>}, {transform_indices = @transform_3, window_bounds = array<i64: 64, 256>}, {transform_indices = @transform_4, window_bounds = array<i64: 1, 256>}, {transform_indices = @transform_5, window_bounds = array<i64: 32, 256>}]} {
    %c0 = arith.constant 0 : index
    %c0_0 = arith.constant 0 : index
    %0 = vector.load %arg2[%c0, %c0_0] : memref<32x64xf32, #tpu.memory_space<vmem>>, vector<32x64xf32>
    %cst = arith.constant dense<0.000000e+00> : vector<32xf32>
    %1 = vector.multi_reduction <add>, %0, %cst [1] : vector<32x64xf32> to vector<32xf32>
    %2 = vector.shape_cast %1 : vector<32xf32> to vector<32x1xf32>
    %cst_1 = arith.constant 6.400000e+01 : f32
    %3 = vector.broadcast %cst_1 : f32 to vector<32x1xf32>
    %4 = arith.divf %2, %3 : vector<32x1xf32>
    %5 = vector.broadcast %4 : vector<32x1xf32> to vector<32x64xf32>
    %6 = arith.subf %0, %5 : vector<32x64xf32>
    %7 = arith.mulf %6, %6 : vector<32x64xf32>
    %cst_2 = arith.constant dense<0.000000e+00> : vector<32xf32>
    %8 = vector.multi_reduction <add>, %7, %cst_2 [1] : vector<32x64xf32> to vector<32xf32>
    %9 = vector.shape_cast %8 : vector<32xf32> to vector<32x1xf32>
    %cst_3 = arith.constant 6.400000e+01 : f32
    %10 = vector.broadcast %cst_3 : f32 to vector<32x1xf32>
    %11 = arith.divf %9, %10 : vector<32x1xf32>
    %cst_4 = arith.constant 9.99999974E-6 : f32
    %12 = vector.broadcast %cst_4 : f32 to vector<32x1xf32>
    %13 = arith.addf %11, %12 : vector<32x1xf32>
    %14 = math.rsqrt %13 : vector<32x1xf32>
    %15 = vector.broadcast %14 : vector<32x1xf32> to vector<32x64xf32>
    %16 = arith.mulf %6, %15 : vector<32x64xf32>
    %c0_5 = arith.constant 0 : index
    %c0_6 = arith.constant 0 : index
    %17 = vector.load %arg3[%c0_5, %c0_6] : memref<1x64xf32, #tpu.memory_space<vmem>>, vector<1x64xf32>
    %18 = vector.broadcast %17 : vector<1x64xf32> to vector<32x64xf32>
    %19 = arith.mulf %16, %18 : vector<32x64xf32>
    %c0_7 = arith.constant 0 : index
    %c0_8 = arith.constant 0 : index
    %20 = vector.load %arg4[%c0_7, %c0_8] : memref<1x64xf32, #tpu.memory_space<vmem>>, vector<1x64xf32>
    %21 = vector.broadcast %20 : vector<1x64xf32> to vector<32x64xf32>
    %22 = arith.addf %19, %21 : vector<32x64xf32>
    %23 = arith.truncf %22 : vector<32x64xf32> to vector<32x64xbf16>
    %c0_9 = arith.constant 0 : index
    %c0_10 = arith.constant 0 : index
    %24 = vector.load %arg5[%c0_9, %c0_10] : memref<64x256xf32, #tpu.memory_space<vmem>>, vector<64x256xf32>
    %25 = arith.truncf %24 : vector<64x256xf32> to vector<64x256xbf16>
    %cst_11 = arith.constant dense<0.000000e+00> : vector<32x256xf32>
    %26 = tpu.matmul %23, %25, %cst_11 {dimension_numbers = #tpu.dot_dimension_numbers<[1], [0], [0], [1], [0, 0, 1, 1], [], []>} : vector<32x64xbf16>, vector<64x256xbf16>, vector<32x256xf32> -> vector<32x256xf32>
    %c0_12 = arith.constant 0 : index
    %c0_13 = arith.constant 0 : index
    %27 = vector.load %arg6[%c0_12, %c0_13] : memref<1x256xf32, #tpu.memory_space<vmem>>, vector<1x256xf32>
    %28 = vector.broadcast %27 : vector<1x256xf32> to vector<32x256xf32>
    %29 = arith.addf %26, %28 : vector<32x256xf32>
    %c0_14 = arith.constant 0 : index
    %c0_15 = arith.constant 0 : index
    %30 = vector.load %arg7[%c0_14, %c0_15] : memref<32x256xf32, #tpu.memory_space<vmem>>, vector<32x256xf32>
    tpu.vector_store %arg7[%c0_14, %c0_15], %29 {strides = array<i32>} : memref<32x256xf32, #tpu.memory_space<vmem>>, vector<32x256xf32>,
    return
  }
  func.func @transform_0(%arg0: i32, %arg1: i32) -> (i32, i32) {
    %c0_i32 = arith.constant 0 : i32
    %c0_i32_0 = arith.constant 0 : i32
    return %arg0, %c0_i32 : i32, i32
  }
  func.func @transform_1(%arg0: i32, %arg1: i32) -> (i32, i32) {
    %c0_i32 = arith.constant 0 : i32
    %c0_i32_0 = arith.constant 0 : i32
    %c0_i32_1 = arith.constant 0 : i32
    return %c0_i32, %c0_i32_0 : i32, i32
  }
  func.func @transform_2(%arg0: i32, %arg1: i32) -> (i32, i32) {
    %c0_i32 = arith.constant 0 : i32
    %c0_i32_0 = arith.constant 0 : i32
    %c0_i32_1 = arith.constant 0 : i32
    return %c0_i32, %c0_i32_0 : i32, i32
  }
  func.func @transform_3(%arg0: i32, %arg1: i32) -> (i32, i32) {
    %c0_i32 = arith.constant 0 : i32
    %c0_i32_0 = arith.constant 0 : i32
    return %c0_i32, %arg1 : i32, i32
  }
  func.func @transform_4(%arg0: i32, %arg1: i32) -> (i32, i32) {
    %c0_i32 = arith.constant 0 : i32
    %c0_i32_0 = arith.constant 0 : i32
    return %c0_i32, %arg1 : i32, i32
  }
  func.func @transform_5(%arg0: i32, %arg1: i32) -> (i32, i32) {
    %c0_i32 = arith.constant 0 : i32
    return %arg0, %arg1 : i32, i32
  }
}

</mosaic_0001>

<llo_original>
// kernel: _lambda_.10
$region0: #{_lambda_.10}
  #allocation0 [shape = 'u32[]', space=smem, size = 0x4, offset = 0x4, fixed_abs, tag = 'smem constant byte address 0x4 - core index']
  #allocation1 [shape = 'u32[144,128]{1,0:T(1,128)}', space=vmem, size = 0x12000, scoped, tag = 'internal scratch']
  %s0 = inlined_call_operand.vmem [shape: f32[32,64], index: 0, kind: input, shape index: {}]
  %s1 = inlined_call_operand.vmem [shape: f32[1,64], index: 1, kind: input, shape index: {}]
  %s2 = inlined_call_operand.vmem [shape: f32[1,64], index: 2, kind: input, shape index: {}]
  %s3 = inlined_call_operand.hbm [shape: f32[64,256], index: 3, kind: input, shape index: {}]
  %s4 = inlined_call_operand.vmem [shape: f32[1,256], index: 4, kind: input, shape index: {}]
  %s5 = inlined_call_operand.vmem [shape: f32[32,256], index: 5, kind: output, shape index: {}]
  %s6 = sld [smem:[#allocation0]]
  $region34: #{_lambda_.10} parent=0
    _
  %s8 = ssub.s32 1, %s6
  %s9 = scalar_select 0, %s8, %s6
  $region1: #{_lambda_.10} parent=0
    #allocation2 [shape = 'u8[65536]{0}', space=vmem, size = 0x10000, scoped, tag = 'input window, operand 3, single buffered']
    #allocation3 [shape = 's32[1]{0}', space=sflag, size = 0x4, scoped, tag = 'scoped memory for _lambda_.10']
    %10 = vsyncpa [#allocation3], 0
    // Predicated region
    $region2: #{_lambda_.10} parent=1 // pred_check
      _
    $region3: #{_lambda_.10} parent=1 // pred_check_branch
      %12 = sbr.rel (0) target = $region5
    $region4: #{_lambda_.10} parent=1 // pred_region
      _
    $region5: #{_lambda_.10} parent=1 // pred_fallthru
      _
    // Predicated region
    $region6: #{_lambda_.10} parent=1 // pred_check
      _
    $region7: #{_lambda_.10} parent=1 // pred_check_branch
      %14 = sbr.rel (0) target = $region9
    $region8: #{_lambda_.10} parent=1 // pred_region
      _
    $region9: #{_lambda_.10} parent=1 // pred_fallthru
      _
    // Predicated region
    $region10: #{_lambda_.10} parent=1 // pred_check
      _
    $region11: #{_lambda_.10} parent=1 // pred_check_branch
      %16 = sbr.rel (0) target = $region13
    $region12: #{_lambda_.10} parent=1 // pred_region
      _
    $region13: #{_lambda_.10} parent=1 // pred_fallthru
      _
    // Predicated region
    $region14: #{_lambda_.10} parent=1 // pred_check
      _
    $region15: #{_lambda_.10} parent=1 // pred_check_branch
      %18 = sbr.rel (0) target = $region17
    $region16: #{_lambda_.10} parent=1 // pred_region
      %s20 = ssub.s32 2048, 2048
      %21 = vsyncadd [#allocation3], %s20
      %s22 = sshll.u32 [#allocation2], 4
      %s23 = int_to_ptr.vmem [resolvable:$true] %s22
      %28 = dma.hbm_to_vmem [thread:$0]  %s3, 2048, %s23, [#allocation3], 256, 256, 16
    $region17: #{_lambda_.10} parent=1 // pred_fallthru
      _
    // Predicated region
    $region18: #{_lambda_.10} parent=1 // pred_check
      _
    $region19: #{_lambda_.10} parent=1 // pred_check_branch
      %30 = sbr.rel (0) target = $region21
    $region20: #{_lambda_.10} parent=1 // pred_region
      _
    $region21: #{_lambda_.10} parent=1 // pred_fallthru
      _
    // Predicated region
    $region22: #{_lambda_.10} parent=1 // pred_check
      _
    $region23: #{_lambda_.10} parent=1 // pred_check_branch
      %32 = sbr.rel (0) target = $region25
    $region24: #{_lambda_.10} parent=1 // pred_region
      %33 = dma.done [#allocation3], 2048
    $region25: #{_lambda_.10} parent=1 // pred_fallthru
      _
    %v35 = vld [vmem:[%s0] sm:$0xff]
    %v36 = vld [vmem:[%s0 + $0x8] sm:$0xff]
    %v37 = vld [vmem:[%s0 + $0x10] sm:$0xff]
    %v38 = vld [vmem:[%s0 + $0x18] sm:$0xff]
    %vm39 = vcmask 523264
    %v40 = vsel %vm39, %v35, 0.0
    %41 = vadd.xlane.f32.xlu0 %v40
    %v42 = vpop.xlane.xlu0 %41
    %v43 = vsel %vm39, %v36, 0.0
    %44 = vadd.xlane.f32.xlu0 %v43
    %v45 = vpop.xlane.xlu0 %44
    %v46 = vsel %vm39, %v37, 0.0
    %47 = vadd.xlane.f32.xlu0 %v46
    %v48 = vpop.xlane.xlu0 %47
    %v49 = vsel %vm39, %v38, 0.0
    %50 = vadd.xlane.f32.xlu0 %v49
    %v51 = vpop.xlane.xlu0 %50
    %v52 = vrcp.pop 64.0
    %v53 = vmul.f32 %v42, %v52
    %v54 = vmul.f32 %v45, %v52
    %v55 = vmul.f32 %v48, %v52
    %v56 = vmul.f32 %v51, %v52
    %v57 = vsub.f32 %v35, %v53
    %v58 = vsub.f32 %v36, %v54
    %v59 = vsub.f32 %v37, %v55
    %v60 = vsub.f32 %v38, %v56
    %v61 = vmul.f32 %v57, %v57
    %v62 = vmul.f32 %v58, %v58
    %v63 = vmul.f32 %v59, %v59
    %v64 = vmul.f32 %v60, %v60
    %v65 = vsel %vm39, %v61, 0.0
    %66 = vadd.xlane.f32.xlu0 %v65
    %v67 = vpop.xlane.xlu0 %66
    %v68 = vsel %vm39, %v62, 0.0
    %69 = vadd.xlane.f32.xlu0 %v68
    %v70 = vpop.xlane.xlu0 %69
    %v71 = vsel %vm39, %v63, 0.0
    %72 = vadd.xlane.f32.xlu0 %v71
    %v73 = vpop.xlane.xlu0 %72
    %v74 = vsel %vm39, %v64, 0.0
    %75 = vadd.xlane.f32.xlu0 %v74
    %v76 = vpop.xlane.xlu0 %75
    %v77 = vmul.f32 %v67, %v52
    %v78 = vmul.f32 %v70, %v52
    %v79 = vmul.f32 %v73, %v52
    %v80 = vmul.f32 %v76, %v52
    %v81 = vadd.f32 %v77, 1e-05
    %v82 = vadd.f32 %v78, 1e-05
    %v83 = vadd.f32 %v79, 1e-05
    %v84 = vadd.f32 %v80, 1e-05
    %v85 = vrsqrt.pop %v81
    %v86 = vrsqrt.pop %v82
    %v87 = vrsqrt.pop %v83
    %v88 = vrsqrt.pop %v84
    %v89 = vmul.f32 %v57, %v85
    %v90 = vmul.f32 %v58, %v86
    %v91 = vmul.f32 %v59, %v87
    %v92 = vmul.f32 %v60, %v88
    %v93 = vld [vmem:[%s1] sm:$0x1]
    %v95 = vlaneseq
    %v96 = vshrl.u32 %v95, 7
    %v97 = vsub.s32 0, %v96
    %v98 = vrot.slane %v93, %v97
    %v100 = vmul.f32 %v89, %v98
    %v101 = vmul.f32 %v90, %v98
    %v102 = vmul.f32 %v91, %v98
    %v103 = vmul.f32 %v92, %v98
    %v104 = vld [vmem:[%s2] sm:$0x1]
    %v106 = vlaneseq
    %v107 = vshrl.u32 %v106, 7
    %v108 = vsub.s32 0, %v107
    %v109 = vrot.slane %v104, %v108
    %v111 = vadd.f32 %v100, %v109
    %v112 = vadd.f32 %v101, %v109
    %v113 = vadd.f32 %v102, %v109
    %v114 = vadd.f32 %v103, %v109
    %v115 = vpack.c.bf16 %v112, %v111
    %v116 = vpack.c.bf16 %v114, %v113
    %v117 = vld [vmem:[#allocation2] sm:$0xff]
    %v118 = vld [vmem:[#allocation2 + $0x8] sm:$0xff]
    %v119 = vld [vmem:[#allocation2 + $0x10] sm:$0xff]
    %v120 = vld [vmem:[#allocation2 + $0x18] sm:$0xff]
    %v121 = vld [vmem:[#allocation2 + $0x20] sm:$0xff]
    %v122 = vld [vmem:[#allocation2 + $0x28] sm:$0xff]
    %v123 = vld [vmem:[#allocation2 + $0x30] sm:$0xff]
    %v124 = vld [vmem:[#allocation2 + $0x38] sm:$0xff]
    %v125 = vld [vmem:[#allocation2 + $0x40] sm:$0xff]
    %v126 = vld [vmem:[#allocation2 + $0x48] sm:$0xff]
    %v127 = vld [vmem:[#allocation2 + $0x50] sm:$0xff]
    %v128 = vld [vmem:[#allocation2 + $0x58] sm:$0xff]
    %v129 = vld [vmem:[#allocation2 + $0x60] sm:$0xff]
    %v130 = vld [vmem:[#allocation2 + $0x68] sm:$0xff]
    %v131 = vld [vmem:[#allocation2 + $0x70] sm:$0xff]
    %v132 = vld [vmem:[#allocation2 + $0x78] sm:$0xff]
    %v133 = vpack.c.bf16 %v119, %v117
    %v134 = vpack.c.bf16 %v120, %v118
    %v135 = vpack.c.bf16 %v123, %v121
    %v136 = vpack.c.bf16 %v124, %v122
    %v137 = vpack.c.bf16 %v127, %v125
    %v138 = vpack.c.bf16 %v128, %v126
    %v139 = vpack.c.bf16 %v131, %v129
    %v140 = vpack.c.bf16 %v132, %v130
    %v141 = vld [vmem:[%s4] sm:$0x3]
    %v143 = vlaneseq
    %v144 = vshrl.u32 %v143, 7
    %v145 = vsub.s32 0, %v144
    %v146 = vrot.slane %v141, %v145
    %v147 = vlaneseq
    %v148 = vshrl.u32 %v147, 7
    %v149 = vsub.s32 1, %v148
    %v150 = vrot.slane %v141, %v149
    %v154 = vsel %vm39, %v115, 0
    %v157 = vsel %vm39, %v116, 0
    %159 = vmatprep.subr.bf16.mxu0 0
    %160 = vmatpush1.bf16.msra.mxu0 0
    %161 = vmatprep.subr.bf16.mxu0 0
    %162 = vmatpush1.bf16.msra.mxu0 0
    %163 = vmatprep.subr.bf16.mxu0 0
    %164 = vmatpush1.bf16.msra.mxu0 0
    %165 = vmatprep.subr.bf16.mxu0 0
    %166 = vmatpush1.bf16.msra.mxu0 0
    %167 = vmatprep.subr.bf16.mxu0 %v140
    %168 = vmatpush1.bf16.msra.mxu0 %v139
    %169 = vmatprep.subr.bf16.mxu0 %v138
    %170 = vmatpush1.bf16.msra.mxu0 %v137
    %171 = vmatprep.subr.bf16.mxu0 %v136
    %172 = vmatpush1.bf16.msra.mxu0 %v135
    %173 = vmatprep.subr.bf16.mxu0 %v134
    %174 = vmatpush1.bf16.msra.mxu0 %v133
    %175 = vmatprep.subr.bf16.mxu0 0
    %176 = vmatpush2.bf16.msra.mxu0 0
    %177 = vmatprep.subr.bf16.mxu0 0
    %178 = vmatpush2.bf16.msra.mxu0 0
    %179 = vmatprep.subr.bf16.mxu0 0
    %180 = vmatpush2.bf16.msra.mxu0 0
    %181 = vmatprep.subr.bf16.mxu0 0
    %182 = vmatpush2.bf16.msra.mxu0 0
    %183 = vmatprep.subr.bf16.mxu0 0
    %184 = vmatpush2.bf16.msra.mxu0 0
    %185 = vmatprep.subr.bf16.mxu0 0
    %186 = vmatpush2.bf16.msra.mxu0 0
    %187 = vmatprep.subr.bf16.mxu0 0
    %188 = vmatpush2.bf16.msra.mxu0 0
    %189 = vmatprep.subr.bf16.mxu0 0
    %190 = vmatpush2.bf16.msra.mxu0 0
    %191 = vmatprep.mubr.bf16.mxu0 0
    %192 = vmatmul.mubr.bf16.gmra.mxu0 %v154
    %v193 = vpop.f32.mrf.mxu0
    %v194 = vadd.f32 %v146, %v193
    %v195 = vpop.f32.mrf.mxu0
    %v196 = vadd.f32 %v150, %v195
    %v197 = vpop.f32.mrf.mxu0
    %v198 = vadd.f32 %v146, %v197
    %v199 = vpop.f32.mrf.mxu0
    %v200 = vadd.f32 %v150, %v199
    %201 = vmatprep.mubr.bf16.mxu0 0
    %202 = vmatmul.mubr.bf16.gmra.mxu0 %v157
    %v203 = vpop.f32.mrf.mxu0
    %v204 = vadd.f32 %v146, %v203
    %v205 = vpop.f32.mrf.mxu0
    %v206 = vadd.f32 %v150, %v205
    %v207 = vpop.f32.mrf.mxu0
    %v208 = vadd.f32 %v146, %v207
    %v209 = vpop.f32.mrf.mxu0
    %v210 = vadd.f32 %v150, %v209
    %211 = vdwg.mxu0
    %212 = vst [vmem:[%s5] sm:$0xff] %v194
    %213 = vst [vmem:[%s5 + $0x8] sm:$0xff] %v196
    %214 = vst [vmem:[%s5 + $0x10] sm:$0xff] %v198
    %215 = vst [vmem:[%s5 + $0x18] sm:$0xff] %v200
    %216 = vst [vmem:[%s5 + $0x20] sm:$0xff] %v204
    %217 = vst [vmem:[%s5 + $0x28] sm:$0xff] %v206
    %218 = vst [vmem:[%s5 + $0x30] sm:$0xff] %v208
    %219 = vst [vmem:[%s5 + $0x38] sm:$0xff] %v210
    // Predicated region
    $region26: #{_lambda_.10} parent=1 // pred_check
      _
    $region27: #{_lambda_.10} parent=1 // pred_check_branch
      %221 = sbr.rel (0) target = $region29
    $region28: #{_lambda_.10} parent=1 // pred_region
      _
    $region29: #{_lambda_.10} parent=1 // pred_fallthru
      _
    // Predicated region
    $region30: #{_lambda_.10} parent=1 // pred_check
      _
    $region31: #{_lambda_.10} parent=1 // pred_check_branch
      %223 = sbr.rel (0) target = $region33
    $region32: #{_lambda_.10} parent=1 // pred_region
      _
    $region33: #{_lambda_.10} parent=1 // pred_fallthru
      _
    %224 = vsyncpa [#allocation3], 1

// kernel: _lambda_.12
$region0: #{_lambda_.12}
  #allocation0 [shape = 'u32[]', space=smem, size = 0x4, offset = 0x4, fixed_abs, tag = 'smem constant byte address 0x4 - core index']
  #allocation1 [shape = 'u32[144,128]{1,0:T(1,128)}', space=vmem, size = 0x12000, scoped, tag = 'internal scratch']
  #allocation2 [shape = 'f32[32,128]{1,0:T(8,128)}', space=vmem, size = 0x4000, scoped, tag = 'scratch operand']
  %s0 = inlined_call_operand.vmem [shape: f32[32,64], index: 0, kind: input, shape index: {}]
  %s1 = inlined_call_operand.vmem [shape: f32[64,128], index: 1, kind: input, shape index: {}]
  %s2 = inlined_call_operand.vmem [shape: f32[1,128], index: 2, kind: input, shape index: {}]
  %s3 = inlined_call_operand.vmem [shape: f32[32,128], index: 3, kind: output, shape index: {}]
  %s4 = sld [smem:[#allocation0]]
  $region30: #{_lambda_.12} parent=0
    _
  %s6 = ssub.s32 1, %s4
  %s7 = scalar_select 0, %s6, %s4
  // Predicated region
  $region2: #{_lambda_.12} parent=0 // pred_check
    _
  $region3: #{_lambda_.12} parent=0 // pred_check_branch
    %9 = sbr.rel (0) target = $region5
  $region4: #{_lambda_.12} parent=0 // pred_region
    _
  $region5: #{_lambda_.12} parent=0 // pred_fallthru
    _
  // Predicated region
  $region6: #{_lambda_.12} parent=0 // pred_check
    _
  $region7: #{_lambda_.12} parent=0 // pred_check_branch
    %11 = sbr.rel (0) target = $region9
  $region8: #{_lambda_.12} parent=0 // pred_region
    _
  $region9: #{_lambda_.12} parent=0 // pred_fallthru
    _
  // Predicated region
  $region10: #{_lambda_.12} parent=0 // pred_check
    _
  $region11: #{_lambda_.12} parent=0 // pred_check_branch
    %13 = sbr.rel (0) target = $region13
  $region12: #{_lambda_.12} parent=0 // pred_region
    _
  $region13: #{_lambda_.12} parent=0 // pred_fallthru
    _
  %p15 = scmp.eq.s32.totalorder 0, 0
  // Predicated region
  $region14: #{_lambda_.12} parent=0 // pred_check
    %p16 = pneg %p15
  $region15: #{_lambda_.12} parent=0 // pred_check_branch
    %18 = sbr.rel (%p16) target = $region17
  $region16: #{_lambda_.12} parent=0 // pred_region
    %19 = vst [vmem:[#allocation2] sm:$0xff] 0.0
    %20 = vst [vmem:[#allocation2 + $0x8] sm:$0xff] 0.0
    %21 = vst [vmem:[#allocation2 + $0x10] sm:$0xff] 0.0
    %22 = vst [vmem:[#allocation2 + $0x18] sm:$0xff] 0.0
  $region17: #{_lambda_.12} parent=0 // pred_fallthru
    _
  %v23 = vld [vmem:[#allocation2] sm:$0xff]
  %v24 = vld [vmem:[#allocation2 + $0x8] sm:$0xff]
  %v25 = vld [vmem:[#allocation2 + $0x10] sm:$0xff]
  %v26 = vld [vmem:[#allocation2 + $0x18] sm:$0xff]
  %v27 = vld [vmem:[%s0] sm:$0xff]
  %v28 = vld [vmem:[%s0 + $0x8] sm:$0xff]
  %v29 = vld [vmem:[%s0 + $0x10] sm:$0xff]
  %v30 = vld [vmem:[%s0 + $0x18] sm:$0xff]
  %v31 = vpack.c.bf16 %v28, %v27
  %v32 = vpack.c.bf16 %v30, %v29
  %v33 = vld [vmem:[%s1] sm:$0xff]
  %v34 = vld [vmem:[%s1 + $0x8] sm:$0xff]
  %v35 = vld [vmem:[%s1 + $0x10] sm:$0xff]
  %v36 = vld [vmem:[%s1 + $0x18] sm:$0xff]
  %v37 = vld [vmem:[%s1 + $0x20] sm:$0xff]
  %v38 = vld [vmem:[%s1 + $0x28] sm:$0xff]
  %v39 = vld [vmem:[%s1 + $0x30] sm:$0xff]
  %v40 = vld [vmem:[%s1 + $0x38] sm:$0xff]
  %v41 = vpack.c.bf16 %v34, %v33
  %v42 = vpack.c.bf16 %v36, %v35
  %v43 = vpack.c.bf16 %v38, %v37
  %v44 = vpack.c.bf16 %v40, %v39
  %vm45 = vcmask 523264
  %v47 = vsel %vm45, %v31, 0
  %v50 = vsel %vm45, %v32, 0
  %52 = vmatprep.subr.bf16.mxu0 0
  %53 = vmatpush1.bf16.msra.mxu0 0
  %54 = vmatprep.subr.bf16.mxu0 0
  %55 = vmatpush1.bf16.msra.mxu0 0
  %56 = vmatprep.subr.bf16.mxu0 0
  %57 = vmatpush1.bf16.msra.mxu0 0
  %58 = vmatprep.subr.bf16.mxu0 0
  %59 = vmatpush1.bf16.msra.mxu0 0
  %60 = vmatprep.subr.bf16.mxu0 0
  %61 = vmatpush1.bf16.msra.mxu0 %v44
  %62 = vmatprep.subr.bf16.mxu0 0
  %63 = vmatpush1.bf16.msra.mxu0 %v43
  %64 = vmatprep.subr.bf16.mxu0 0
  %65 = vmatpush1.bf16.msra.mxu0 %v42
  %66 = vmatprep.subr.bf16.mxu0 0
  %67 = vmatpush1.bf16.msra.mxu0 %v41
  %68 = vmatprep.subr.bf16.mxu0 0
  %69 = vmatpush2.bf16.msra.mxu0 0
  %70 = vmatprep.subr.bf16.mxu0 0
  %71 = vmatpush2.bf16.msra.mxu0 0
  %72 = vmatprep.subr.bf16.mxu0 0
  %73 = vmatpush2.bf16.msra.mxu0 0
  %74 = vmatprep.subr.bf16.mxu0 0
  %75 = vmatpush2.bf16.msra.mxu0 0
  %76 = vmatprep.subr.bf16.mxu0 0
  %77 = vmatpush2.bf16.msra.mxu0 0
  %78 = vmatprep.subr.bf16.mxu0 0
  %79 = vmatpush2.bf16.msra.mxu0 0
  %80 = vmatprep.subr.bf16.mxu0 0
  %81 = vmatpush2.bf16.msra.mxu0 0
  %82 = vmatprep.subr.bf16.mxu0 0
  %83 = vmatpush2.bf16.msra.mxu0 0
  %84 = vmatprep.mubr.bf16.mxu0 0
  %85 = vmatmul.mubr.bf16.gmra.mxu0 %v47
  %v86 = vpop.f32.mrf.mxu0
  %v87 = vadd.f32 0.0, %v86
  %v88 = vpop.f32.mrf.mxu0
  %v89 = vpop.f32.mrf.mxu0
  %v90 = vadd.f32 0.0, %v89
  %v91 = vpop.f32.mrf.mxu0
  %92 = vmatprep.mubr.bf16.mxu0 0
  %93 = vmatmul.mubr.bf16.gmra.mxu0 %v50
  %v94 = vpop.f32.mrf.mxu0
  %v95 = vadd.f32 0.0, %v94
  %v96 = vpop.f32.mrf.mxu0
  %v97 = vpop.f32.mrf.mxu0
  %v98 = vadd.f32 0.0, %v97
  %v99 = vpop.f32.mrf.mxu0
  %100 = vdwg.mxu0
  %v101 = vadd.f32 %v23, %v87
  %v102 = vadd.f32 %v24, %v90
  %v103 = vadd.f32 %v25, %v95
  %v104 = vadd.f32 %v26, %v98
  %105 = vst [vmem:[#allocation2] sm:$0xff] %v101
  %106 = vst [vmem:[#allocation2 + $0x8] sm:$0xff] %v102
  %107 = vst [vmem:[#allocation2 + $0x10] sm:$0xff] %v103
  %108 = vst [vmem:[#allocation2 + $0x18] sm:$0xff] %v104
  // Predicated region
  $region18: #{_lambda_.12} parent=0 // pred_check
    %p109 = pneg %p15
  $region19: #{_lambda_.12} parent=0 // pred_check_branch
    %111 = sbr.rel (%p109) target = $region21
  $region20: #{_lambda_.12} parent=0 // pred_region
    %v112 = vld [vmem:[#allocation2] sm:$0xff]
    %v113 = vld [vmem:[#allocation2 + $0x8] sm:$0xff]
    %v114 = vld [vmem:[#allocation2 + $0x10] sm:$0xff]
    %v115 = vld [vmem:[#allocation2 + $0x18] sm:$0xff]
    %v116 = vld [vmem:[%s2] sm:$0x1]
    %v118 = vlaneseq
    %v119 = vshrl.u32 %v118, 7
    %v120 = vsub.s32 0, %v119
    %v121 = vrot.slane %v116, %v120
    %v123 = vadd.f32 %v112, %v121
    %v124 = vadd.f32 %v113, %v121
    %v125 = vadd.f32 %v114, %v121
    %v126 = vadd.f32 %v115, %v121
    %127 = vst [vmem:[%s3] sm:$0xff] %v123
    %128 = vst [vmem:[%s3 + $0x8] sm:$0xff] %v124
    %129 = vst [vmem:[%s3 + $0x10] sm:$0xff] %v125
    %130 = vst [vmem:[%s3 + $0x18] sm:$0xff] %v126
  $region21: #{_lambda_.12} parent=0 // pred_fallthru
    _
  // Predicated region
  $region22: #{_lambda_.12} parent=0 // pred_check
    _
  $region23: #{_lambda_.12} parent=0 // pred_check_branch
    %132 = sbr.rel (0) target = $region25
  $region24: #{_lambda_.12} parent=0 // pred_region
    _
  $region25: #{_lambda_.12} parent=0 // pred_fallthru
    _
  // Predicated region
  $region26: #{_lambda_.12} parent=0 // pred_check
    _
  $region27: #{_lambda_.12} parent=0 // pred_check_branch
    %134 = sbr.rel (0) target = $region29
  $region28: #{_lambda_.12} parent=0 // pred_region
    _
  $region29: #{_lambda_.12} parent=0 // pred_fallthru
    _

// kernel: _lambda_.13
$region0: #{_lambda_.13}
  #allocation0 [shape = 'u32[]', space=smem, size = 0x4, offset = 0x4, fixed_abs, tag = 'smem constant byte address 0x4 - core index']
  #allocation1 [shape = 'u32[144,128]{1,0:T(1,128)}', space=vmem, size = 0x12000, scoped, tag = 'internal scratch']
  %s0 = inlined_call_operand.vmem [shape: f32[32,64], index: 0, kind: input, shape index: {}]
  %s1 = inlined_call_operand.vmem [shape: f32[1,64], index: 1, kind: input, shape index: {}]
  %s2 = inlined_call_operand.vmem [shape: f32[1,64], index: 2, kind: input, shape index: {}]
  %s3 = inlined_call_operand.vmem [shape: f32[64,256], index: 3, kind: input, shape index: {}]
  %s4 = inlined_call_operand.vmem [shape: f32[1,256], index: 4, kind: input, shape index: {}]
  %s5 = inlined_call_operand.vmem [shape: f32[32,256], index: 5, kind: output, shape index: {}]
  %s6 = sld [smem:[#allocation0]]
  $region30: #{_lambda_.13} parent=0
    _
  %s8 = ssub.s32 1, %s6
  %s9 = scalar_select 0, %s8, %s6
  // Predicated region
  $region2: #{_lambda_.13} parent=0 // pred_check
    _
  $region3: #{_lambda_.13} parent=0 // pred_check_branch
    %11 = sbr.rel (0) target = $region5
  $region4: #{_lambda_.13} parent=0 // pred_region
    _
  $region5: #{_lambda_.13} parent=0 // pred_fallthru
    _
  // Predicated region
  $region6: #{_lambda_.13} parent=0 // pred_check
    _
  $region7: #{_lambda_.13} parent=0 // pred_check_branch
    %13 = sbr.rel (0) target = $region9
  $region8: #{_lambda_.13} parent=0 // pred_region
    _
  $region9: #{_lambda_.13} parent=0 // pred_fallthru
    _
  // Predicated region
  $region10: #{_lambda_.13} parent=0 // pred_check
    _
  $region11: #{_lambda_.13} parent=0 // pred_check_branch
    %15 = sbr.rel (0) target = $region13
  $region12: #{_lambda_.13} parent=0 // pred_region
    _
  $region13: #{_lambda_.13} parent=0 // pred_fallthru
    _
  // Predicated region
  $region14: #{_lambda_.13} parent=0 // pred_check
    _
  $region15: #{_lambda_.13} parent=0 // pred_check_branch
    %17 = sbr.rel (0) target = $region17
  $region16: #{_lambda_.13} parent=0 // pred_region
    _
  $region17: #{_lambda_.13} parent=0 // pred_fallthru
    _
  // Predicated region
  $region18: #{_lambda_.13} parent=0 // pred_check
    _
  $region19: #{_lambda_.13} parent=0 // pred_check_branch
    %19 = sbr.rel (0) target = $region21
  $region20: #{_lambda_.13} parent=0 // pred_region
    _
  $region21: #{_lambda_.13} parent=0 // pred_fallthru
    _
  %v21 = vld [vmem:[%s0] sm:$0xff]
  %v22 = vld [vmem:[%s0 + $0x8] sm:$0xff]
  %v23 = vld [vmem:[%s0 + $0x10] sm:$0xff]
  %v24 = vld [vmem:[%s0 + $0x18] sm:$0xff]
  %vm25 = vcmask 523264
  %v26 = vsel %vm25, %v21, 0.0
  %27 = vadd.xlane.f32.xlu0 %v26
  %v28 = vpop.xlane.xlu0 %27
  %v29 = vsel %vm25, %v22, 0.0
  %30 = vadd.xlane.f32.xlu0 %v29
  %v31 = vpop.xlane.xlu0 %30
  %v32 = vsel %vm25, %v23, 0.0
  %33 = vadd.xlane.f32.xlu0 %v32
  %v34 = vpop.xlane.xlu0 %33
  %v35 = vsel %vm25, %v24, 0.0
  %36 = vadd.xlane.f32.xlu0 %v35
  %v37 = vpop.xlane.xlu0 %36
  %v38 = vrcp.pop 64.0
  %v39 = vmul.f32 %v28, %v38
  %v40 = vmul.f32 %v31, %v38
  %v41 = vmul.f32 %v34, %v38
  %v42 = vmul.f32 %v37, %v38
  %v43 = vsub.f32 %v21, %v39
  %v44 = vsub.f32 %v22, %v40
  %v45 = vsub.f32 %v23, %v41
  %v46 = vsub.f32 %v24, %v42
  %v47 = vmul.f32 %v43, %v43
  %v48 = vmul.f32 %v44, %v44
  %v49 = vmul.f32 %v45, %v45
  %v50 = vmul.f32 %v46, %v46
  %v51 = vsel %vm25, %v47, 0.0
  %52 = vadd.xlane.f32.xlu0 %v51
  %v53 = vpop.xlane.xlu0 %52
  %v54 = vsel %vm25, %v48, 0.0
  %55 = vadd.xlane.f32.xlu0 %v54
  %v56 = vpop.xlane.xlu0 %55
  %v57 = vsel %vm25, %v49, 0.0
  %58 = vadd.xlane.f32.xlu0 %v57
  %v59 = vpop.xlane.xlu0 %58
  %v60 = vsel %vm25, %v50, 0.0
  %61 = vadd.xlane.f32.xlu0 %v60
  %v62 = vpop.xlane.xlu0 %61
  %v63 = vmul.f32 %v53, %v38
  %v64 = vmul.f32 %v56, %v38
  %v65 = vmul.f32 %v59, %v38
  %v66 = vmul.f32 %v62, %v38
  %v67 = vadd.f32 %v63, 1e-05
  %v68 = vadd.f32 %v64, 1e-05
  %v69 = vadd.f32 %v65, 1e-05
  %v70 = vadd.f32 %v66, 1e-05
  %v71 = vrsqrt.pop %v67
  %v72 = vrsqrt.pop %v68
  %v73 = vrsqrt.pop %v69
  %v74 = vrsqrt.pop %v70
  %v75 = vmul.f32 %v43, %v71
  %v76 = vmul.f32 %v44, %v72
  %v77 = vmul.f32 %v45, %v73
  %v78 = vmul.f32 %v46, %v74
  %v79 = vld [vmem:[%s1] sm:$0x1]
  %v81 = vlaneseq
  %v82 = vshrl.u32 %v81, 7
  %v83 = vsub.s32 0, %v82
  %v84 = vrot.slane %v79, %v83
  %v86 = vmul.f32 %v75, %v84
  %v87 = vmul.f32 %v76, %v84
  %v88 = vmul.f32 %v77, %v84
  %v89 = vmul.f32 %v78, %v84
  %v90 = vld [vmem:[%s2] sm:$0x1]
  %v92 = vlaneseq
  %v93 = vshrl.u32 %v92, 7
  %v94 = vsub.s32 0, %v93
  %v95 = vrot.slane %v90, %v94
  %v97 = vadd.f32 %v86, %v95
  %v98 = vadd.f32 %v87, %v95
  %v99 = vadd.f32 %v88, %v95
  %v100 = vadd.f32 %v89, %v95
  %v101 = vpack.c.bf16 %v98, %v97
  %v102 = vpack.c.bf16 %v100, %v99
  %v103 = vld [vmem:[%s3] sm:$0xff]
  %v104 = vld [vmem:[%s3 + $0x8] sm:$0xff]
  %v105 = vld [vmem:[%s3 + $0x10] sm:$0xff]
  %v106 = vld [vmem:[%s3 + $0x18] sm:$0xff]
  %v107 = vld [vmem:[%s3 + $0x20] sm:$0xff]
  %v108 = vld [vmem:[%s3 + $0x28] sm:$0xff]
  %v109 = vld [vmem:[%s3 + $0x30] sm:$0xff]
  %v110 = vld [vmem:[%s3 + $0x38] sm:$0xff]
  %v111 = vld [vmem:[%s3 + $0x40] sm:$0xff]
  %v112 = vld [vmem:[%s3 + $0x48] sm:$0xff]
  %v113 = vld [vmem:[%s3 + $0x50] sm:$0xff]
  %v114 = vld [vmem:[%s3 + $0x58] sm:$0xff]
  %v115 = vld [vmem:[%s3 + $0x60] sm:$0xff]
  %v116 = vld [vmem:[%s3 + $0x68] sm:$0xff]
  %v117 = vld [vmem:[%s3 + $0x70] sm:$0xff]
  %v118 = vld [vmem:[%s3 + $0x78] sm:$0xff]
  %v119 = vpack.c.bf16 %v105, %v103
  %v120 = vpack.c.bf16 %v106, %v104
  %v121 = vpack.c.bf16 %v109, %v107
  %v122 = vpack.c.bf16 %v110, %v108
  %v123 = vpack.c.bf16 %v113, %v111
  %v124 = vpack.c.bf16 %v114, %v112
  %v125 = vpack.c.bf16 %v117, %v115
  %v126 = vpack.c.bf16 %v118, %v116
  %v127 = vld [vmem:[%s4] sm:$0x3]
  %v129 = vlaneseq
  %v130 = vshrl.u32 %v129, 7
  %v131 = vsub.s32 0, %v130
  %v132 = vrot.slane %v127, %v131
  %v133 = vlaneseq
  %v134 = vshrl.u32 %v133, 7
  %v135 = vsub.s32 1, %v134
  %v136 = vrot.slane %v127, %v135
  %v140 = vsel %vm25, %v101, 0
  %v143 = vsel %vm25, %v102, 0
  %145 = vmatprep.subr.bf16.mxu0 0
  %146 = vmatpush1.bf16.msra.mxu0 0
  %147 = vmatprep.subr.bf16.mxu0 0
  %148 = vmatpush1.bf16.msra.mxu0 0
  %149 = vmatprep.subr.bf16.mxu0 0
  %150 = vmatpush1.bf16.msra.mxu0 0
  %151 = vmatprep.subr.bf16.mxu0 0
  %152 = vmatpush1.bf16.msra.mxu0 0
  %153 = vmatprep.subr.bf16.mxu0 %v126
  %154 = vmatpush1.bf16.msra.mxu0 %v125
  %155 = vmatprep.subr.bf16.mxu0 %v124
  %156 = vmatpush1.bf16.msra.mxu0 %v123
  %157 = vmatprep.subr.bf16.mxu0 %v122
  %158 = vmatpush1.bf16.msra.mxu0 %v121
  %159 = vmatprep.subr.bf16.mxu0 %v120
  %160 = vmatpush1.bf16.msra.mxu0 %v119
  %161 = vmatprep.subr.bf16.mxu0 0
  %162 = vmatpush2.bf16.msra.mxu0 0
  %163 = vmatprep.subr.bf16.mxu0 0
  %164 = vmatpush2.bf16.msra.mxu0 0
  %165 = vmatprep.subr.bf16.mxu0 0
  %166 = vmatpush2.bf16.msra.mxu0 0
  %167 = vmatprep.subr.bf16.mxu0 0
  %168 = vmatpush2.bf16.msra.mxu0 0
  %169 = vmatprep.subr.bf16.mxu0 0
  %170 = vmatpush2.bf16.msra.mxu0 0
  %171 = vmatprep.subr.bf16.mxu0 0
  %172 = vmatpush2.bf16.msra.mxu0 0
  %173 = vmatprep.subr.bf16.mxu0 0
  %174 = vmatpush2.bf16.msra.mxu0 0
  %175 = vmatprep.subr.bf16.mxu0 0
  %176 = vmatpush2.bf16.msra.mxu0 0
  %177 = vmatprep.mubr.bf16.mxu0 0
  %178 = vmatmul.mubr.bf16.gmra.mxu0 %v140
  %v179 = vpop.f32.mrf.mxu0
  %v180 = vadd.f32 %v132, %v179
  %v181 = vpop.f32.mrf.mxu0
  %v182 = vadd.f32 %v136, %v181
  %v183 = vpop.f32.mrf.mxu0
  %v184 = vadd.f32 %v132, %v183
  %v185 = vpop.f32.mrf.mxu0
  %v186 = vadd.f32 %v136, %v185
  %187 = vmatprep.mubr.bf16.mxu0 0
  %188 = vmatmul.mubr.bf16.gmra.mxu0 %v143
  %v189 = vpop.f32.mrf.mxu0
  %v190 = vadd.f32 %v132, %v189
  %v191 = vpop.f32.mrf.mxu0
  %v192 = vadd.f32 %v136, %v191
  %v193 = vpop.f32.mrf.mxu0
  %v194 = vadd.f32 %v132, %v193
  %v195 = vpop.f32.mrf.mxu0
  %v196 = vadd.f32 %v136, %v195
  %197 = vdwg.mxu0
  %v198 = vmul.f32 %v180, -1.702
  %v199 = vmul.f32 %v182, -1.702
  %v200 = vmul.f32 %v184, -1.702
  %v201 = vmul.f32 %v186, -1.702
  %v202 = vmul.f32 %v190, -1.702
  %v203 = vmul.f32 %v192, -1.702
  %v204 = vmul.f32 %v194, -1.702
  %v205 = vmul.f32 %v196, -1.702
  %v206 = vmul.f32 %v198, 1.442695
  %v207 = vpow.pop %v206
  %v208 = vmul.f32 %v199, 1.442695
  %v209 = vpow.pop %v208
  %v210 = vmul.f32 %v200, 1.442695
  %v211 = vpow.pop %v210
  %v212 = vmul.f32 %v201, 1.442695
  %v213 = vpow.pop %v212
  %v214 = vmul.f32 %v202, 1.442695
  %v215 = vpow.pop %v214
  %v216 = vmul.f32 %v203, 1.442695
  %v217 = vpow.pop %v216
  %v218 = vmul.f32 %v204, 1.442695
  %v219 = vpow.pop %v218
  %v220 = vmul.f32 %v205, 1.442695
  %v221 = vpow.pop %v220
  %v222 = vadd.f32 %v207, 1.0
  %v223 = vadd.f32 %v209, 1.0
  %v224 = vadd.f32 %v211, 1.0
  %v225 = vadd.f32 %v213, 1.0
  %v226 = vadd.f32 %v215, 1.0
  %v227 = vadd.f32 %v217, 1.0
  %v228 = vadd.f32 %v219, 1.0
  %v229 = vadd.f32 %v221, 1.0
  %v230 = vrcp.pop %v222
  %v231 = vrcp.pop %v223
  %v232 = vrcp.pop %v224
  %v233 = vrcp.pop %v225
  %v234 = vrcp.pop %v226
  %v235 = vrcp.pop %v227
  %v236 = vrcp.pop %v228
  %v237 = vrcp.pop %v229
  %v238 = vmul.f32 %v180, %v230
  %v239 = vmul.f32 %v182, %v231
  %v240 = vmul.f32 %v184, %v232
  %v241 = vmul.f32 %v186, %v233
  %v242 = vmul.f32 %v190, %v234
  %v243 = vmul.f32 %v192, %v235
  %v244 = vmul.f32 %v194, %v236
  %v245 = vmul.f32 %v196, %v237
  %246 = vst [vmem:[%s5] sm:$0xff] %v238
  %247 = vst [vmem:[%s5 + $0x8] sm:$0xff] %v239
  %248 = vst [vmem:[%s5 + $0x10] sm:$0xff] %v240
  %249 = vst [vmem:[%s5 + $0x18] sm:$0xff] %v241
  %250 = vst [vmem:[%s5 + $0x20] sm:$0xff] %v242
  %251 = vst [vmem:[%s5 + $0x28] sm:$0xff] %v243
  %252 = vst [vmem:[%s5 + $0x30] sm:$0xff] %v244
  %253 = vst [vmem:[%s5 + $0x38] sm:$0xff] %v245
  // Predicated region
  $region22: #{_lambda_.13} parent=0 // pred_check
    _
  $region23: #{_lambda_.13} parent=0 // pred_check_branch
    %255 = sbr.rel (0) target = $region25
  $region24: #{_lambda_.13} parent=0 // pred_region
    _
  $region25: #{_lambda_.13} parent=0 // pred_fallthru
    _
  // Predicated region
  $region26: #{_lambda_.13} parent=0 // pred_check
    _
  $region27: #{_lambda_.13} parent=0 // pred_check_branch
    %257 = sbr.rel (0) target = $region29
  $region28: #{_lambda_.13} parent=0 // pred_region
    _
  $region29: #{_lambda_.13} parent=0 // pred_fallthru
    _

// kernel: _lambda_.14
$region0: #{_lambda_.14}
  #allocation0 [shape = 'u32[]', space=smem, size = 0x4, offset = 0x4, fixed_abs, tag = 'smem constant byte address 0x4 - core index']
  #allocation1 [shape = 'u32[144,128]{1,0:T(1,128)}', space=vmem, size = 0x12000, scoped, tag = 'internal scratch']
  #allocation2 [shape = 'f32[32,128]{1,0:T(8,128)}', space=vmem, size = 0x4000, scoped, tag = 'scratch operand']
  %s0 = inlined_call_operand.vmem [shape: f32[32,256], index: 0, kind: input, shape index: {}]
  %s1 = inlined_call_operand.vmem [shape: f32[256,128], index: 1, kind: input, shape index: {}]
  %s2 = inlined_call_operand.vmem [shape: f32[1,128], index: 2, kind: input, shape index: {}]
  %s3 = inlined_call_operand.vmem [shape: f32[32,128], index: 3, kind: output, shape index: {}]
  %s4 = sld [smem:[#allocation0]]
  $region30: #{_lambda_.14} parent=0
    _
  %s6 = ssub.s32 1, %s4
  %s7 = scalar_select 0, %s6, %s4
  // Predicated region
  $region2: #{_lambda_.14} parent=0 // pred_check
    _
  $region3: #{_lambda_.14} parent=0 // pred_check_branch
    %9 = sbr.rel (0) target = $region5
  $region4: #{_lambda_.14} parent=0 // pred_region
    _
  $region5: #{_lambda_.14} parent=0 // pred_fallthru
    _
  // Predicated region
  $region6: #{_lambda_.14} parent=0 // pred_check
    _
  $region7: #{_lambda_.14} parent=0 // pred_check_branch
    %11 = sbr.rel (0) target = $region9
  $region8: #{_lambda_.14} parent=0 // pred_region
    _
  $region9: #{_lambda_.14} parent=0 // pred_fallthru
    _
  // Predicated region
  $region10: #{_lambda_.14} parent=0 // pred_check
    _
  $region11: #{_lambda_.14} parent=0 // pred_check_branch
    %13 = sbr.rel (0) target = $region13
  $region12: #{_lambda_.14} parent=0 // pred_region
    _
  $region13: #{_lambda_.14} parent=0 // pred_fallthru
    _
  %p15 = scmp.eq.s32.totalorder 0, 0
  // Predicated region
  $region14: #{_lambda_.14} parent=0 // pred_check
    %p16 = pneg %p15
  $region15: #{_lambda_.14} parent=0 // pred_check_branch
    %18 = sbr.rel (%p16) target = $region17
  $region16: #{_lambda_.14} parent=0 // pred_region
    %19 = vst [vmem:[#allocation2] sm:$0xff] 0.0
    %20 = vst [vmem:[#allocation2 + $0x8] sm:$0xff] 0.0
    %21 = vst [vmem:[#allocation2 + $0x10] sm:$0xff] 0.0
    %22 = vst [vmem:[#allocation2 + $0x18] sm:$0xff] 0.0
  $region17: #{_lambda_.14} parent=0 // pred_fallthru
    _
  %v23 = vld [vmem:[#allocation2] sm:$0xff]
  %v24 = vld [vmem:[#allocation2 + $0x8] sm:$0xff]
  %v25 = vld [vmem:[#allocation2 + $0x10] sm:$0xff]
  %v26 = vld [vmem:[#allocation2 + $0x18] sm:$0xff]
  %v27 = vld [vmem:[%s0] sm:$0xff]
  %v28 = vld [vmem:[%s0 + $0x8] sm:$0xff]
  %v29 = vld [vmem:[%s0 + $0x10] sm:$0xff]
  %v30 = vld [vmem:[%s0 + $0x18] sm:$0xff]
  %v31 = vld [vmem:[%s0 + $0x20] sm:$0xff]
  %v32 = vld [vmem:[%s0 + $0x28] sm:$0xff]
  %v33 = vld [vmem:[%s0 + $0x30] sm:$0xff]
  %v34 = vld [vmem:[%s0 + $0x38] sm:$0xff]
  %v35 = vpack.c.bf16 %v29, %v27
  %v36 = vpack.c.bf16 %v30, %v28
  %v37 = vpack.c.bf16 %v33, %v31
  %v38 = vpack.c.bf16 %v34, %v32
  %v39 = vld [vmem:[%s1] sm:$0xff]
  %v40 = vld [vmem:[%s1 + $0x8] sm:$0xff]
  %v41 = vld [vmem:[%s1 + $0x10] sm:$0xff]
  %v42 = vld [vmem:[%s1 + $0x18] sm:$0xff]
  %v43 = vld [vmem:[%s1 + $0x20] sm:$0xff]
  %v44 = vld [vmem:[%s1 + $0x28] sm:$0xff]
  %v45 = vld [vmem:[%s1 + $0x30] sm:$0xff]
  %v46 = vld [vmem:[%s1 + $0x38] sm:$0xff]
  %v47 = vld [vmem:[%s1 + $0x40] sm:$0xff]
  %v48 = vld [vmem:[%s1 + $0x48] sm:$0xff]
  %v49 = vld [vmem:[%s1 + $0x50] sm:$0xff]
  %v50 = vld [vmem:[%s1 + $0x58] sm:$0xff]
  %v51 = vld [vmem:[%s1 + $0x60] sm:$0xff]
  %v52 = vld [vmem:[%s1 + $0x68] sm:$0xff]
  %v53 = vld [vmem:[%s1 + $0x70] sm:$0xff]
  %v54 = vld [vmem:[%s1 + $0x78] sm:$0xff]
  %v55 = vld [vmem:[%s1 + $0x80] sm:$0xff]
  %v56 = vld [vmem:[%s1 + $0x88] sm:$0xff]
  %v57 = vld [vmem:[%s1 + $0x90] sm:$0xff]
  %v58 = vld [vmem:[%s1 + $0x98] sm:$0xff]
  %v59 = vld [vmem:[%s1 + $0xa0] sm:$0xff]
  %v60 = vld [vmem:[%s1 + $0xa8] sm:$0xff]
  %v61 = vld [vmem:[%s1 + $0xb0] sm:$0xff]
  %v62 = vld [vmem:[%s1 + $0xb8] sm:$0xff]
  %v63 = vld [vmem:[%s1 + $0xc0] sm:$0xff]
  %v64 = vld [vmem:[%s1 + $0xc8] sm:$0xff]
  %v65 = vld [vmem:[%s1 + $0xd0] sm:$0xff]
  %v66 = vld [vmem:[%s1 + $0xd8] sm:$0xff]
  %v67 = vld [vmem:[%s1 + $0xe0] sm:$0xff]
  %v68 = vld [vmem:[%s1 + $0xe8] sm:$0xff]
  %v69 = vld [vmem:[%s1 + $0xf0] sm:$0xff]
  %v70 = vld [vmem:[%s1 + $0xf8] sm:$0xff]
  %v71 = vpack.c.bf16 %v40, %v39
  %v72 = vpack.c.bf16 %v42, %v41
  %v73 = vpack.c.bf16 %v44, %v43
  %v74 = vpack.c.bf16 %v46, %v45
  %v75 = vpack.c.bf16 %v48, %v47
  %v76 = vpack.c.bf16 %v50, %v49
  %v77 = vpack.c.bf16 %v52, %v51
  %v78 = vpack.c.bf16 %v54, %v53
  %v79 = vpack.c.bf16 %v56, %v55
  %v80 = vpack.c.bf16 %v58, %v57
  %v81 = vpack.c.bf16 %v60, %v59
  %v82 = vpack.c.bf16 %v62, %v61
  %v83 = vpack.c.bf16 %v64, %v63
  %v84 = vpack.c.bf16 %v66, %v65
  %v85 = vpack.c.bf16 %v68, %v67
  %v86 = vpack.c.bf16 %v70, %v69
  %87 = vmatprep.subr.bf16.mxu0 0
  %88 = vmatpush1.bf16.msra.mxu0 %v78
  %89 = vmatprep.subr.bf16.mxu0 0
  %90 = vmatpush1.bf16.msra.mxu0 %v77
  %91 = vmatprep.subr.bf16.mxu0 0
  %92 = vmatpush1.bf16.msra.mxu0 %v76
  %93 = vmatprep.subr.bf16.mxu0 0
  %94 = vmatpush1.bf16.msra.mxu0 %v75
  %95 = vmatprep.subr.bf16.mxu0 0
  %96 = vmatpush1.bf16.msra.mxu0 %v74
  %97 = vmatprep.subr.bf16.mxu0 0
  %98 = vmatpush1.bf16.msra.mxu0 %v73
  %99 = vmatprep.subr.bf16.mxu0 0
  %100 = vmatpush1.bf16.msra.mxu0 %v72
  %101 = vmatprep.subr.bf16.mxu0 0
  %102 = vmatpush1.bf16.msra.mxu0 %v71
  %103 = vmatprep.subr.bf16.mxu0 0
  %104 = vmatpush2.bf16.msra.mxu0 %v86
  %105 = vmatprep.subr.bf16.mxu0 0
  %106 = vmatpush2.bf16.msra.mxu0 %v85
  %107 = vmatprep.subr.bf16.mxu0 0
  %108 = vmatpush2.bf16.msra.mxu0 %v84
  %109 = vmatprep.subr.bf16.mxu0 0
  %110 = vmatpush2.bf16.msra.mxu0 %v83
  %111 = vmatprep.subr.bf16.mxu0 0
  %112 = vmatpush2.bf16.msra.mxu0 %v82
  %113 = vmatprep.subr.bf16.mxu0 0
  %114 = vmatpush2.bf16.msra.mxu0 %v81
  %115 = vmatprep.subr.bf16.mxu0 0
  %116 = vmatpush2.bf16.msra.mxu0 %v80
  %117 = vmatprep.subr.bf16.mxu0 0
  %118 = vmatpush2.bf16.msra.mxu0 %v79
  %119 = vmatprep.mubr.bf16.mxu0 %v36
  %120 = vmatmul.mubr.bf16.gmra.mxu0 %v35
  %v121 = vpop.f32.mrf.mxu0
  %v122 = vadd.f32 0.0, %v121
  %v123 = vpop.f32.mrf.mxu0
  %v124 = vpop.f32.mrf.mxu0
  %v125 = vadd.f32 0.0, %v124
  %v126 = vpop.f32.mrf.mxu0
  %127 = vmatprep.mubr.bf16.mxu0 %v38
  %128 = vmatmul.mubr.bf16.gmra.mxu0 %v37
  %v129 = vpop.f32.mrf.mxu0
  %v130 = vadd.f32 0.0, %v129
  %v131 = vpop.f32.mrf.mxu0
  %v132 = vpop.f32.mrf.mxu0
  %v133 = vadd.f32 0.0, %v132
  %v134 = vpop.f32.mrf.mxu0
  %135 = vdwg.mxu0
  %v136 = vadd.f32 %v23, %v122
  %v137 = vadd.f32 %v24, %v125
  %v138 = vadd.f32 %v25, %v130
  %v139 = vadd.f32 %v26, %v133
  %140 = vst [vmem:[#allocation2] sm:$0xff] %v136
  %141 = vst [vmem:[#allocation2 + $0x8] sm:$0xff] %v137
  %142 = vst [vmem:[#allocation2 + $0x10] sm:$0xff] %v138
  %143 = vst [vmem:[#allocation2 + $0x18] sm:$0xff] %v139
  // Predicated region
  $region18: #{_lambda_.14} parent=0 // pred_check
    %p144 = pneg %p15
  $region19: #{_lambda_.14} parent=0 // pred_check_branch
    %146 = sbr.rel (%p144) target = $region21
  $region20: #{_lambda_.14} parent=0 // pred_region
    %v147 = vld [vmem:[#allocation2] sm:$0xff]
    %v148 = vld [vmem:[#allocation2 + $0x8] sm:$0xff]
    %v149 = vld [vmem:[#allocation2 + $0x10] sm:$0xff]
    %v150 = vld [vmem:[#allocation2 + $0x18] sm:$0xff]
    %v151 = vld [vmem:[%s2] sm:$0x1]
    %v153 = vlaneseq
    %v154 = vshrl.u32 %v153, 7
    %v155 = vsub.s32 0, %v154
    %v156 = vrot.slane %v151, %v155
    %v158 = vadd.f32 %v147, %v156
    %v159 = vadd.f32 %v148, %v156
    %v160 = vadd.f32 %v149, %v156
    %v161 = vadd.f32 %v150, %v156
    %162 = vst [vmem:[%s3] sm:$0xff] %v158
    %163 = vst [vmem:[%s3 + $0x8] sm:$0xff] %v159
    %164 = vst [vmem:[%s3 + $0x10] sm:$0xff] %v160
    %165 = vst [vmem:[%s3 + $0x18] sm:$0xff] %v161
  $region21: #{_lambda_.14} parent=0 // pred_fallthru
    _
  // Predicated region
  $region22: #{_lambda_.14} parent=0 // pred_check
    _
  $region23: #{_lambda_.14} parent=0 // pred_check_branch
    %167 = sbr.rel (0) target = $region25
  $region24: #{_lambda_.14} parent=0 // pred_region
    _
  $region25: #{_lambda_.14} parent=0 // pred_fallthru
    _
  // Predicated region
  $region26: #{_lambda_.14} parent=0 // pred_check
    _
  $region27: #{_lambda_.14} parent=0 // pred_check_branch
    %169 = sbr.rel (0) target = $region29
  $region28: #{_lambda_.14} parent=0 // pred_region
    _
  $region29: #{_lambda_.14} parent=0 // pred_fallthru
    _

// kernel: _lambda_.15
$region0: #{_lambda_.15}
  #allocation0 [shape = 'u32[]', space=smem, size = 0x4, offset = 0x4, fixed_abs, tag = 'smem constant byte address 0x4 - core index']
  #allocation1 [shape = 'u32[144,128]{1,0:T(1,128)}', space=vmem, size = 0x12000, scoped, tag = 'internal scratch']
  %s0 = inlined_call_operand.vmem [shape: f32[32,64], index: 0, kind: input, shape index: {}]
  %s1 = inlined_call_operand.vmem [shape: f32[1,64], index: 1, kind: input, shape index: {}]
  %s2 = inlined_call_operand.vmem [shape: f32[1,64], index: 2, kind: input, shape index: {}]
  %s3 = inlined_call_operand.vmem [shape: f32[64,256], index: 3, kind: input, shape index: {}]
  %s4 = inlined_call_operand.vmem [shape: f32[1,256], index: 4, kind: input, shape index: {}]
  %s5 = inlined_call_operand.vmem [shape: f32[32,256], index: 5, kind: output, shape index: {}]
  %s6 = sld [smem:[#allocation0]]
  $region30: #{_lambda_.15} parent=0
    _
  %s8 = ssub.s32 1, %s6
  %s9 = scalar_select 0, %s8, %s6
  // Predicated region
  $region2: #{_lambda_.15} parent=0 // pred_check
    _
  $region3: #{_lambda_.15} parent=0 // pred_check_branch
    %11 = sbr.rel (0) target = $region5
  $region4: #{_lambda_.15} parent=0 // pred_region
    _
  $region5: #{_lambda_.15} parent=0 // pred_fallthru
    _
  // Predicated region
  $region6: #{_lambda_.15} parent=0 // pred_check
    _
  $region7: #{_lambda_.15} parent=0 // pred_check_branch
    %13 = sbr.rel (0) target = $region9
  $region8: #{_lambda_.15} parent=0 // pred_region
    _
  $region9: #{_lambda_.15} parent=0 // pred_fallthru
    _
  // Predicated region
  $region10: #{_lambda_.15} parent=0 // pred_check
    _
  $region11: #{_lambda_.15} parent=0 // pred_check_branch
    %15 = sbr.rel (0) target = $region13
  $region12: #{_lambda_.15} parent=0 // pred_region
    _
  $region13: #{_lambda_.15} parent=0 // pred_fallthru
    _
  // Predicated region
  $region14: #{_lambda_.15} parent=0 // pred_check
    _
  $region15: #{_lambda_.15} parent=0 // pred_check_branch
    %17 = sbr.rel (0) target = $region17
  $region16: #{_lambda_.15} parent=0 // pred_region
    _
  $region17: #{_lambda_.15} parent=0 // pred_fallthru
    _
  // Predicated region
  $region18: #{_lambda_.15} parent=0 // pred_check
    _
  $region19: #{_lambda_.15} parent=0 // pred_check_branch
    %19 = sbr.rel (0) target = $region21
  $region20: #{_lambda_.15} parent=0 // pred_region
    _
  $region21: #{_lambda_.15} parent=0 // pred_fallthru
    _
  %v21 = vld [vmem:[%s0] sm:$0xff]
  %v22 = vld [vmem:[%s0 + $0x8] sm:$0xff]
  %v23 = vld [vmem:[%s0 + $0x10] sm:$0xff]
  %v24 = vld [vmem:[%s0 + $0x18] sm:$0xff]
  %vm25 = vcmask 523264
  %v26 = vsel %vm25, %v21, 0.0
  %27 = vadd.xlane.f32.xlu0 %v26
  %v28 = vpop.xlane.xlu0 %27
  %v29 = vsel %vm25, %v22, 0.0
  %30 = vadd.xlane.f32.xlu0 %v29
  %v31 = vpop.xlane.xlu0 %30
  %v32 = vsel %vm25, %v23, 0.0
  %33 = vadd.xlane.f32.xlu0 %v32
  %v34 = vpop.xlane.xlu0 %33
  %v35 = vsel %vm25, %v24, 0.0
  %36 = vadd.xlane.f32.xlu0 %v35
  %v37 = vpop.xlane.xlu0 %36
  %v38 = vrcp.pop 64.0
  %v39 = vmul.f32 %v28, %v38
  %v40 = vmul.f32 %v31, %v38
  %v41 = vmul.f32 %v34, %v38
  %v42 = vmul.f32 %v37, %v38
  %v43 = vsub.f32 %v21, %v39
  %v44 = vsub.f32 %v22, %v40
  %v45 = vsub.f32 %v23, %v41
  %v46 = vsub.f32 %v24, %v42
  %v47 = vmul.f32 %v43, %v43
  %v48 = vmul.f32 %v44, %v44
  %v49 = vmul.f32 %v45, %v45
  %v50 = vmul.f32 %v46, %v46
  %v51 = vsel %vm25, %v47, 0.0
  %52 = vadd.xlane.f32.xlu0 %v51
  %v53 = vpop.xlane.xlu0 %52
  %v54 = vsel %vm25, %v48, 0.0
  %55 = vadd.xlane.f32.xlu0 %v54
  %v56 = vpop.xlane.xlu0 %55
  %v57 = vsel %vm25, %v49, 0.0
  %58 = vadd.xlane.f32.xlu0 %v57
  %v59 = vpop.xlane.xlu0 %58
  %v60 = vsel %vm25, %v50, 0.0
  %61 = vadd.xlane.f32.xlu0 %v60
  %v62 = vpop.xlane.xlu0 %61
  %v63 = vmul.f32 %v53, %v38
  %v64 = vmul.f32 %v56, %v38
  %v65 = vmul.f32 %v59, %v38
  %v66 = vmul.f32 %v62, %v38
  %v67 = vadd.f32 %v63, 1e-05
  %v68 = vadd.f32 %v64, 1e-05
  %v69 = vadd.f32 %v65, 1e-05
  %v70 = vadd.f32 %v66, 1e-05
  %v71 = vrsqrt.pop %v67
  %v72 = vrsqrt.pop %v68
  %v73 = vrsqrt.pop %v69
  %v74 = vrsqrt.pop %v70
  %v75 = vmul.f32 %v43, %v71
  %v76 = vmul.f32 %v44, %v72
  %v77 = vmul.f32 %v45, %v73
  %v78 = vmul.f32 %v46, %v74
  %v79 = vld [vmem:[%s1] sm:$0x1]
  %v81 = vlaneseq
  %v82 = vshrl.u32 %v81, 7
  %v83 = vsub.s32 0, %v82
  %v84 = vrot.slane %v79, %v83
  %v86 = vmul.f32 %v75, %v84
  %v87 = vmul.f32 %v76, %v84
  %v88 = vmul.f32 %v77, %v84
  %v89 = vmul.f32 %v78, %v84
  %v90 = vld [vmem:[%s2] sm:$0x1]
  %v92 = vlaneseq
  %v93 = vshrl.u32 %v92, 7
  %v94 = vsub.s32 0, %v93
  %v95 = vrot.slane %v90, %v94
  %v97 = vadd.f32 %v86, %v95
  %v98 = vadd.f32 %v87, %v95
  %v99 = vadd.f32 %v88, %v95
  %v100 = vadd.f32 %v89, %v95
  %v101 = vpack.c.bf16 %v98, %v97
  %v102 = vpack.c.bf16 %v100, %v99
  %v103 = vld [vmem:[%s3] sm:$0xff]
  %v104 = vld [vmem:[%s3 + $0x8] sm:$0xff]
  %v105 = vld [vmem:[%s3 + $0x10] sm:$0xff]
  %v106 = vld [vmem:[%s3 + $0x18] sm:$0xff]
  %v107 = vld [vmem:[%s3 + $0x20] sm:$0xff]
  %v108 = vld [vmem:[%s3 + $0x28] sm:$0xff]
  %v109 = vld [vmem:[%s3 + $0x30] sm:$0xff]
  %v110 = vld [vmem:[%s3 + $0x38] sm:$0xff]
  %v111 = vld [vmem:[%s3 + $0x40] sm:$0xff]
  %v112 = vld [vmem:[%s3 + $0x48] sm:$0xff]
  %v113 = vld [vmem:[%s3 + $0x50] sm:$0xff]
  %v114 = vld [vmem:[%s3 + $0x58] sm:$0xff]
  %v115 = vld [vmem:[%s3 + $0x60] sm:$0xff]
  %v116 = vld [vmem:[%s3 + $0x68] sm:$0xff]
  %v117 = vld [vmem:[%s3 + $0x70] sm:$0xff]
  %v118 = vld [vmem:[%s3 + $0x78] sm:$0xff]
  %v119 = vpack.c.bf16 %v105, %v103
  %v120 = vpack.c.bf16 %v106, %v104
  %v121 = vpack.c.bf16 %v109, %v107
  %v122 = vpack.c.bf16 %v110, %v108
  %v123 = vpack.c.bf16 %v113, %v111
  %v124 = vpack.c.bf16 %v114, %v112
  %v125 = vpack.c.bf16 %v117, %v115
  %v126 = vpack.c.bf16 %v118, %v116
  %v127 = vld [vmem:[%s4] sm:$0x3]
  %v129 = vlaneseq
  %v130 = vshrl.u32 %v129, 7
  %v131 = vsub.s32 0, %v130
  %v132 = vrot.slane %v127, %v131
  %v133 = vlaneseq
  %v134 = vshrl.u32 %v133, 7
  %v135 = vsub.s32 1, %v134
  %v136 = vrot.slane %v127, %v135
  %v140 = vsel %vm25, %v101, 0
  %v143 = vsel %vm25, %v102, 0
  %145 = vmatprep.subr.bf16.mxu0 0
  %146 = vmatpush1.bf16.msra.mxu0 0
  %147 = vmatprep.subr.bf16.mxu0 0
  %148 = vmatpush1.bf16.msra.mxu0 0
  %149 = vmatprep.subr.bf16.mxu0 0
  %150 = vmatpush1.bf16.msra.mxu0 0
  %151 = vmatprep.subr.bf16.mxu0 0
  %152 = vmatpush1.bf16.msra.mxu0 0
  %153 = vmatprep.subr.bf16.mxu0 %v126
  %154 = vmatpush1.bf16.msra.mxu0 %v125
  %155 = vmatprep.subr.bf16.mxu0 %v124
  %156 = vmatpush1.bf16.msra.mxu0 %v123
  %157 = vmatprep.subr.bf16.mxu0 %v122
  %158 = vmatpush1.bf16.msra.mxu0 %v121
  %159 = vmatprep.subr.bf16.mxu0 %v120
  %160 = vmatpush1.bf16.msra.mxu0 %v119
  %161 = vmatprep.subr.bf16.mxu0 0
  %162 = vmatpush2.bf16.msra.mxu0 0
  %163 = vmatprep.subr.bf16.mxu0 0
  %164 = vmatpush2.bf16.msra.mxu0 0
  %165 = vmatprep.subr.bf16.mxu0 0
  %166 = vmatpush2.bf16.msra.mxu0 0
  %167 = vmatprep.subr.bf16.mxu0 0
  %168 = vmatpush2.bf16.msra.mxu0 0
  %169 = vmatprep.subr.bf16.mxu0 0
  %170 = vmatpush2.bf16.msra.mxu0 0
  %171 = vmatprep.subr.bf16.mxu0 0
  %172 = vmatpush2.bf16.msra.mxu0 0
  %173 = vmatprep.subr.bf16.mxu0 0
  %174 = vmatpush2.bf16.msra.mxu0 0
  %175 = vmatprep.subr.bf16.mxu0 0
  %176 = vmatpush2.bf16.msra.mxu0 0
  %177 = vmatprep.mubr.bf16.mxu0 0
  %178 = vmatmul.mubr.bf16.gmra.mxu0 %v140
  %v179 = vpop.f32.mrf.mxu0
  %v180 = vadd.f32 %v132, %v179
  %v181 = vpop.f32.mrf.mxu0
  %v182 = vadd.f32 %v136, %v181
  %v183 = vpop.f32.mrf.mxu0
  %v184 = vadd.f32 %v132, %v183
  %v185 = vpop.f32.mrf.mxu0
  %v186 = vadd.f32 %v136, %v185
  %187 = vmatprep.mubr.bf16.mxu0 0
  %188 = vmatmul.mubr.bf16.gmra.mxu0 %v143
  %v189 = vpop.f32.mrf.mxu0
  %v190 = vadd.f32 %v132, %v189
  %v191 = vpop.f32.mrf.mxu0
  %v192 = vadd.f32 %v136, %v191
  %v193 = vpop.f32.mrf.mxu0
  %v194 = vadd.f32 %v132, %v193
  %v195 = vpop.f32.mrf.mxu0
  %v196 = vadd.f32 %v136, %v195
  %197 = vdwg.mxu0
  %198 = vst [vmem:[%s5] sm:$0xff] %v180
  %199 = vst [vmem:[%s5 + $0x8] sm:$0xff] %v182
  %200 = vst [vmem:[%s5 + $0x10] sm:$0xff] %v184
  %201 = vst [vmem:[%s5 + $0x18] sm:$0xff] %v186
  %202 = vst [vmem:[%s5 + $0x20] sm:$0xff] %v190
  %203 = vst [vmem:[%s5 + $0x28] sm:$0xff] %v192
  %204 = vst [vmem:[%s5 + $0x30] sm:$0xff] %v194
  %205 = vst [vmem:[%s5 + $0x38] sm:$0xff] %v196
  // Predicated region
  $region22: #{_lambda_.15} parent=0 // pred_check
    _
  $region23: #{_lambda_.15} parent=0 // pred_check_branch
    %207 = sbr.rel (0) target = $region25
  $region24: #{_lambda_.15} parent=0 // pred_region
    _
  $region25: #{_lambda_.15} parent=0 // pred_fallthru
    _
  // Predicated region
  $region26: #{_lambda_.15} parent=0 // pred_check
    _
  $region27: #{_lambda_.15} parent=0 // pred_check_branch
    %209 = sbr.rel (0) target = $region29
  $region28: #{_lambda_.15} parent=0 // pred_region
    _
  $region29: #{_lambda_.15} parent=0 // pred_fallthru
    _

// kernel: _lambda_.11
$region0: #{_lambda_.11}
  #allocation0 [shape = 'u32[]', space=smem, size = 0x4, offset = 0x4, fixed_abs, tag = 'smem constant byte address 0x4 - core index']
  #allocation1 [shape = 'u32[144,128]{1,0:T(1,128)}', space=vmem, size = 0x12000, scoped, tag = 'internal scratch']
  #allocation2 [shape = 'f32[8,16,1]{2,1,0:T(8,128)}', space=vmem, size = 0x10000, scoped, tag = 'scratch operand']
  #allocation3 [shape = 'f32[8,16,1]{2,1,0:T(8,128)}', space=vmem, size = 0x10000, scoped, tag = 'scratch operand']
  #allocation4 [shape = 'f32[8,16,16]{2,1,0:T(8,128)}', space=vmem, size = 0x10000, scoped, tag = 'scratch operand']
  %s0 = inlined_call_operand.vmem [shape: f32[8,16,16], index: 0, kind: input, shape index: {}]
  %s1 = inlined_call_operand.vmem [shape: f32[8,16,16], index: 1, kind: input, shape index: {}]
  %s2 = inlined_call_operand.vmem [shape: f32[8,16,16], index: 2, kind: input, shape index: {}]
  %s3 = inlined_call_operand.vmem [shape: f32[8,16,16], index: 3, kind: output, shape index: {}]
  %s4 = sld [smem:[#allocation0]]
  $region30: #{_lambda_.11} parent=0
    _
  %s6 = ssub.s32 1, %s4
  %s7 = scalar_select 0, %s6, %s4
  // Predicated region
  $region2: #{_lambda_.11} parent=0 // pred_check
    _
  $region3: #{_lambda_.11} parent=0 // pred_check_branch
    %9 = sbr.rel (0) target = $region5
  $region4: #{_lambda_.11} parent=0 // pred_region
    _
  $region5: #{_lambda_.11} parent=0 // pred_fallthru
    _
  // Predicated region
  $region6: #{_lambda_.11} parent=0 // pred_check
    _
  $region7: #{_lambda_.11} parent=0 // pred_check_branch
    %11 = sbr.rel (0) target = $region9
  $region8: #{_lambda_.11} parent=0 // pred_region
    _
  $region9: #{_lambda_.11} parent=0 // pred_fallthru
    _
  // Predicated region
  $region10: #{_lambda_.11} parent=0 // pred_check
    _
  $region11: #{_lambda_.11} parent=0 // pred_check_branch
    %13 = sbr.rel (0) target = $region13
  $region12: #{_lambda_.11} parent=0 // pred_region
    _
  $region13: #{_lambda_.11} parent=0 // pred_fallthru
    _
  %p15 = scmp.eq.s32.totalorder 0, 0
  // Predicated region
  $region14: #{_lambda_.11} parent=0 // pred_check
    %p16 = pneg %p15
  $region15: #{_lambda_.11} parent=0 // pred_check_branch
    %18 = sbr.rel (%p16) target = $region17
  $region16: #{_lambda_.11} parent=0 // pred_region
    %vm19 = vcmask 7168
    %20 = vst.msk [vmem:[#allocation2] sm:$0xff] %vm19, -1e+30
    %21 = vst.msk [vmem:[#allocation2 + $0x8] sm:$0xff] %vm19, -1e+30
    %22 = vst.msk [vmem:[#allocation2 + $0x10] sm:$0xff] %vm19, -1e+30
    %23 = vst.msk [vmem:[#allocation2 + $0x18] sm:$0xff] %vm19, -1e+30
    %24 = vst.msk [vmem:[#allocation2 + $0x20] sm:$0xff] %vm19, -1e+30
    %25 = vst.msk [vmem:[#allocation2 + $0x28] sm:$0xff] %vm19, -1e+30
    %26 = vst.msk [vmem:[#allocation2 + $0x30] sm:$0xff] %vm19, -1e+30
    %27 = vst.msk [vmem:[#allocation2 + $0x38] sm:$0xff] %vm19, -1e+30
    %28 = vst.msk [vmem:[#allocation2 + $0x40] sm:$0xff] %vm19, -1e+30
    %29 = vst.msk [vmem:[#allocation2 + $0x48] sm:$0xff] %vm19, -1e+30
    %30 = vst.msk [vmem:[#allocation2 + $0x50] sm:$0xff] %vm19, -1e+30
    %31 = vst.msk [vmem:[#allocation2 + $0x58] sm:$0xff] %vm19, -1e+30
    %32 = vst.msk [vmem:[#allocation2 + $0x60] sm:$0xff] %vm19, -1e+30
    %33 = vst.msk [vmem:[#allocation2 + $0x68] sm:$0xff] %vm19, -1e+30
    %34 = vst.msk [vmem:[#allocation2 + $0x70] sm:$0xff] %vm19, -1e+30
    %35 = vst.msk [vmem:[#allocation2 + $0x78] sm:$0xff] %vm19, -1e+30
    %36 = vst.msk [vmem:[#allocation3] sm:$0xff] %vm19, 0.0
    %37 = vst.msk [vmem:[#allocation3 + $0x8] sm:$0xff] %vm19, 0.0
    %38 = vst.msk [vmem:[#allocation3 + $0x10] sm:$0xff] %vm19, 0.0
    %39 = vst.msk [vmem:[#allocation3 + $0x18] sm:$0xff] %vm19, 0.0
    %40 = vst.msk [vmem:[#allocation3 + $0x20] sm:$0xff] %vm19, 0.0
    %41 = vst.msk [vmem:[#allocation3 + $0x28] sm:$0xff] %vm19, 0.0
    %42 = vst.msk [vmem:[#allocation3 + $0x30] sm:$0xff] %vm19, 0.0
    %43 = vst.msk [vmem:[#allocation3 + $0x38] sm:$0xff] %vm19, 0.0
    %44 = vst.msk [vmem:[#allocation3 + $0x40] sm:$0xff] %vm19, 0.0
    %45 = vst.msk [vmem:[#allocation3 + $0x48] sm:$0xff] %vm19, 0.0
    %46 = vst.msk [vmem:[#allocation3 + $0x50] sm:$0xff] %vm19, 0.0
    %47 = vst.msk [vmem:[#allocation3 + $0x58] sm:$0xff] %vm19, 0.0
    %48 = vst.msk [vmem:[#allocation3 + $0x60] sm:$0xff] %vm19, 0.0
    %49 = vst.msk [vmem:[#allocation3 + $0x68] sm:$0xff] %vm19, 0.0
    %50 = vst.msk [vmem:[#allocation3 + $0x70] sm:$0xff] %vm19, 0.0
    %51 = vst.msk [vmem:[#allocation3 + $0x78] sm:$0xff] %vm19, 0.0
    %vm52 = vcmask 130048
    %53 = vst.msk [vmem:[#allocation4] sm:$0xff] %vm52, 0.0
    %54 = vst.msk [vmem:[#allocation4 + $0x8] sm:$0xff] %vm52, 0.0
    %55 = vst.msk [vmem:[#allocation4 + $0x10] sm:$0xff] %vm52, 0.0
    %56 = vst.msk [vmem:[#allocation4 + $0x18] sm:$0xff] %vm52, 0.0
    %57 = vst.msk [vmem:[#allocation4 + $0x20] sm:$0xff] %vm52, 0.0
    %58 = vst.msk [vmem:[#allocation4 + $0x28] sm:$0xff] %vm52, 0.0
    %59 = vst.msk [vmem:[#allocation4 + $0x30] sm:$0xff] %vm52, 0.0
    %60 = vst.msk [vmem:[#allocation4 + $0x38] sm:$0xff] %vm52, 0.0
    %61 = vst.msk [vmem:[#allocation4 + $0x40] sm:$0xff] %vm52, 0.0
    %62 = vst.msk [vmem:[#allocation4 + $0x48] sm:$0xff] %vm52, 0.0
    %63 = vst.msk [vmem:[#allocation4 + $0x50] sm:$0xff] %vm52, 0.0
    %64 = vst.msk [vmem:[#allocation4 + $0x58] sm:$0xff] %vm52, 0.0
    %65 = vst.msk [vmem:[#allocation4 + $0x60] sm:$0xff] %vm52, 0.0
    %66 = vst.msk [vmem:[#allocation4 + $0x68] sm:$0xff] %vm52, 0.0
    %67 = vst.msk [vmem:[#allocation4 + $0x70] sm:$0xff] %vm52, 0.0
    %68 = vst.msk [vmem:[#allocation4 + $0x78] sm:$0xff] %vm52, 0.0
  $region17: #{_lambda_.11} parent=0 // pred_fallthru
    _
  %v69 = vld [vmem:[%s0] sm:$0xff]
  %v70 = vld [vmem:[%s0 + $0x8] sm:$0xff]
  %v71 = vld [vmem:[%s0 + $0x10] sm:$0xff]
  %v72 = vld [vmem:[%s0 + $0x18] sm:$0xff]
  %v73 = vld [vmem:[%s0 + $0x20] sm:$0xff]
  %v74 = vld [vmem:[%s0 + $0x28] sm:$0xff]
  %v75 = vld [vmem:[%s0 + $0x30] sm:$0xff]
  %v76 = vld [vmem:[%s0 + $0x38] sm:$0xff]
  %v77 = vld [vmem:[%s0 + $0x40] sm:$0xff]
  %v78 = vld [vmem:[%s0 + $0x48] sm:$0xff]
  %v79 = vld [vmem:[%s0 + $0x50] sm:$0xff]
  %v80 = vld [vmem:[%s0 + $0x58] sm:$0xff]
  %v81 = vld [vmem:[%s0 + $0x60] sm:$0xff]
  %v82 = vld [vmem:[%s0 + $0x68] sm:$0xff]
  %v83 = vld [vmem:[%s0 + $0x70] sm:$0xff]
  %v84 = vld [vmem:[%s0 + $0x78] sm:$0xff]
  %v85 = vmul.f32 %v69, 0.25
  %v86 = vmul.f32 %v70, 0.25
  %v87 = vmul.f32 %v71, 0.25
  %v88 = vmul.f32 %v72, 0.25
  %v89 = vmul.f32 %v73, 0.25
  %v90 = vmul.f32 %v74, 0.25
  %v91 = vmul.f32 %v75, 0.25
  %v92 = vmul.f32 %v76, 0.25
  %v93 = vmul.f32 %v77, 0.25
  %v94 = vmul.f32 %v78, 0.25
  %v95 = vmul.f32 %v79, 0.25
  %v96 = vmul.f32 %v80, 0.25
  %v97 = vmul.f32 %v81, 0.25
  %v98 = vmul.f32 %v82, 0.25
  %v99 = vmul.f32 %v83, 0.25
  %v100 = vmul.f32 %v84, 0.25
  %v101 = vpack.c.bf16 %v86, %v85
  %v102 = vpack.c.bf16 %v88, %v87
  %v103 = vpack.c.bf16 %v90, %v89
  %v104 = vpack.c.bf16 %v92, %v91
  %v105 = vpack.c.bf16 %v94, %v93
  %v106 = vpack.c.bf16 %v96, %v95
  %v107 = vpack.c.bf16 %v98, %v97
  %v108 = vpack.c.bf16 %v100, %v99
  %v109 = vld [vmem:[%s1] sm:$0xff]
  %v110 = vld [vmem:[%s1 + $0x8] sm:$0xff]
  %v111 = vld [vmem:[%s1 + $0x10] sm:$0xff]
  %v112 = vld [vmem:[%s1 + $0x18] sm:$0xff]
  %v113 = vld [vmem:[%s1 + $0x20] sm:$0xff]
  %v114 = vld [vmem:[%s1 + $0x28] sm:$0xff]
  %v115 = vld [vmem:[%s1 + $0x30] sm:$0xff]
  %v116 = vld [vmem:[%s1 + $0x38] sm:$0xff]
  %v117 = vld [vmem:[%s1 + $0x40] sm:$0xff]
  %v118 = vld [vmem:[%s1 + $0x48] sm:$0xff]
  %v119 = vld [vmem:[%s1 + $0x50] sm:$0xff]
  %v120 = vld [vmem:[%s1 + $0x58] sm:$0xff]
  %v121 = vld [vmem:[%s1 + $0x60] sm:$0xff]
  %v122 = vld [vmem:[%s1 + $0x68] sm:$0xff]
  %v123 = vld [vmem:[%s1 + $0x70] sm:$0xff]
  %v124 = vld [vmem:[%s1 + $0x78] sm:$0xff]
  %v125 = vpack.c.bf16 %v110, %v109
  %v126 = vpack.c.bf16 %v112, %v111
  %v127 = vpack.c.bf16 %v114, %v113
  %v128 = vpack.c.bf16 %v116, %v115
  %v129 = vpack.c.bf16 %v118, %v117
  %v130 = vpack.c.bf16 %v120, %v119
  %v131 = vpack.c.bf16 %v122, %v121
  %v132 = vpack.c.bf16 %v124, %v123
  %vm133 = vcmask 130048
  %v135 = vsel %vm133, %v101, 0
  %v138 = vsel %vm133, %v125, 0
  %140 = vmatprep.subr.bf16.mxu0 0
  %141 = vmatpush1.bf16.xpose.msra.mxu0 0
  %142 = vmatprep.subr.bf16.mxu0 0
  %143 = vmatpush1.bf16.xpose.msra.mxu0 0
  %144 = vmatprep.subr.bf16.mxu0 0
  %145 = vmatpush1.bf16.xpose.msra.mxu0 0
  %146 = vmatprep.subr.bf16.mxu0 0
  %147 = vmatpush1.bf16.xpose.msra.mxu0 0
  %148 = vmatprep.subr.bf16.mxu0 0
  %149 = vmatpush1.bf16.xpose.msra.mxu0 0
  %150 = vmatprep.subr.bf16.mxu0 0
  %151 = vmatpush1.bf16.xpose.msra.mxu0 0
  %152 = vmatprep.subr.bf16.mxu0 0
  %153 = vmatpush1.bf16.xpose.msra.mxu0 0
  %154 = vmatprep.subr.bf16.mxu0 0
  %155 = vmatpush1.bf16.xpose.msra.mxu0 %v138
  %156 = vmatprep.subr.bf16.mxu0 0
  %157 = vmatpush2.bf16.xpose.msra.mxu0 0
  %158 = vmatprep.subr.bf16.mxu0 0
  %159 = vmatpush2.bf16.xpose.msra.mxu0 0
  %160 = vmatprep.subr.bf16.mxu0 0
  %161 = vmatpush2.bf16.xpose.msra.mxu0 0
  %162 = vmatprep.subr.bf16.mxu0 0
  %163 = vmatpush2.bf16.xpose.msra.mxu0 0
  %164 = vmatprep.subr.bf16.mxu0 0
  %165 = vmatpush2.bf16.xpose.msra.mxu0 0
  %166 = vmatprep.subr.bf16.mxu0 0
  %167 = vmatpush2.bf16.xpose.msra.mxu0 0
  %168 = vmatprep.subr.bf16.mxu0 0
  %169 = vmatpush2.bf16.xpose.msra.mxu0 0
  %170 = vmatprep.subr.bf16.mxu0 0
  %171 = vmatpush2.bf16.xpose.msra.mxu0 0
  %172 = vmatprep.mubr.bf16.mxu0 0
  %173 = vmatmul.mubr.bf16.gmra.mxu0 %v135
  %v174 = vpop.f32.mrf.mxu0
  %v175 = vadd.f32 0.0, %v174
  %v176 = vpop.f32.mrf.mxu0
  %v177 = vpop.f32.mrf.mxu0
  %v178 = vadd.f32 0.0, %v177
  %v179 = vpop.f32.mrf.mxu0
  %180 = vdwg.mxu0
  %v182 = vsel %vm133, %v102, 0
  %v185 = vsel %vm133, %v126, 0
  %187 = vmatprep.subr.bf16.mxu0 0
  %188 = vmatpush1.bf16.xpose.msra.mxu0 0
  %189 = vmatprep.subr.bf16.mxu0 0
  %190 = vmatpush1.bf16.xpose.msra.mxu0 0
  %191 = vmatprep.subr.bf16.mxu0 0
  %192 = vmatpush1.bf16.xpose.msra.mxu0 0
  %193 = vmatprep.subr.bf16.mxu0 0
  %194 = vmatpush1.bf16.xpose.msra.mxu0 0
  %195 = vmatprep.subr.bf16.mxu0 0
  %196 = vmatpush1.bf16.xpose.msra.mxu0 0
  %197 = vmatprep.subr.bf16.mxu0 0
  %198 = vmatpush1.bf16.xpose.msra.mxu0 0
  %199 = vmatprep.subr.bf16.mxu0 0
  %200 = vmatpush1.bf16.xpose.msra.mxu0 0
  %201 = vmatprep.subr.bf16.mxu0 0
  %202 = vmatpush1.bf16.xpose.msra.mxu0 %v185
  %203 = vmatprep.subr.bf16.mxu0 0
  %204 = vmatpush2.bf16.xpose.msra.mxu0 0
  %205 = vmatprep.subr.bf16.mxu0 0
  %206 = vmatpush2.bf16.xpose.msra.mxu0 0
  %207 = vmatprep.subr.bf16.mxu0 0
  %208 = vmatpush2.bf16.xpose.msra.mxu0 0
  %209 = vmatprep.subr.bf16.mxu0 0
  %210 = vmatpush2.bf16.xpose.msra.mxu0 0
  %211 = vmatprep.subr.bf16.mxu0 0
  %212 = vmatpush2.bf16.xpose.msra.mxu0 0
  %213 = vmatprep.subr.bf16.mxu0 0
  %214 = vmatpush2.bf16.xpose.msra.mxu0 0
  %215 = vmatprep.subr.bf16.mxu0 0
  %216 = vmatpush2.bf16.xpose.msra.mxu0 0
  %217 = vmatprep.subr.bf16.mxu0 0
  %218 = vmatpush2.bf16.xpose.msra.mxu0 0
  %219 = vmatprep.mubr.bf16.mxu0 0
  %220 = vmatmul.mubr.bf16.gmra.mxu0 %v182
  %v221 = vpop.f32.mrf.mxu0
  %v222 = vadd.f32 0.0, %v221
  %v223 = vpop.f32.mrf.mxu0
  %v224 = vpop.f32.mrf.mxu0
  %v225 = vadd.f32 0.0, %v224
  %v226 = vpop.f32.mrf.mxu0
  %227 = vdwg.mxu0
  %v229 = vsel %vm133, %v103, 0
  %v232 = vsel %vm133, %v127, 0
  %234 = vmatprep.subr.bf16.mxu0 0
  %235 = vmatpush1.bf16.xpose.msra.mxu0 0
  %236 = vmatprep.subr.bf16.mxu0 0
  %237 = vmatpush1.bf16.xpose.msra.mxu0 0
  %238 = vmatprep.subr.bf16.mxu0 0
  %239 = vmatpush1.bf16.xpose.msra.mxu0 0
  %240 = vmatprep.subr.bf16.mxu0 0
  %241 = vmatpush1.bf16.xpose.msra.mxu0 0
  %242 = vmatprep.subr.bf16.mxu0 0
  %243 = vmatpush1.bf16.xpose.msra.mxu0 0
  %244 = vmatprep.subr.bf16.mxu0 0
  %245 = vmatpush1.bf16.xpose.msra.mxu0 0
  %246 = vmatprep.subr.bf16.mxu0 0
  %247 = vmatpush1.bf16.xpose.msra.mxu0 0
  %248 = vmatprep.subr.bf16.mxu0 0
  %249 = vmatpush1.bf16.xpose.msra.mxu0 %v232
  %250 = vmatprep.subr.bf16.mxu0 0
  %251 = vmatpush2.bf16.xpose.msra.mxu0 0
  %252 = vmatprep.subr.bf16.mxu0 0
  %253 = vmatpush2.bf16.xpose.msra.mxu0 0
  %254 = vmatprep.subr.bf16.mxu0 0
  %255 = vmatpush2.bf16.xpose.msra.mxu0 0
  %256 = vmatprep.subr.bf16.mxu0 0
  %257 = vmatpush2.bf16.xpose.msra.mxu0 0
  %258 = vmatprep.subr.bf16.mxu0 0
  %259 = vmatpush2.bf16.xpose.msra.mxu0 0
  %260 = vmatprep.subr.bf16.mxu0 0
  %261 = vmatpush2.bf16.xpose.msra.mxu0 0
  %262 = vmatprep.subr.bf16.mxu0 0
  %263 = vmatpush2.bf16.xpose.msra.mxu0 0
  %264 = vmatprep.subr.bf16.mxu0 0
  %265 = vmatpush2.bf16.xpose.msra.mxu0 0
  %266 = vmatprep.mubr.bf16.mxu0 0
  %267 = vmatmul.mubr.bf16.gmra.mxu0 %v229
  %v268 = vpop.f32.mrf.mxu0
  %v269 = vadd.f32 0.0, %v268
  %v270 = vpop.f32.mrf.mxu0
  %v271 = vpop.f32.mrf.mxu0
  %v272 = vadd.f32 0.0, %v271
  %v273 = vpop.f32.mrf.mxu0
  %274 = vdwg.mxu0
  %v276 = vsel %vm133, %v104, 0
  %v279 = vsel %vm133, %v128, 0
  %281 = vmatprep.subr.bf16.mxu0 0
  %282 = vmatpush1.bf16.xpose.msra.mxu0 0
  %283 = vmatprep.subr.bf16.mxu0 0
  %284 = vmatpush1.bf16.xpose.msra.mxu0 0
  %285 = vmatprep.subr.bf16.mxu0 0
  %286 = vmatpush1.bf16.xpose.msra.mxu0 0
  %287 = vmatprep.subr.bf16.mxu0 0
  %288 = vmatpush1.bf16.xpose.msra.mxu0 0
  %289 = vmatprep.subr.bf16.mxu0 0
  %290 = vmatpush1.bf16.xpose.msra.mxu0 0
  %291 = vmatprep.subr.bf16.mxu0 0
  %292 = vmatpush1.bf16.xpose.msra.mxu0 0
  %293 = vmatprep.subr.bf16.mxu0 0
  %294 = vmatpush1.bf16.xpose.msra.mxu0 0
  %295 = vmatprep.subr.bf16.mxu0 0
  %296 = vmatpush1.bf16.xpose.msra.mxu0 %v279
  %297 = vmatprep.subr.bf16.mxu0 0
  %298 = vmatpush2.bf16.xpose.msra.mxu0 0
  %299 = vmatprep.subr.bf16.mxu0 0
  %300 = vmatpush2.bf16.xpose.msra.mxu0 0
  %301 = vmatprep.subr.bf16.mxu0 0
  %302 = vmatpush2.bf16.xpose.msra.mxu0 0
  %303 = vmatprep.subr.bf16.mxu0 0
  %304 = vmatpush2.bf16.xpose.msra.mxu0 0
  %305 = vmatprep.subr.bf16.mxu0 0
  %306 = vmatpush2.bf16.xpose.msra.mxu0 0
  %307 = vmatprep.subr.bf16.mxu0 0
  %308 = vmatpush2.bf16.xpose.msra.mxu0 0
  %309 = vmatprep.subr.bf16.mxu0 0
  %310 = vmatpush2.bf16.xpose.msra.mxu0 0
  %311 = vmatprep.subr.bf16.mxu0 0
  %312 = vmatpush2.bf16.xpose.msra.mxu0 0
  %313 = vmatprep.mubr.bf16.mxu0 0
  %314 = vmatmul.mubr.bf16.gmra.mxu0 %v276
  %v315 = vpop.f32.mrf.mxu0
  %v316 = vadd.f32 0.0, %v315
  %v317 = vpop.f32.mrf.mxu0
  %v318 = vpop.f32.mrf.mxu0
  %v319 = vadd.f32 0.0, %v318
  %v320 = vpop.f32.mrf.mxu0
  %321 = vdwg.mxu0
  %v323 = vsel %vm133, %v105, 0
  %v326 = vsel %vm133, %v129, 0
  %328 = vmatprep.subr.bf16.mxu0 0
  %329 = vmatpush1.bf16.xpose.msra.mxu0 0
  %330 = vmatprep.subr.bf16.mxu0 0
  %331 = vmatpush1.bf16.xpose.msra.mxu0 0
  %332 = vmatprep.subr.bf16.mxu0 0
  %333 = vmatpush1.bf16.xpose.msra.mxu0 0
  %334 = vmatprep.subr.bf16.mxu0 0
  %335 = vmatpush1.bf16.xpose.msra.mxu0 0
  %336 = vmatprep.subr.bf16.mxu0 0
  %337 = vmatpush1.bf16.xpose.msra.mxu0 0
  %338 = vmatprep.subr.bf16.mxu0 0
  %339 = vmatpush1.bf16.xpose.msra.mxu0 0
  %340 = vmatprep.subr.bf16.mxu0 0
  %341 = vmatpush1.bf16.xpose.msra.mxu0 0
  %342 = vmatprep.subr.bf16.mxu0 0
  %343 = vmatpush1.bf16.xpose.msra.mxu0 %v326
  %344 = vmatprep.subr.bf16.mxu0 0
  %345 = vmatpush2.bf16.xpose.msra.mxu0 0
  %346 = vmatprep.subr.bf16.mxu0 0
  %347 = vmatpush2.bf16.xpose.msra.mxu0 0
  %348 = vmatprep.subr.bf16.mxu0 0
  %349 = vmatpush2.bf16.xpose.msra.mxu0 0
  %350 = vmatprep.subr.bf16.mxu0 0
  %351 = vmatpush2.bf16.xpose.msra.mxu0 0
  %352 = vmatprep.subr.bf16.mxu0 0
  %353 = vmatpush2.bf16.xpose.msra.mxu0 0
  %354 = vmatprep.subr.bf16.mxu0 0
  %355 = vmatpush2.bf16.xpose.msra.mxu0 0
  %356 = vmatprep.subr.bf16.mxu0 0
  %357 = vmatpush2.bf16.xpose.msra.mxu0 0
  %358 = vmatprep.subr.bf16.mxu0 0
  %359 = vmatpush2.bf16.xpose.msra.mxu0 0
  %360 = vmatprep.mubr.bf16.mxu0 0
  %361 = vmatmul.mubr.bf16.gmra.mxu0 %v323
  %v362 = vpop.f32.mrf.mxu0
  %v363 = vadd.f32 0.0, %v362
  %v364 = vpop.f32.mrf.mxu0
  %v365 = vpop.f32.mrf.mxu0
  %v366 = vadd.f32 0.0, %v365
  %v367 = vpop.f32.mrf.mxu0
  %368 = vdwg.mxu0
  %v370 = vsel %vm133, %v106, 0
  %v373 = vsel %vm133, %v130, 0
  %375 = vmatprep.subr.bf16.mxu0 0
  %376 = vmatpush1.bf16.xpose.msra.mxu0 0
  %377 = vmatprep.subr.bf16.mxu0 0
  %378 = vmatpush1.bf16.xpose.msra.mxu0 0
  %379 = vmatprep.subr.bf16.mxu0 0
  %380 = vmatpush1.bf16.xpose.msra.mxu0 0
  %381 = vmatprep.subr.bf16.mxu0 0
  %382 = vmatpush1.bf16.xpose.msra.mxu0 0
  %383 = vmatprep.subr.bf16.mxu0 0
  %384 = vmatpush1.bf16.xpose.msra.mxu0 0
  %385 = vmatprep.subr.bf16.mxu0 0
  %386 = vmatpush1.bf16.xpose.msra.mxu0 0
  %387 = vmatprep.subr.bf16.mxu0 0
  %388 = vmatpush1.bf16.xpose.msra.mxu0 0
  %389 = vmatprep.subr.bf16.mxu0 0
  %390 = vmatpush1.bf16.xpose.msra.mxu0 %v373
  %391 = vmatprep.subr.bf16.mxu0 0
  %392 = vmatpush2.bf16.xpose.msra.mxu0 0
  %393 = vmatprep.subr.bf16.mxu0 0
  %394 = vmatpush2.bf16.xpose.msra.mxu0 0
  %395 = vmatprep.subr.bf16.mxu0 0
  %396 = vmatpush2.bf16.xpose.msra.mxu0 0
  %397 = vmatprep.subr.bf16.mxu0 0
  %398 = vmatpush2.bf16.xpose.msra.mxu0 0
  %399 = vmatprep.subr.bf16.mxu0 0
  %400 = vmatpush2.bf16.xpose.msra.mxu0 0
  %401 = vmatprep.subr.bf16.mxu0 0
  %402 = vmatpush2.bf16.xpose.msra.mxu0 0
  %403 = vmatprep.subr.bf16.mxu0 0
  %404 = vmatpush2.bf16.xpose.msra.mxu0 0
  %405 = vmatprep.subr.bf16.mxu0 0
  %406 = vmatpush2.bf16.xpose.msra.mxu0 0
  %407 = vmatprep.mubr.bf16.mxu0 0
  %408 = vmatmul.mubr.bf16.gmra.mxu0 %v370
  %v409 = vpop.f32.mrf.mxu0
  %v410 = vadd.f32 0.0, %v409
  %v411 = vpop.f32.mrf.mxu0
  %v412 = vpop.f32.mrf.mxu0
  %v413 = vadd.f32 0.0, %v412
  %v414 = vpop.f32.mrf.mxu0
  %415 = vdwg.mxu0
  %v417 = vsel %vm133, %v107, 0
  %v420 = vsel %vm133, %v131, 0
  %422 = vmatprep.subr.bf16.mxu0 0
  %423 = vmatpush1.bf16.xpose.msra.mxu0 0
  %424 = vmatprep.subr.bf16.mxu0 0
  %425 = vmatpush1.bf16.xpose.msra.mxu0 0
  %426 = vmatprep.subr.bf16.mxu0 0
  %427 = vmatpush1.bf16.xpose.msra.mxu0 0
  %428 = vmatprep.subr.bf16.mxu0 0
  %429 = vmatpush1.bf16.xpose.msra.mxu0 0
  %430 = vmatprep.subr.bf16.mxu0 0
  %431 = vmatpush1.bf16.xpose.msra.mxu0 0
  %432 = vmatprep.subr.bf16.mxu0 0
  %433 = vmatpush1.bf16.xpose.msra.mxu0 0
  %434 = vmatprep.subr.bf16.mxu0 0
  %435 = vmatpush1.bf16.xpose.msra.mxu0 0
  %436 = vmatprep.subr.bf16.mxu0 0
  %437 = vmatpush1.bf16.xpose.msra.mxu0 %v420
  %438 = vmatprep.subr.bf16.mxu0 0
  %439 = vmatpush2.bf16.xpose.msra.mxu0 0
  %440 = vmatprep.subr.bf16.mxu0 0
  %441 = vmatpush2.bf16.xpose.msra.mxu0 0
  %442 = vmatprep.subr.bf16.mxu0 0
  %443 = vmatpush2.bf16.xpose.msra.mxu0 0
  %444 = vmatprep.subr.bf16.mxu0 0
  %445 = vmatpush2.bf16.xpose.msra.mxu0 0
  %446 = vmatprep.subr.bf16.mxu0 0
  %447 = vmatpush2.bf16.xpose.msra.mxu0 0
  %448 = vmatprep.subr.bf16.mxu0 0
  %449 = vmatpush2.bf16.xpose.msra.mxu0 0
  %450 = vmatprep.subr.bf16.mxu0 0
  %451 = vmatpush2.bf16.xpose.msra.mxu0 0
  %452 = vmatprep.subr.bf16.mxu0 0
  %453 = vmatpush2.bf16.xpose.msra.mxu0 0
  %454 = vmatprep.mubr.bf16.mxu0 0
  %455 = vmatmul.mubr.bf16.gmra.mxu0 %v417
  %v456 = vpop.f32.mrf.mxu0
  %v457 = vadd.f32 0.0, %v456
  %v458 = vpop.f32.mrf.mxu0
  %v459 = vpop.f32.mrf.mxu0
  %v460 = vadd.f32 0.0, %v459
  %v461 = vpop.f32.mrf.mxu0
  %462 = vdwg.mxu0
  %v464 = vsel %vm133, %v108, 0
  %v467 = vsel %vm133, %v132, 0
  %469 = vmatprep.subr.bf16.mxu0 0
  %470 = vmatpush1.bf16.xpose.msra.mxu0 0
  %471 = vmatprep.subr.bf16.mxu0 0
  %472 = vmatpush1.bf16.xpose.msra.mxu0 0
  %473 = vmatprep.subr.bf16.mxu0 0
  %474 = vmatpush1.bf16.xpose.msra.mxu0 0
  %475 = vmatprep.subr.bf16.mxu0 0
  %476 = vmatpush1.bf16.xpose.msra.mxu0 0
  %477 = vmatprep.subr.bf16.mxu0 0
  %478 = vmatpush1.bf16.xpose.msra.mxu0 0
  %479 = vmatprep.subr.bf16.mxu0 0
  %480 = vmatpush1.bf16.xpose.msra.mxu0 0
  %481 = vmatprep.subr.bf16.mxu0 0
  %482 = vmatpush1.bf16.xpose.msra.mxu0 0
  %483 = vmatprep.subr.bf16.mxu0 0
  %484 = vmatpush1.bf16.xpose.msra.mxu0 %v467
  %485 = vmatprep.subr.bf16.mxu0 0
  %486 = vmatpush2.bf16.xpose.msra.mxu0 0
  %487 = vmatprep.subr.bf16.mxu0 0
  %488 = vmatpush2.bf16.xpose.msra.mxu0 0
  %489 = vmatprep.subr.bf16.mxu0 0
  %490 = vmatpush2.bf16.xpose.msra.mxu0 0
  %491 = vmatprep.subr.bf16.mxu0 0
  %492 = vmatpush2.bf16.xpose.msra.mxu0 0
  %493 = vmatprep.subr.bf16.mxu0 0
  %494 = vmatpush2.bf16.xpose.msra.mxu0 0
  %495 = vmatprep.subr.bf16.mxu0 0
  %496 = vmatpush2.bf16.xpose.msra.mxu0 0
  %497 = vmatprep.subr.bf16.mxu0 0
  %498 = vmatpush2.bf16.xpose.msra.mxu0 0
  %499 = vmatprep.subr.bf16.mxu0 0
  %500 = vmatpush2.bf16.xpose.msra.mxu0 0
  %501 = vmatprep.mubr.bf16.mxu0 0
  %502 = vmatmul.mubr.bf16.gmra.mxu0 %v464
  %v503 = vpop.f32.mrf.mxu0
  %v504 = vadd.f32 0.0, %v503
  %v505 = vpop.f32.mrf.mxu0
  %v506 = vpop.f32.mrf.mxu0
  %v507 = vadd.f32 0.0, %v506
  %v508 = vpop.f32.mrf.mxu0
  %509 = vdwg.mxu0
  %s510 = smul.u32 0, 16
  %v511 = vlaneseq
  %v512 = vand.u32 %v511, 127
  %v513 = vstv %s510
  %v514 = vadd.s32 %v513, %v512
  %vm515 = vcmp.lt.s32.totalorder %v514, 16
  %v516 = vsel %vm515, %v175, -1e+30
  %v517 = vsel %vm515, %v178, -1e+30
  %v518 = vsel %vm515, %v222, -1e+30
  %v519 = vsel %vm515, %v225, -1e+30
  %v520 = vsel %vm515, %v269, -1e+30
  %v521 = vsel %vm515, %v272, -1e+30
  %v522 = vsel %vm515, %v316, -1e+30
  %v523 = vsel %vm515, %v319, -1e+30
  %v524 = vsel %vm515, %v363, -1e+30
  %v525 = vsel %vm515, %v366, -1e+30
  %v526 = vsel %vm515, %v410, -1e+30
  %v527 = vsel %vm515, %v413, -1e+30
  %v528 = vsel %vm515, %v457, -1e+30
  %v529 = vsel %vm515, %v460, -1e+30
  %v530 = vsel %vm515, %v504, -1e+30
  %v531 = vsel %vm515, %v507, -1e+30
  %v532 = vld [vmem:[#allocation2] sm:$0xff]
  %v533 = vld [vmem:[#allocation2 + $0x8] sm:$0xff]
  %v534 = vld [vmem:[#allocation2 + $0x10] sm:$0xff]
  %v535 = vld [vmem:[#allocation2 + $0x18] sm:$0xff]
  %v536 = vld [vmem:[#allocation2 + $0x20] sm:$0xff]
  %v537 = vld [vmem:[#allocation2 + $0x28] sm:$0xff]
  %v538 = vld [vmem:[#allocation2 + $0x30] sm:$0xff]
  %v539 = vld [vmem:[#allocation2 + $0x38] sm:$0xff]
  %v540 = vld [vmem:[#allocation2 + $0x40] sm:$0xff]
  %v541 = vld [vmem:[#allocation2 + $0x48] sm:$0xff]
  %v542 = vld [vmem:[#allocation2 + $0x50] sm:$0xff]
  %v543 = vld [vmem:[#allocation2 + $0x58] sm:$0xff]
  %v544 = vld [vmem:[#allocation2 + $0x60] sm:$0xff]
  %v545 = vld [vmem:[#allocation2 + $0x68] sm:$0xff]
  %v546 = vld [vmem:[#allocation2 + $0x70] sm:$0xff]
  %v547 = vld [vmem:[#allocation2 + $0x78] sm:$0xff]
  %v548 = vsel %vm133, %v516, -inf
  %549 = vmax.xlane.f32.xlu0 %v548
  %v550 = vpop.xlane.xlu0 %549
  %v551 = vsel %vm133, %v517, -inf
  %552 = vmax.xlane.f32.xlu0 %v551
  %v553 = vpop.xlane.xlu0 %552
  %v554 = vsel %vm133, %v518, -inf
  %555 = vmax.xlane.f32.xlu0 %v554
  %v556 = vpop.xlane.xlu0 %555
  %v557 = vsel %vm133, %v519, -inf
  %558 = vmax.xlane.f32.xlu0 %v557
  %v559 = vpop.xlane.xlu0 %558
  %v560 = vsel %vm133, %v520, -inf
  %561 = vmax.xlane.f32.xlu0 %v560
  %v562 = vpop.xlane.xlu0 %561
  %v563 = vsel %vm133, %v521, -inf
  %564 = vmax.xlane.f32.xlu0 %v563
  %v565 = vpop.xlane.xlu0 %564
  %v566 = vsel %vm133, %v522, -inf
  %567 = vmax.xlane.f32.xlu0 %v566
  %v568 = vpop.xlane.xlu0 %567
  %v569 = vsel %vm133, %v523, -inf
  %570 = vmax.xlane.f32.xlu0 %v569
  %v571 = vpop.xlane.xlu0 %570
  %v572 = vsel %vm133, %v524, -inf
  %573 = vmax.xlane.f32.xlu0 %v572
  %v574 = vpop.xlane.xlu0 %573
  %v575 = vsel %vm133, %v525, -inf
  %576 = vmax.xlane.f32.xlu0 %v575
  %v577 = vpop.xlane.xlu0 %576
  %v578 = vsel %vm133, %v526, -inf
  %579 = vmax.xlane.f32.xlu0 %v578
  %v580 = vpop.xlane.xlu0 %579
  %v581 = vsel %vm133, %v527, -inf
  %582 = vmax.xlane.f32.xlu0 %v581
  %v583 = vpop.xlane.xlu0 %582
  %v584 = vsel %vm133, %v528, -inf
  %585 = vmax.xlane.f32.xlu0 %v584
  %v586 = vpop.xlane.xlu0 %585
  %v587 = vsel %vm133, %v529, -inf
  %588 = vmax.xlane.f32.xlu0 %v587
  %v589 = vpop.xlane.xlu0 %588
  %v590 = vsel %vm133, %v530, -inf
  %591 = vmax.xlane.f32.xlu0 %v590
  %v592 = vpop.xlane.xlu0 %591
  %v593 = vsel %vm133, %v531, -inf
  %594 = vmax.xlane.f32.xlu0 %v593
  %v595 = vpop.xlane.xlu0 %594
  %v596 = vmax.f32 %v532, %v550
  %v597 = vmax.f32 %v533, %v553
  %v598 = vmax.f32 %v534, %v556
  %v599 = vmax.f32 %v535, %v559
  %v600 = vmax.f32 %v536, %v562
  %v601 = vmax.f32 %v537, %v565
  %v602 = vmax.f32 %v538, %v568
  %v603 = vmax.f32 %v539, %v571
  %v604 = vmax.f32 %v540, %v574
  %v605 = vmax.f32 %v541, %v577
  %v606 = vmax.f32 %v542, %v580
  %v607 = vmax.f32 %v543, %v583
  %v608 = vmax.f32 %v544, %v586
  %v609 = vmax.f32 %v545, %v589
  %v610 = vmax.f32 %v546, %v592
  %v611 = vmax.f32 %v547, %v595
  %v612 = vsub.f32 %v532, %v596
  %v613 = vsub.f32 %v533, %v597
  %v614 = vsub.f32 %v534, %v598
  %v615 = vsub.f32 %v535, %v599
  %v616 = vsub.f32 %v536, %v600
  %v617 = vsub.f32 %v537, %v601
  %v618 = vsub.f32 %v538, %v602
  %v619 = vsub.f32 %v539, %v603
  %v620 = vsub.f32 %v540, %v604
  %v621 = vsub.f32 %v541, %v605
  %v622 = vsub.f32 %v542, %v606
  %v623 = vsub.f32 %v543, %v607
  %v624 = vsub.f32 %v544, %v608
  %v625 = vsub.f32 %v545, %v609
  %v626 = vsub.f32 %v546, %v610
  %v627 = vsub.f32 %v547, %v611
  %v628 = vmul.f32 %v612, 1.442695
  %v629 = vpow.pop %v628
  %v630 = vmul.f32 %v613, 1.442695
  %v631 = vpow.pop %v630
  %v632 = vmul.f32 %v614, 1.442695
  %v633 = vpow.pop %v632
  %v634 = vmul.f32 %v615, 1.442695
  %v635 = vpow.pop %v634
  %v636 = vmul.f32 %v616, 1.442695
  %v637 = vpow.pop %v636
  %v638 = vmul.f32 %v617, 1.442695
  %v639 = vpow.pop %v638
  %v640 = vmul.f32 %v618, 1.442695
  %v641 = vpow.pop %v640
  %v642 = vmul.f32 %v619, 1.442695
  %v643 = vpow.pop %v642
  %v644 = vmul.f32 %v620, 1.442695
  %v645 = vpow.pop %v644
  %v646 = vmul.f32 %v621, 1.442695
  %v647 = vpow.pop %v646
  %v648 = vmul.f32 %v622, 1.442695
  %v649 = vpow.pop %v648
  %v650 = vmul.f32 %v623, 1.442695
  %v651 = vpow.pop %v650
  %v652 = vmul.f32 %v624, 1.442695
  %v653 = vpow.pop %v652
  %v654 = vmul.f32 %v625, 1.442695
  %v655 = vpow.pop %v654
  %v656 = vmul.f32 %v626, 1.442695
  %v657 = vpow.pop %v656
  %v658 = vmul.f32 %v627, 1.442695
  %v659 = vpow.pop %v658
  %661 = vset.pattern.permute.xlu0 0
  %662 = vperm.xlu0 %661, %v596
  %v663 = vpop.permute.xlu0 %662
  %666 = vset.pattern.permute.xlu0 0
  %667 = vperm.xlu0 %666, %v597
  %v668 = vpop.permute.xlu0 %667
  %671 = vset.pattern.permute.xlu0 0
  %672 = vperm.xlu0 %671, %v598
  %v673 = vpop.permute.xlu0 %672
  %676 = vset.pattern.permute.xlu0 0
  %677 = vperm.xlu0 %676, %v599
  %v678 = vpop.permute.xlu0 %677
  %681 = vset.pattern.permute.xlu0 0
  %682 = vperm.xlu0 %681, %v600
  %v683 = vpop.permute.xlu0 %682
  %686 = vset.pattern.permute.xlu0 0
  %687 = vperm.xlu0 %686, %v601
  %v688 = vpop.permute.xlu0 %687
  %691 = vset.pattern.permute.xlu0 0
  %692 = vperm.xlu0 %691, %v602
  %v693 = vpop.permute.xlu0 %692
  %696 = vset.pattern.permute.xlu0 0
  %697 = vperm.xlu0 %696, %v603
  %v698 = vpop.permute.xlu0 %697
  %701 = vset.pattern.permute.xlu0 0
  %702 = vperm.xlu0 %701, %v604
  %v703 = vpop.permute.xlu0 %702
  %706 = vset.pattern.permute.xlu0 0
  %707 = vperm.xlu0 %706, %v605
  %v708 = vpop.permute.xlu0 %707
  %711 = vset.pattern.permute.xlu0 0
  %712 = vperm.xlu0 %711, %v606
  %v713 = vpop.permute.xlu0 %712
  %716 = vset.pattern.permute.xlu0 0
  %717 = vperm.xlu0 %716, %v607
  %v718 = vpop.permute.xlu0 %717
  %721 = vset.pattern.permute.xlu0 0
  %722 = vperm.xlu0 %721, %v608
  %v723 = vpop.permute.xlu0 %722
  %726 = vset.pattern.permute.xlu0 0
  %727 = vperm.xlu0 %726, %v609
  %v728 = vpop.permute.xlu0 %727
  %731 = vset.pattern.permute.xlu0 0
  %732 = vperm.xlu0 %731, %v610
  %v733 = vpop.permute.xlu0 %732
  %736 = vset.pattern.permute.xlu0 0
  %737 = vperm.xlu0 %736, %v611
  %v738 = vpop.permute.xlu0 %737
  %v740 = vsub.f32 %v516, %v663
  %v741 = vsub.f32 %v517, %v668
  %v742 = vsub.f32 %v518, %v673
  %v743 = vsub.f32 %v519, %v678
  %v744 = vsub.f32 %v520, %v683
  %v745 = vsub.f32 %v521, %v688
  %v746 = vsub.f32 %v522, %v693
  %v747 = vsub.f32 %v523, %v698
  %v748 = vsub.f32 %v524, %v703
  %v749 = vsub.f32 %v525, %v708
  %v750 = vsub.f32 %v526, %v713
  %v751 = vsub.f32 %v527, %v718
  %v752 = vsub.f32 %v528, %v723
  %v753 = vsub.f32 %v529, %v728
  %v754 = vsub.f32 %v530, %v733
  %v755 = vsub.f32 %v531, %v738
  %v756 = vmul.f32 %v740, 1.442695
  %v757 = vpow.pop %v756
  %v758 = vmul.f32 %v741, 1.442695
  %v759 = vpow.pop %v758
  %v760 = vmul.f32 %v742, 1.442695
  %v761 = vpow.pop %v760
  %v762 = vmul.f32 %v743, 1.442695
  %v763 = vpow.pop %v762
  %v764 = vmul.f32 %v744, 1.442695
  %v765 = vpow.pop %v764
  %v766 = vmul.f32 %v745, 1.442695
  %v767 = vpow.pop %v766
  %v768 = vmul.f32 %v746, 1.442695
  %v769 = vpow.pop %v768
  %v770 = vmul.f32 %v747, 1.442695
  %v771 = vpow.pop %v770
  %v772 = vmul.f32 %v748, 1.442695
  %v773 = vpow.pop %v772
  %v774 = vmul.f32 %v749, 1.442695
  %v775 = vpow.pop %v774
  %v776 = vmul.f32 %v750, 1.442695
  %v777 = vpow.pop %v776
  %v778 = vmul.f32 %v751, 1.442695
  %v779 = vpow.pop %v778
  %v780 = vmul.f32 %v752, 1.442695
  %v781 = vpow.pop %v780
  %v782 = vmul.f32 %v753, 1.442695
  %v783 = vpow.pop %v782
  %v784 = vmul.f32 %v754, 1.442695
  %v785 = vpow.pop %v784
  %v786 = vmul.f32 %v755, 1.442695
  %v787 = vpow.pop %v786
  %v788 = vld [vmem:[#allocation3] sm:$0xff]
  %v789 = vld [vmem:[#allocation3 + $0x8] sm:$0xff]
  %v790 = vld [vmem:[#allocation3 + $0x10] sm:$0xff]
  %v791 = vld [vmem:[#allocation3 + $0x18] sm:$0xff]
  %v792 = vld [vmem:[#allocation3 + $0x20] sm:$0xff]
  %v793 = vld [vmem:[#allocation3 + $0x28] sm:$0xff]
  %v794 = vld [vmem:[#allocation3 + $0x30] sm:$0xff]
  %v795 = vld [vmem:[#allocation3 + $0x38] sm:$0xff]
  %v796 = vld [vmem:[#allocation3 + $0x40] sm:$0xff]
  %v797 = vld [vmem:[#allocation3 + $0x48] sm:$0xff]
  %v798 = vld [vmem:[#allocation3 + $0x50] sm:$0xff]
  %v799 = vld [vmem:[#allocation3 + $0x58] sm:$0xff]
  %v800 = vld [vmem:[#allocation3 + $0x60] sm:$0xff]
  %v801 = vld [vmem:[#allocation3 + $0x68] sm:$0xff]
  %v802 = vld [vmem:[#allocation3 + $0x70] sm:$0xff]
  %v803 = vld [vmem:[#allocation3 + $0x78] sm:$0xff]
  %v804 = vmul.f32 %v629, %v788
  %v805 = vmul.f32 %v631, %v789
  %v806 = vmul.f32 %v633, %v790
  %v807 = vmul.f32 %v635, %v791
  %v808 = vmul.f32 %v637, %v792
  %v809 = vmul.f32 %v639, %v793
  %v810 = vmul.f32 %v641, %v794
  %v811 = vmul.f32 %v643, %v795
  %v812 = vmul.f32 %v645, %v796
  %v813 = vmul.f32 %v647, %v797
  %v814 = vmul.f32 %v649, %v798
  %v815 = vmul.f32 %v651, %v799
  %v816 = vmul.f32 %v653, %v800
  %v817 = vmul.f32 %v655, %v801
  %v818 = vmul.f32 %v657, %v802
  %v819 = vmul.f32 %v659, %v803
  %v820 = vsel %vm133, %v757, 0.0
  %821 = vadd.xlane.f32.xlu0 %v820
  %v822 = vpop.xlane.xlu0 %821
  %v823 = vsel %vm133, %v759, 0.0
  %824 = vadd.xlane.f32.xlu0 %v823
  %v825 = vpop.xlane.xlu0 %824
  %v826 = vsel %vm133, %v761, 0.0
  %827 = vadd.xlane.f32.xlu0 %v826
  %v828 = vpop.xlane.xlu0 %827
  %v829 = vsel %vm133, %v763, 0.0
  %830 = vadd.xlane.f32.xlu0 %v829
  %v831 = vpop.xlane.xlu0 %830
  %v832 = vsel %vm133, %v765, 0.0
  %833 = vadd.xlane.f32.xlu0 %v832
  %v834 = vpop.xlane.xlu0 %833
  %v835 = vsel %vm133, %v767, 0.0
  %836 = vadd.xlane.f32.xlu0 %v835
  %v837 = vpop.xlane.xlu0 %836
  %v838 = vsel %vm133, %v769, 0.0
  %839 = vadd.xlane.f32.xlu0 %v838
  %v840 = vpop.xlane.xlu0 %839
  %v841 = vsel %vm133, %v771, 0.0
  %842 = vadd.xlane.f32.xlu0 %v841
  %v843 = vpop.xlane.xlu0 %842
  %v844 = vsel %vm133, %v773, 0.0
  %845 = vadd.xlane.f32.xlu0 %v844
  %v846 = vpop.xlane.xlu0 %845
  %v847 = vsel %vm133, %v775, 0.0
  %848 = vadd.xlane.f32.xlu0 %v847
  %v849 = vpop.xlane.xlu0 %848
  %v850 = vsel %vm133, %v777, 0.0
  %851 = vadd.xlane.f32.xlu0 %v850
  %v852 = vpop.xlane.xlu0 %851
  %v853 = vsel %vm133, %v779, 0.0
  %854 = vadd.xlane.f32.xlu0 %v853
  %v855 = vpop.xlane.xlu0 %854
  %v856 = vsel %vm133, %v781, 0.0
  %857 = vadd.xlane.f32.xlu0 %v856
  %v858 = vpop.xlane.xlu0 %857
  %v859 = vsel %vm133, %v783, 0.0
  %860 = vadd.xlane.f32.xlu0 %v859
  %v861 = vpop.xlane.xlu0 %860
  %v862 = vsel %vm133, %v785, 0.0
  %863 = vadd.xlane.f32.xlu0 %v862
  %v864 = vpop.xlane.xlu0 %863
  %v865 = vsel %vm133, %v787, 0.0
  %866 = vadd.xlane.f32.xlu0 %v865
  %v867 = vpop.xlane.xlu0 %866
  %v868 = vadd.f32 %v804, %v822
  %v869 = vadd.f32 %v805, %v825
  %v870 = vadd.f32 %v806, %v828
  %v871 = vadd.f32 %v807, %v831
  %v872 = vadd.f32 %v808, %v834
  %v873 = vadd.f32 %v809, %v837
  %v874 = vadd.f32 %v810, %v840
  %v875 = vadd.f32 %v811, %v843
  %v876 = vadd.f32 %v812, %v846
  %v877 = vadd.f32 %v813, %v849
  %v878 = vadd.f32 %v814, %v852
  %v879 = vadd.f32 %v815, %v855
  %v880 = vadd.f32 %v816, %v858
  %v881 = vadd.f32 %v817, %v861
  %v882 = vadd.f32 %v818, %v864
  %v883 = vadd.f32 %v819, %v867
  %vm884 = vcmask 7168
  %885 = vst.msk [vmem:[#allocation3] sm:$0xff] %vm884, %v868
  %886 = vst.msk [vmem:[#allocation3 + $0x8] sm:$0xff] %vm884, %v869
  %887 = vst.msk [vmem:[#allocation3 + $0x10] sm:$0xff] %vm884, %v870
  %888 = vst.msk [vmem:[#allocation3 + $0x18] sm:$0xff] %vm884, %v871
  %889 = vst.msk [vmem:[#allocation3 + $0x20] sm:$0xff] %vm884, %v872
  %890 = vst.msk [vmem:[#allocation3 + $0x28] sm:$0xff] %vm884, %v873
  %891 = vst.msk [vmem:[#allocation3 + $0x30] sm:$0xff] %vm884, %v874
  %892 = vst.msk [vmem:[#allocation3 + $0x38] sm:$0xff] %vm884, %v875
  %893 = vst.msk [vmem:[#allocation3 + $0x40] sm:$0xff] %vm884, %v876
  %894 = vst.msk [vmem:[#allocation3 + $0x48] sm:$0xff] %vm884, %v877
  %895 = vst.msk [vmem:[#allocation3 + $0x50] sm:$0xff] %vm884, %v878
  %896 = vst.msk [vmem:[#allocation3 + $0x58] sm:$0xff] %vm884, %v879
  %897 = vst.msk [vmem:[#allocation3 + $0x60] sm:$0xff] %vm884, %v880
  %898 = vst.msk [vmem:[#allocation3 + $0x68] sm:$0xff] %vm884, %v881
  %899 = vst.msk [vmem:[#allocation3 + $0x70] sm:$0xff] %vm884, %v882
  %900 = vst.msk [vmem:[#allocation3 + $0x78] sm:$0xff] %vm884, %v883
  %v901 = vld [vmem:[#allocation4] sm:$0xff]
  %v902 = vld [vmem:[#allocation4 + $0x8] sm:$0xff]
  %v903 = vld [vmem:[#allocation4 + $0x10] sm:$0xff]
  %v904 = vld [vmem:[#allocation4 + $0x18] sm:$0xff]
  %v905 = vld [vmem:[#allocation4 + $0x20] sm:$0xff]
  %v906 = vld [vmem:[#allocation4 + $0x28] sm:$0xff]
  %v907 = vld [vmem:[#allocation4 + $0x30] sm:$0xff]
  %v908 = vld [vmem:[#allocation4 + $0x38] sm:$0xff]
  %v909 = vld [vmem:[#allocation4 + $0x40] sm:$0xff]
  %v910 = vld [vmem:[#allocation4 + $0x48] sm:$0xff]
  %v911 = vld [vmem:[#allocation4 + $0x50] sm:$0xff]
  %v912 = vld [vmem:[#allocation4 + $0x58] sm:$0xff]
  %v913 = vld [vmem:[#allocation4 + $0x60] sm:$0xff]
  %v914 = vld [vmem:[#allocation4 + $0x68] sm:$0xff]
  %v915 = vld [vmem:[#allocation4 + $0x70] sm:$0xff]
  %v916 = vld [vmem:[#allocation4 + $0x78] sm:$0xff]
  %918 = vset.pattern.permute.xlu0 0
  %919 = vperm.xlu0 %918, %v629
  %v920 = vpop.permute.xlu0 %919
  %923 = vset.pattern.permute.xlu0 0
  %924 = vperm.xlu0 %923, %v631
  %v925 = vpop.permute.xlu0 %924
  %928 = vset.pattern.permute.xlu0 0
  %929 = vperm.xlu0 %928, %v633
  %v930 = vpop.permute.xlu0 %929
  %933 = vset.pattern.permute.xlu0 0
  %934 = vperm.xlu0 %933, %v635
  %v935 = vpop.permute.xlu0 %934
  %938 = vset.pattern.permute.xlu0 0
  %939 = vperm.xlu0 %938, %v637
  %v940 = vpop.permute.xlu0 %939
  %943 = vset.pattern.permute.xlu0 0
  %944 = vperm.xlu0 %943, %v639
  %v945 = vpop.permute.xlu0 %944
  %948 = vset.pattern.permute.xlu0 0
  %949 = vperm.xlu0 %948, %v641
  %v950 = vpop.permute.xlu0 %949
  %953 = vset.pattern.permute.xlu0 0
  %954 = vperm.xlu0 %953, %v643
  %v955 = vpop.permute.xlu0 %954
  %958 = vset.pattern.permute.xlu0 0
  %959 = vperm.xlu0 %958, %v645
  %v960 = vpop.permute.xlu0 %959
  %963 = vset.pattern.permute.xlu0 0
  %964 = vperm.xlu0 %963, %v647
  %v965 = vpop.permute.xlu0 %964
  %968 = vset.pattern.permute.xlu0 0
  %969 = vperm.xlu0 %968, %v649
  %v970 = vpop.permute.xlu0 %969
  %973 = vset.pattern.permute.xlu0 0
  %974 = vperm.xlu0 %973, %v651
  %v975 = vpop.permute.xlu0 %974
  %978 = vset.pattern.permute.xlu0 0
  %979 = vperm.xlu0 %978, %v653
  %v980 = vpop.permute.xlu0 %979
  %983 = vset.pattern.permute.xlu0 0
  %984 = vperm.xlu0 %983, %v655
  %v985 = vpop.permute.xlu0 %984
  %988 = vset.pattern.permute.xlu0 0
  %989 = vperm.xlu0 %988, %v657
  %v990 = vpop.permute.xlu0 %989
  %993 = vset.pattern.permute.xlu0 0
  %994 = vperm.xlu0 %993, %v659
  %v995 = vpop.permute.xlu0 %994
  %v997 = vmul.f32 %v920, %v901
  %v998 = vmul.f32 %v925, %v902
  %v999 = vmul.f32 %v930, %v903
  %v1000 = vmul.f32 %v935, %v904
  %v1001 = vmul.f32 %v940, %v905
  %v1002 = vmul.f32 %v945, %v906
  %v1003 = vmul.f32 %v950, %v907
  %v1004 = vmul.f32 %v955, %v908
  %v1005 = vmul.f32 %v960, %v909
  %v1006 = vmul.f32 %v965, %v910
  %v1007 = vmul.f32 %v970, %v911
  %v1008 = vmul.f32 %v975, %v912
  %v1009 = vmul.f32 %v980, %v913
  %v1010 = vmul.f32 %v985, %v914
  %v1011 = vmul.f32 %v990, %v915
  %v1012 = vmul.f32 %v995, %v916
  %v1013 = vpack.c.bf16 %v759, %v757
  %v1014 = vpack.c.bf16 %v763, %v761
  %v1015 = vpack.c.bf16 %v767, %v765
  %v1016 = vpack.c.bf16 %v771, %v769
  %v1017 = vpack.c.bf16 %v775, %v773
  %v1018 = vpack.c.bf16 %v779, %v777
  %v1019 = vpack.c.bf16 %v783, %v781
  %v1020 = vpack.c.bf16 %v787, %v785
  %v1021 = vld [vmem:[%s2] sm:$0xff]
  %v1022 = vld [vmem:[%s2 + $0x8] sm:$0xff]
  %v1023 = vld [vmem:[%s2 + $0x10] sm:$0xff]
  %v1024 = vld [vmem:[%s2 + $0x18] sm:$0xff]
  %v1025 = vld [vmem:[%s2 + $0x20] sm:$0xff]
  %v1026 = vld [vmem:[%s2 + $0x28] sm:$0xff]
  %v1027 = vld [vmem:[%s2 + $0x30] sm:$0xff]
  %v1028 = vld [vmem:[%s2 + $0x38] sm:$0xff]
  %v1029 = vld [vmem:[%s2 + $0x40] sm:$0xff]
  %v1030 = vld [vmem:[%s2 + $0x48] sm:$0xff]
  %v1031 = vld [vmem:[%s2 + $0x50] sm:$0xff]
  %v1032 = vld [vmem:[%s2 + $0x58] sm:$0xff]
  %v1033 = vld [vmem:[%s2 + $0x60] sm:$0xff]
  %v1034 = vld [vmem:[%s2 + $0x68] sm:$0xff]
  %v1035 = vld [vmem:[%s2 + $0x70] sm:$0xff]
  %v1036 = vld [vmem:[%s2 + $0x78] sm:$0xff]
  %v1037 = vpack.c.bf16 %v1022, %v1021
  %v1038 = vpack.c.bf16 %v1024, %v1023
  %v1039 = vpack.c.bf16 %v1026, %v1025
  %v1040 = vpack.c.bf16 %v1028, %v1027
  %v1041 = vpack.c.bf16 %v1030, %v1029
  %v1042 = vpack.c.bf16 %v1032, %v1031
  %v1043 = vpack.c.bf16 %v1034, %v1033
  %v1044 = vpack.c.bf16 %v1036, %v1035
  %v1046 = vsel %vm133, %v1013, 0
  %1048 = vmatprep.subr.bf16.mxu0 0
  %1049 = vmatpush1.bf16.msra.mxu0 0
  %1050 = vmatprep.subr.bf16.mxu0 0
  %1051 = vmatpush1.bf16.msra.mxu0 0
  %1052 = vmatprep.subr.bf16.mxu0 0
  %1053 = vmatpush1.bf16.msra.mxu0 0
  %1054 = vmatprep.subr.bf16.mxu0 0
  %1055 = vmatpush1.bf16.msra.mxu0 0
  %1056 = vmatprep.subr.bf16.mxu0 0
  %1057 = vmatpush1.bf16.msra.mxu0 0
  %1058 = vmatprep.subr.bf16.mxu0 0
  %1059 = vmatpush1.bf16.msra.mxu0 0
  %1060 = vmatprep.subr.bf16.mxu0 0
  %1061 = vmatpush1.bf16.msra.mxu0 0
  %1062 = vmatprep.subr.bf16.mxu0 0
  %1063 = vmatpush1.bf16.msra.mxu0 %v1037
  %1064 = vmatprep.subr.bf16.mxu0 0
  %1065 = vmatpush2.bf16.msra.mxu0 0
  %1066 = vmatprep.subr.bf16.mxu0 0
  %1067 = vmatpush2.bf16.msra.mxu0 0
  %1068 = vmatprep.subr.bf16.mxu0 0
  %1069 = vmatpush2.bf16.msra.mxu0 0
  %1070 = vmatprep.subr.bf16.mxu0 0
  %1071 = vmatpush2.bf16.msra.mxu0 0
  %1072 = vmatprep.subr.bf16.mxu0 0
  %1073 = vmatpush2.bf16.msra.mxu0 0
  %1074 = vmatprep.subr.bf16.mxu0 0
  %1075 = vmatpush2.bf16.msra.mxu0 0
  %1076 = vmatprep.subr.bf16.mxu0 0
  %1077 = vmatpush2.bf16.msra.mxu0 0
  %1078 = vmatprep.subr.bf16.mxu0 0
  %1079 = vmatpush2.bf16.msra.mxu0 0
  %1080 = vmatprep.mubr.bf16.mxu0 0
  %1081 = vmatmul.mubr.bf16.gmra.mxu0 %v1046
  %v1082 = vpop.f32.mrf.mxu0
  %v1083 = vadd.f32 0.0, %v1082
  %v1084 = vpop.f32.mrf.mxu0
  %v1085 = vpop.f32.mrf.mxu0
  %v1086 = vadd.f32 0.0, %v1085
  %v1087 = vpop.f32.mrf.mxu0
  %1088 = vdwg.mxu0
  %v1090 = vsel %vm133, %v1014, 0
  %1092 = vmatprep.subr.bf16.mxu0 0
  %1093 = vmatpush1.bf16.msra.mxu0 0
  %1094 = vmatprep.subr.bf16.mxu0 0
  %1095 = vmatpush1.bf16.msra.mxu0 0
  %1096 = vmatprep.subr.bf16.mxu0 0
  %1097 = vmatpush1.bf16.msra.mxu0 0
  %1098 = vmatprep.subr.bf16.mxu0 0
  %1099 = vmatpush1.bf16.msra.mxu0 0
  %1100 = vmatprep.subr.bf16.mxu0 0
  %1101 = vmatpush1.bf16.msra.mxu0 0
  %1102 = vmatprep.subr.bf16.mxu0 0
  %1103 = vmatpush1.bf16.msra.mxu0 0
  %1104 = vmatprep.subr.bf16.mxu0 0
  %1105 = vmatpush1.bf16.msra.mxu0 0
  %1106 = vmatprep.subr.bf16.mxu0 0
  %1107 = vmatpush1.bf16.msra.mxu0 %v1038
  %1108 = vmatprep.subr.bf16.mxu0 0
  %1109 = vmatpush2.bf16.msra.mxu0 0
  %1110 = vmatprep.subr.bf16.mxu0 0
  %1111 = vmatpush2.bf16.msra.mxu0 0
  %1112 = vmatprep.subr.bf16.mxu0 0
  %1113 = vmatpush2.bf16.msra.mxu0 0
  %1114 = vmatprep.subr.bf16.mxu0 0
  %1115 = vmatpush2.bf16.msra.mxu0 0
  %1116 = vmatprep.subr.bf16.mxu0 0
  %1117 = vmatpush2.bf16.msra.mxu0 0
  %1118 = vmatprep.subr.bf16.mxu0 0
  %1119 = vmatpush2.bf16.msra.mxu0 0
  %1120 = vmatprep.subr.bf16.mxu0 0
  %1121 = vmatpush2.bf16.msra.mxu0 0
  %1122 = vmatprep.subr.bf16.mxu0 0
  %1123 = vmatpush2.bf16.msra.mxu0 0
  %1124 = vmatprep.mubr.bf16.mxu0 0
  %1125 = vmatmul.mubr.bf16.gmra.mxu0 %v1090
  %v1126 = vpop.f32.mrf.mxu0
  %v1127 = vadd.f32 0.0, %v1126
  %v1128 = vpop.f32.mrf.mxu0
  %v1129 = vpop.f32.mrf.mxu0
  %v1130 = vadd.f32 0.0, %v1129
  %v1131 = vpop.f32.mrf.mxu0
  %1132 = vdwg.mxu0
  %v1134 = vsel %vm133, %v1015, 0
  %1136 = vmatprep.subr.bf16.mxu0 0
  %1137 = vmatpush1.bf16.msra.mxu0 0
  %1138 = vmatprep.subr.bf16.mxu0 0
  %1139 = vmatpush1.bf16.msra.mxu0 0
  %1140 = vmatprep.subr.bf16.mxu0 0
  %1141 = vmatpush1.bf16.msra.mxu0 0
  %1142 = vmatprep.subr.bf16.mxu0 0
  %1143 = vmatpush1.bf16.msra.mxu0 0
  %1144 = vmatprep.subr.bf16.mxu0 0
  %1145 = vmatpush1.bf16.msra.mxu0 0
  %1146 = vmatprep.subr.bf16.mxu0 0
  %1147 = vmatpush1.bf16.msra.mxu0 0
  %1148 = vmatprep.subr.bf16.mxu0 0
  %1149 = vmatpush1.bf16.msra.mxu0 0
  %1150 = vmatprep.subr.bf16.mxu0 0
  %1151 = vmatpush1.bf16.msra.mxu0 %v1039
  %1152 = vmatprep.subr.bf16.mxu0 0
  %1153 = vmatpush2.bf16.msra.mxu0 0
  %1154 = vmatprep.subr.bf16.mxu0 0
  %1155 = vmatpush2.bf16.msra.mxu0 0
  %1156 = vmatprep.subr.bf16.mxu0 0
  %1157 = vmatpush2.bf16.msra.mxu0 0
  %1158 = vmatprep.subr.bf16.mxu0 0
  %1159 = vmatpush2.bf16.msra.mxu0 0
  %1160 = vmatprep.subr.bf16.mxu0 0
  %1161 = vmatpush2.bf16.msra.mxu0 0
  %1162 = vmatprep.subr.bf16.mxu0 0
  %1163 = vmatpush2.bf16.msra.mxu0 0
  %1164 = vmatprep.subr.bf16.mxu0 0
  %1165 = vmatpush2.bf16.msra.mxu0 0
  %1166 = vmatprep.subr.bf16.mxu0 0
  %1167 = vmatpush2.bf16.msra.mxu0 0
  %1168 = vmatprep.mubr.bf16.mxu0 0
  %1169 = vmatmul.mubr.bf16.gmra.mxu0 %v1134
  %v1170 = vpop.f32.mrf.mxu0
  %v1171 = vadd.f32 0.0, %v1170
  %v1172 = vpop.f32.mrf.mxu0
  %v1173 = vpop.f32.mrf.mxu0
  %v1174 = vadd.f32 0.0, %v1173
  %v1175 = vpop.f32.mrf.mxu0
  %1176 = vdwg.mxu0
  %v1178 = vsel %vm133, %v1016, 0
  %1180 = vmatprep.subr.bf16.mxu0 0
  %1181 = vmatpush1.bf16.msra.mxu0 0
  %1182 = vmatprep.subr.bf16.mxu0 0
  %1183 = vmatpush1.bf16.msra.mxu0 0
  %1184 = vmatprep.subr.bf16.mxu0 0
  %1185 = vmatpush1.bf16.msra.mxu0 0
  %1186 = vmatprep.subr.bf16.mxu0 0
  %1187 = vmatpush1.bf16.msra.mxu0 0
  %1188 = vmatprep.subr.bf16.mxu0 0
  %1189 = vmatpush1.bf16.msra.mxu0 0
  %1190 = vmatprep.subr.bf16.mxu0 0
  %1191 = vmatpush1.bf16.msra.mxu0 0
  %1192 = vmatprep.subr.bf16.mxu0 0
  %1193 = vmatpush1.bf16.msra.mxu0 0
  %1194 = vmatprep.subr.bf16.mxu0 0
  %1195 = vmatpush1.bf16.msra.mxu0 %v1040
  %1196 = vmatprep.subr.bf16.mxu0 0
  %1197 = vmatpush2.bf16.msra.mxu0 0
  %1198 = vmatprep.subr.bf16.mxu0 0
  %1199 = vmatpush2.bf16.msra.mxu0 0
  %1200 = vmatprep.subr.bf16.mxu0 0
  %1201 = vmatpush2.bf16.msra.mxu0 0
  %1202 = vmatprep.subr.bf16.mxu0 0
  %1203 = vmatpush2.bf16.msra.mxu0 0
  %1204 = vmatprep.subr.bf16.mxu0 0
  %1205 = vmatpush2.bf16.msra.mxu0 0
  %1206 = vmatprep.subr.bf16.mxu0 0
  %1207 = vmatpush2.bf16.msra.mxu0 0
  %1208 = vmatprep.subr.bf16.mxu0 0
  %1209 = vmatpush2.bf16.msra.mxu0 0
  %1210 = vmatprep.subr.bf16.mxu0 0
  %1211 = vmatpush2.bf16.msra.mxu0 0
  %1212 = vmatprep.mubr.bf16.mxu0 0
  %1213 = vmatmul.mubr.bf16.gmra.mxu0 %v1178
  %v1214 = vpop.f32.mrf.mxu0
  %v1215 = vadd.f32 0.0, %v1214
  %v1216 = vpop.f32.mrf.mxu0
  %v1217 = vpop.f32.mrf.mxu0
  %v1218 = vadd.f32 0.0, %v1217
  %v1219 = vpop.f32.mrf.mxu0
  %1220 = vdwg.mxu0
  %v1222 = vsel %vm133, %v1017, 0
  %1224 = vmatprep.subr.bf16.mxu0 0
  %1225 = vmatpush1.bf16.msra.mxu0 0
  %1226 = vmatprep.subr.bf16.mxu0 0
  %1227 = vmatpush1.bf16.msra.mxu0 0
  %1228 = vmatprep.subr.bf16.mxu0 0
  %1229 = vmatpush1.bf16.msra.mxu0 0
  %1230 = vmatprep.subr.bf16.mxu0 0
  %1231 = vmatpush1.bf16.msra.mxu0 0
  %1232 = vmatprep.subr.bf16.mxu0 0
  %1233 = vmatpush1.bf16.msra.mxu0 0
  %1234 = vmatprep.subr.bf16.mxu0 0
  %1235 = vmatpush1.bf16.msra.mxu0 0
  %1236 = vmatprep.subr.bf16.mxu0 0
  %1237 = vmatpush1.bf16.msra.mxu0 0
  %1238 = vmatprep.subr.bf16.mxu0 0
  %1239 = vmatpush1.bf16.msra.mxu0 %v1041
  %1240 = vmatprep.subr.bf16.mxu0 0
  %1241 = vmatpush2.bf16.msra.mxu0 0
  %1242 = vmatprep.subr.bf16.mxu0 0
  %1243 = vmatpush2.bf16.msra.mxu0 0
  %1244 = vmatprep.subr.bf16.mxu0 0
  %1245 = vmatpush2.bf16.msra.mxu0 0
  %1246 = vmatprep.subr.bf16.mxu0 0
  %1247 = vmatpush2.bf16.msra.mxu0 0
  %1248 = vmatprep.subr.bf16.mxu0 0
  %1249 = vmatpush2.bf16.msra.mxu0 0
  %1250 = vmatprep.subr.bf16.mxu0 0
  %1251 = vmatpush2.bf16.msra.mxu0 0
  %1252 = vmatprep.subr.bf16.mxu0 0
  %1253 = vmatpush2.bf16.msra.mxu0 0
  %1254 = vmatprep.subr.bf16.mxu0 0
  %1255 = vmatpush2.bf16.msra.mxu0 0
  %1256 = vmatprep.mubr.bf16.mxu0 0
  %1257 = vmatmul.mubr.bf16.gmra.mxu0 %v1222
  %v1258 = vpop.f32.mrf.mxu0
  %v1259 = vadd.f32 0.0, %v1258
  %v1260 = vpop.f32.mrf.mxu0
  %v1261 = vpop.f32.mrf.mxu0
  %v1262 = vadd.f32 0.0, %v1261
  %v1263 = vpop.f32.mrf.mxu0
  %1264 = vdwg.mxu0
  %v1266 = vsel %vm133, %v1018, 0
  %1268 = vmatprep.subr.bf16.mxu0 0
  %1269 = vmatpush1.bf16.msra.mxu0 0
  %1270 = vmatprep.subr.bf16.mxu0 0
  %1271 = vmatpush1.bf16.msra.mxu0 0
  %1272 = vmatprep.subr.bf16.mxu0 0
  %1273 = vmatpush1.bf16.msra.mxu0 0
  %1274 = vmatprep.subr.bf16.mxu0 0
  %1275 = vmatpush1.bf16.msra.mxu0 0
  %1276 = vmatprep.subr.bf16.mxu0 0
  %1277 = vmatpush1.bf16.msra.mxu0 0
  %1278 = vmatprep.subr.bf16.mxu0 0
  %1279 = vmatpush1.bf16.msra.mxu0 0
  %1280 = vmatprep.subr.bf16.mxu0 0
  %1281 = vmatpush1.bf16.msra.mxu0 0
  %1282 = vmatprep.subr.bf16.mxu0 0
  %1283 = vmatpush1.bf16.msra.mxu0 %v1042
  %1284 = vmatprep.subr.bf16.mxu0 0
  %1285 = vmatpush2.bf16.msra.mxu0 0
  %1286 = vmatprep.subr.bf16.mxu0 0
  %1287 = vmatpush2.bf16.msra.mxu0 0
  %1288 = vmatprep.subr.bf16.mxu0 0
  %1289 = vmatpush2.bf16.msra.mxu0 0
  %1290 = vmatprep.subr.bf16.mxu0 0
  %1291 = vmatpush2.bf16.msra.mxu0 0
  %1292 = vmatprep.subr.bf16.mxu0 0
  %1293 = vmatpush2.bf16.msra.mxu0 0
  %1294 = vmatprep.subr.bf16.mxu0 0
  %1295 = vmatpush2.bf16.msra.mxu0 0
  %1296 = vmatprep.subr.bf16.mxu0 0
  %1297 = vmatpush2.bf16.msra.mxu0 0
  %1298 = vmatprep.subr.bf16.mxu0 0
  %1299 = vmatpush2.bf16.msra.mxu0 0
  %1300 = vmatprep.mubr.bf16.mxu0 0
  %1301 = vmatmul.mubr.bf16.gmra.mxu0 %v1266
  %v1302 = vpop.f32.mrf.mxu0
  %v1303 = vadd.f32 0.0, %v1302
  %v1304 = vpop.f32.mrf.mxu0
  %v1305 = vpop.f32.mrf.mxu0
  %v1306 = vadd.f32 0.0, %v1305
  %v1307 = vpop.f32.mrf.mxu0
  %1308 = vdwg.mxu0
  %v1310 = vsel %vm133, %v1019, 0
  %1312 = vmatprep.subr.bf16.mxu0 0
  %1313 = vmatpush1.bf16.msra.mxu0 0
  %1314 = vmatprep.subr.bf16.mxu0 0
  %1315 = vmatpush1.bf16.msra.mxu0 0
  %1316 = vmatprep.subr.bf16.mxu0 0
  %1317 = vmatpush1.bf16.msra.mxu0 0
  %1318 = vmatprep.subr.bf16.mxu0 0
  %1319 = vmatpush1.bf16.msra.mxu0 0
  %1320 = vmatprep.subr.bf16.mxu0 0
  %1321 = vmatpush1.bf16.msra.mxu0 0
  %1322 = vmatprep.subr.bf16.mxu0 0
  %1323 = vmatpush1.bf16.msra.mxu0 0
  %1324 = vmatprep.subr.bf16.mxu0 0
  %1325 = vmatpush1.bf16.msra.mxu0 0
  %1326 = vmatprep.subr.bf16.mxu0 0
  %1327 = vmatpush1.bf16.msra.mxu0 %v1043
  %1328 = vmatprep.subr.bf16.mxu0 0
  %1329 = vmatpush2.bf16.msra.mxu0 0
  %1330 = vmatprep.subr.bf16.mxu0 0
  %1331 = vmatpush2.bf16.msra.mxu0 0
  %1332 = vmatprep.subr.bf16.mxu0 0
  %1333 = vmatpush2.bf16.msra.mxu0 0
  %1334 = vmatprep.subr.bf16.mxu0 0
  %1335 = vmatpush2.bf16.msra.mxu0 0
  %1336 = vmatprep.subr.bf16.mxu0 0
  %1337 = vmatpush2.bf16.msra.mxu0 0
  %1338 = vmatprep.subr.bf16.mxu0 0
  %1339 = vmatpush2.bf16.msra.mxu0 0
  %1340 = vmatprep.subr.bf16.mxu0 0
  %1341 = vmatpush2.bf16.msra.mxu0 0
  %1342 = vmatprep.subr.bf16.mxu0 0
  %1343 = vmatpush2.bf16.msra.mxu0 0
  %1344 = vmatprep.mubr.bf16.mxu0 0
  %1345 = vmatmul.mubr.bf16.gmra.mxu0 %v1310
  %v1346 = vpop.f32.mrf.mxu0
  %v1347 = vadd.f32 0.0, %v1346
  %v1348 = vpop.f32.mrf.mxu0
  %v1349 = vpop.f32.mrf.mxu0
  %v1350 = vadd.f32 0.0, %v1349
  %v1351 = vpop.f32.mrf.mxu0
  %1352 = vdwg.mxu0
  %v1354 = vsel %vm133, %v1020, 0
  %1356 = vmatprep.subr.bf16.mxu0 0
  %1357 = vmatpush1.bf16.msra.mxu0 0
  %1358 = vmatprep.subr.bf16.mxu0 0
  %1359 = vmatpush1.bf16.msra.mxu0 0
  %1360 = vmatprep.subr.bf16.mxu0 0
  %1361 = vmatpush1.bf16.msra.mxu0 0
  %1362 = vmatprep.subr.bf16.mxu0 0
  %1363 = vmatpush1.bf16.msra.mxu0 0
  %1364 = vmatprep.subr.bf16.mxu0 0
  %1365 = vmatpush1.bf16.msra.mxu0 0
  %1366 = vmatprep.subr.bf16.mxu0 0
  %1367 = vmatpush1.bf16.msra.mxu0 0
  %1368 = vmatprep.subr.bf16.mxu0 0
  %1369 = vmatpush1.bf16.msra.mxu0 0
  %1370 = vmatprep.subr.bf16.mxu0 0
  %1371 = vmatpush1.bf16.msra.mxu0 %v1044
  %1372 = vmatprep.subr.bf16.mxu0 0
  %1373 = vmatpush2.bf16.msra.mxu0 0
  %1374 = vmatprep.subr.bf16.mxu0 0
  %1375 = vmatpush2.bf16.msra.mxu0 0
  %1376 = vmatprep.subr.bf16.mxu0 0
  %1377 = vmatpush2.bf16.msra.mxu0 0
  %1378 = vmatprep.subr.bf16.mxu0 0
  %1379 = vmatpush2.bf16.msra.mxu0 0
  %1380 = vmatprep.subr.bf16.mxu0 0
  %1381 = vmatpush2.bf16.msra.mxu0 0
  %1382 = vmatprep.subr.bf16.mxu0 0
  %1383 = vmatpush2.bf16.msra.mxu0 0
  %1384 = vmatprep.subr.bf16.mxu0 0
  %1385 = vmatpush2.bf16.msra.mxu0 0
  %1386 = vmatprep.subr.bf16.mxu0 0
  %1387 = vmatpush2.bf16.msra.mxu0 0
  %1388 = vmatprep.mubr.bf16.mxu0 0
  %1389 = vmatmul.mubr.bf16.gmra.mxu0 %v1354
  %v1390 = vpop.f32.mrf.mxu0
  %v1391 = vadd.f32 0.0, %v1390
  %v1392 = vpop.f32.mrf.mxu0
  %v1393 = vpop.f32.mrf.mxu0
  %v1394 = vadd.f32 0.0, %v1393
  %v1395 = vpop.f32.mrf.mxu0
  %1396 = vdwg.mxu0
  %v1397 = vadd.f32 %v997, %v1083
  %v1398 = vadd.f32 %v998, %v1086
  %v1399 = vadd.f32 %v999, %v1127
  %v1400 = vadd.f32 %v1000, %v1130
  %v1401 = vadd.f32 %v1001, %v1171
  %v1402 = vadd.f32 %v1002, %v1174
  %v1403 = vadd.f32 %v1003, %v1215
  %v1404 = vadd.f32 %v1004, %v1218
  %v1405 = vadd.f32 %v1005, %v1259
  %v1406 = vadd.f32 %v1006, %v1262
  %v1407 = vadd.f32 %v1007, %v1303
  %v1408 = vadd.f32 %v1008, %v1306
  %v1409 = vadd.f32 %v1009, %v1347
  %v1410 = vadd.f32 %v1010, %v1350
  %v1411 = vadd.f32 %v1011, %v1391
  %v1412 = vadd.f32 %v1012, %v1394
  %1413 = vst.msk [vmem:[#allocation4] sm:$0xff] %vm133, %v1397
  %1414 = vst.msk [vmem:[#allocation4 + $0x8] sm:$0xff] %vm133, %v1398
  %1415 = vst.msk [vmem:[#allocation4 + $0x10] sm:$0xff] %vm133, %v1399
  %1416 = vst.msk [vmem:[#allocation4 + $0x18] sm:$0xff] %vm133, %v1400
  %1417 = vst.msk [vmem:[#allocation4 + $0x20] sm:$0xff] %vm133, %v1401
  %1418 = vst.msk [vmem:[#allocation4 + $0x28] sm:$0xff] %vm133, %v1402
  %1419 = vst.msk [vmem:[#allocation4 + $0x30] sm:$0xff] %vm133, %v1403
  %1420 = vst.msk [vmem:[#allocation4 + $0x38] sm:$0xff] %vm133, %v1404
  %1421 = vst.msk [vmem:[#allocation4 + $0x40] sm:$0xff] %vm133, %v1405
  %1422 = vst.msk [vmem:[#allocation4 + $0x48] sm:$0xff] %vm133, %v1406
  %1423 = vst.msk [vmem:[#allocation4 + $0x50] sm:$0xff] %vm133, %v1407
  %1424 = vst.msk [vmem:[#allocation4 + $0x58] sm:$0xff] %vm133, %v1408
  %1425 = vst.msk [vmem:[#allocation4 + $0x60] sm:$0xff] %vm133, %v1409
  %1426 = vst.msk [vmem:[#allocation4 + $0x68] sm:$0xff] %vm133, %v1410
  %1427 = vst.msk [vmem:[#allocation4 + $0x70] sm:$0xff] %vm133, %v1411
  %1428 = vst.msk [vmem:[#allocation4 + $0x78] sm:$0xff] %vm133, %v1412
  %1429 = vst.msk [vmem:[#allocation2] sm:$0xff] %vm884, %v596
  %1430 = vst.msk [vmem:[#allocation2 + $0x8] sm:$0xff] %vm884, %v597
  %1431 = vst.msk [vmem:[#allocation2 + $0x10] sm:$0xff] %vm884, %v598
  %1432 = vst.msk [vmem:[#allocation2 + $0x18] sm:$0xff] %vm884, %v599
  %1433 = vst.msk [vmem:[#allocation2 + $0x20] sm:$0xff] %vm884, %v600
  %1434 = vst.msk [vmem:[#allocation2 + $0x28] sm:$0xff] %vm884, %v601
  %1435 = vst.msk [vmem:[#allocation2 + $0x30] sm:$0xff] %vm884, %v602
  %1436 = vst.msk [vmem:[#allocation2 + $0x38] sm:$0xff] %vm884, %v603
  %1437 = vst.msk [vmem:[#allocation2 + $0x40] sm:$0xff] %vm884, %v604
  %1438 = vst.msk [vmem:[#allocation2 + $0x48] sm:$0xff] %vm884, %v605
  %1439 = vst.msk [vmem:[#allocation2 + $0x50] sm:$0xff] %vm884, %v606
  %1440 = vst.msk [vmem:[#allocation2 + $0x58] sm:$0xff] %vm884, %v607
  %1441 = vst.msk [vmem:[#allocation2 + $0x60] sm:$0xff] %vm884, %v608
  %1442 = vst.msk [vmem:[#allocation2 + $0x68] sm:$0xff] %vm884, %v609
  %1443 = vst.msk [vmem:[#allocation2 + $0x70] sm:$0xff] %vm884, %v610
  %1444 = vst.msk [vmem:[#allocation2 + $0x78] sm:$0xff] %vm884, %v611
  // Predicated region
  $region18: #{_lambda_.11} parent=0 // pred_check
    %p1445 = pneg %p15
  $region19: #{_lambda_.11} parent=0 // pred_check_branch
    %1447 = sbr.rel (%p1445) target = $region21
  $region20: #{_lambda_.11} parent=0 // pred_region
    %v1448 = vld [vmem:[#allocation4] sm:$0xff]
    %v1449 = vld [vmem:[#allocation4 + $0x8] sm:$0xff]
    %v1450 = vld [vmem:[#allocation4 + $0x10] sm:$0xff]
    %v1451 = vld [vmem:[#allocation4 + $0x18] sm:$0xff]
    %v1452 = vld [vmem:[#allocation4 + $0x20] sm:$0xff]
    %v1453 = vld [vmem:[#allocation4 + $0x28] sm:$0xff]
    %v1454 = vld [vmem:[#allocation4 + $0x30] sm:$0xff]
    %v1455 = vld [vmem:[#allocation4 + $0x38] sm:$0xff]
    %v1456 = vld [vmem:[#allocation4 + $0x40] sm:$0xff]
    %v1457 = vld [vmem:[#allocation4 + $0x48] sm:$0xff]
    %v1458 = vld [vmem:[#allocation4 + $0x50] sm:$0xff]
    %v1459 = vld [vmem:[#allocation4 + $0x58] sm:$0xff]
    %v1460 = vld [vmem:[#allocation4 + $0x60] sm:$0xff]
    %v1461 = vld [vmem:[#allocation4 + $0x68] sm:$0xff]
    %v1462 = vld [vmem:[#allocation4 + $0x70] sm:$0xff]
    %v1463 = vld [vmem:[#allocation4 + $0x78] sm:$0xff]
    %v1464 = vld [vmem:[#allocation3] sm:$0xff]
    %v1465 = vld [vmem:[#allocation3 + $0x8] sm:$0xff]
    %v1466 = vld [vmem:[#allocation3 + $0x10] sm:$0xff]
    %v1467 = vld [vmem:[#allocation3 + $0x18] sm:$0xff]
    %v1468 = vld [vmem:[#allocation3 + $0x20] sm:$0xff]
    %v1469 = vld [vmem:[#allocation3 + $0x28] sm:$0xff]
    %v1470 = vld [vmem:[#allocation3 + $0x30] sm:$0xff]
    %v1471 = vld [vmem:[#allocation3 + $0x38] sm:$0xff]
    %v1472 = vld [vmem:[#allocation3 + $0x40] sm:$0xff]
    %v1473 = vld [vmem:[#allocation3 + $0x48] sm:$0xff]
    %v1474 = vld [vmem:[#allocation3 + $0x50] sm:$0xff]
    %v1475 = vld [vmem:[#allocation3 + $0x58] sm:$0xff]
    %v1476 = vld [vmem:[#allocation3 + $0x60] sm:$0xff]
    %v1477 = vld [vmem:[#allocation3 + $0x68] sm:$0xff]
    %v1478 = vld [vmem:[#allocation3 + $0x70] sm:$0xff]
    %v1479 = vld [vmem:[#allocation3 + $0x78] sm:$0xff]
    %v1480 = vrcp.pop %v1464
    %v1481 = vrcp.pop %v1465
    %v1482 = vrcp.pop %v1466
    %v1483 = vrcp.pop %v1467
    %v1484 = vrcp.pop %v1468
    %v1485 = vrcp.pop %v1469
    %v1486 = vrcp.pop %v1470
    %v1487 = vrcp.pop %v1471
    %v1488 = vrcp.pop %v1472
    %v1489 = vrcp.pop %v1473
    %v1490 = vrcp.pop %v1474
    %v1491 = vrcp.pop %v1475
    %v1492 = vrcp.pop %v1476
    %v1493 = vrcp.pop %v1477
    %v1494 = vrcp.pop %v1478
    %v1495 = vrcp.pop %v1479
    %1497 = vset.pattern.permute.xlu0 0
    %1498 = vperm.xlu0 %1497, %v1480
    %v1499 = vpop.permute.xlu0 %1498
    %1502 = vset.pattern.permute.xlu0 0
    %1503 = vperm.xlu0 %1502, %v1481
    %v1504 = vpop.permute.xlu0 %1503
    %1507 = vset.pattern.permute.xlu0 0
    %1508 = vperm.xlu0 %1507, %v1482
    %v1509 = vpop.permute.xlu0 %1508
    %1512 = vset.pattern.permute.xlu0 0
    %1513 = vperm.xlu0 %1512, %v1483
    %v1514 = vpop.permute.xlu0 %1513
    %1517 = vset.pattern.permute.xlu0 0
    %1518 = vperm.xlu0 %1517, %v1484
    %v1519 = vpop.permute.xlu0 %1518
    %1522 = vset.pattern.permute.xlu0 0
    %1523 = vperm.xlu0 %1522, %v1485
    %v1524 = vpop.permute.xlu0 %1523
    %1527 = vset.pattern.permute.xlu0 0
    %1528 = vperm.xlu0 %1527, %v1486
    %v1529 = vpop.permute.xlu0 %1528
    %1532 = vset.pattern.permute.xlu0 0
    %1533 = vperm.xlu0 %1532, %v1487
    %v1534 = vpop.permute.xlu0 %1533
    %1537 = vset.pattern.permute.xlu0 0
    %1538 = vperm.xlu0 %1537, %v1488
    %v1539 = vpop.permute.xlu0 %1538
    %1542 = vset.pattern.permute.xlu0 0
    %1543 = vperm.xlu0 %1542, %v1489
    %v1544 = vpop.permute.xlu0 %1543
    %1547 = vset.pattern.permute.xlu0 0
    %1548 = vperm.xlu0 %1547, %v1490
    %v1549 = vpop.permute.xlu0 %1548
    %1552 = vset.pattern.permute.xlu0 0
    %1553 = vperm.xlu0 %1552, %v1491
    %v1554 = vpop.permute.xlu0 %1553
    %1557 = vset.pattern.permute.xlu0 0
    %1558 = vperm.xlu0 %1557, %v1492
    %v1559 = vpop.permute.xlu0 %1558
    %1562 = vset.pattern.permute.xlu0 0
    %1563 = vperm.xlu0 %1562, %v1493
    %v1564 = vpop.permute.xlu0 %1563
    %1567 = vset.pattern.permute.xlu0 0
    %1568 = vperm.xlu0 %1567, %v1494
    %v1569 = vpop.permute.xlu0 %1568
    %1572 = vset.pattern.permute.xlu0 0
    %1573 = vperm.xlu0 %1572, %v1495
    %v1574 = vpop.permute.xlu0 %1573
    %v1576 = vmul.f32 %v1448, %v1499
    %v1577 = vmul.f32 %v1449, %v1504
    %v1578 = vmul.f32 %v1450, %v1509
    %v1579 = vmul.f32 %v1451, %v1514
    %v1580 = vmul.f32 %v1452, %v1519
    %v1581 = vmul.f32 %v1453, %v1524
    %v1582 = vmul.f32 %v1454, %v1529
    %v1583 = vmul.f32 %v1455, %v1534
    %v1584 = vmul.f32 %v1456, %v1539
    %v1585 = vmul.f32 %v1457, %v1544
    %v1586 = vmul.f32 %v1458, %v1549
    %v1587 = vmul.f32 %v1459, %v1554
    %v1588 = vmul.f32 %v1460, %v1559
    %v1589 = vmul.f32 %v1461, %v1564
    %v1590 = vmul.f32 %v1462, %v1569
    %v1591 = vmul.f32 %v1463, %v1574
    %1592 = vst.msk [vmem:[%s3] sm:$0xff] %vm133, %v1576
    %1593 = vst.msk [vmem:[%s3 + $0x8] sm:$0xff] %vm133, %v1577
    %1594 = vst.msk [vmem:[%s3 + $0x10] sm:$0xff] %vm133, %v1578
    %1595 = vst.msk [vmem:[%s3 + $0x18] sm:$0xff] %vm133, %v1579
    %1596 = vst.msk [vmem:[%s3 + $0x20] sm:$0xff] %vm133, %v1580
    %1597 = vst.msk [vmem:[%s3 + $0x28] sm:$0xff] %vm133, %v1581
    %1598 = vst.msk [vmem:[%s3 + $0x30] sm:$0xff] %vm133, %v1582
    %1599 = vst.msk [vmem:[%s3 + $0x38] sm:$0xff] %vm133, %v1583
    %1600 = vst.msk [vmem:[%s3 + $0x40] sm:$0xff] %vm133, %v1584
    %1601 = vst.msk [vmem:[%s3 + $0x48] sm:$0xff] %vm133, %v1585
    %1602 = vst.msk [vmem:[%s3 + $0x50] sm:$0xff] %vm133, %v1586
    %1603 = vst.msk [vmem:[%s3 + $0x58] sm:$0xff] %vm133, %v1587
    %1604 = vst.msk [vmem:[%s3 + $0x60] sm:$0xff] %vm133, %v1588
    %1605 = vst.msk [vmem:[%s3 + $0x68] sm:$0xff] %vm133, %v1589
    %1606 = vst.msk [vmem:[%s3 + $0x70] sm:$0xff] %vm133, %v1590
    %1607 = vst.msk [vmem:[%s3 + $0x78] sm:$0xff] %vm133, %v1591
  $region21: #{_lambda_.11} parent=0 // pred_fallthru
    _
  // Predicated region
  $region22: #{_lambda_.11} parent=0 // pred_check
    _
  $region23: #{_lambda_.11} parent=0 // pred_check_branch
    %1609 = sbr.rel (0) target = $region25
  $region24: #{_lambda_.11} parent=0 // pred_region
    _
  $region25: #{_lambda_.11} parent=0 // pred_fallthru
    _
  // Predicated region
  $region26: #{_lambda_.11} parent=0 // pred_check
    _
  $region27: #{_lambda_.11} parent=0 // pred_check_branch
    %1611 = sbr.rel (0) target = $region29
  $region28: #{_lambda_.11} parent=0 // pred_region
    _
  $region29: #{_lambda_.11} parent=0 // pred_fallthru
    _

</llo_original>
